<compile_context>
chip_gen: v7x
topology: tpu7x:2x2x1
jax: 0.10.0
libtpu: 0.0.40
codegen_flags: <defaults>
</compile_context>

<pallas_src>
import functools

import jax
import jax.numpy as jnp
import numpy as np
from jax import lax
from jax.experimental import pallas as pl
from jax.experimental.pallas import tpu as pltpu


def _round_up(x, m):
    return ((x + m - 1) // m) * m


# -----------------------------------------------------------------------------
# Kernel 1: encoder head
#   fused embedding gather + masked mean pool -> (pre-fused) linear projection -> L2 normalize
#   (mimics retriever.query() / retriever.doc() with norm_query/norm_doc = True)
# -----------------------------------------------------------------------------
def _encode_kernel(ids_ref, mask_ref, ftab_ref, b_ref, out_ref):
    tn, s = ids_ref.shape
    vocab = ftab_ref.shape[0]

    ids = ids_ref[...]                                   # [TN, S] int32
    mask = mask_ref[...]                                 # [TN, S] f32

    # masked mean-pool weights; guard all-padding rows (denom == 0 -> no NaN/Inf)
    denom = jnp.sum(mask, axis=-1, keepdims=True)        # [TN, 1]
    inv_len = pl.reciprocal(jnp.maximum(denom, 1.0))     # exact (approx would break tolerance)
    w_tok = mask * inv_len                               # [TN, S]

    # Fused gather + pooling + projection:
    #   emb[n, :] = sum_s w_tok[n, s] * (embed_table @ W)[ids[n, s], :] + b
    #             = hist[n, :] @ fused_table + b,  hist[n, v] = sum_s w_tok[n,s] * (ids[n,s]==v)
    # Exact up to f32 reassociation (fused_table = embed_table @ W is computed outside).
    # Out-of-range token ids (>= V) contribute zero to the pool (nn.Embedding would error).
    # TODO(synk): for production vocab sizes replace the one-hot/hist contraction with a
    #             scalar-prefetch / manual-DMA row gather (PrefetchScalarGridSpec or
    #             make_async_copy of the needed rows) -- the O(TN*S*V) VALU hist build and
    #             the VMEM-resident table both scale with V and break first on v7x (64 MiB).
    vocab_iota = lax.broadcasted_iota(jnp.int32, (tn, vocab), 1)   # [TN, V]
    hist = jnp.zeros((tn, vocab), jnp.float32)
    for s_idx in range(s):                                # S is small & static -> unrolled
        hist = hist + jnp.where(ids[:, s_idx:s_idx + 1] == vocab_iota,
                                w_tok[:, s_idx:s_idx + 1], 0.0)    # compare+select only

    emb = jnp.dot(hist, ftab_ref[...], preferred_element_type=jnp.float32) + b_ref[...]

    # L2 normalization (norm_query / norm_doc)
    inv_norm = lax.rsqrt(jnp.sum(emb * emb, axis=-1, keepdims=True) + 1e-12)
    out_ref[...] = (emb * inv_norm).astype(out_ref.dtype)


def encode(ids, mask, fused_table, b, *, block_n=256):
    """ids: [N, S] int32, mask: [N, S], fused_table: [V, D] (= embed_table @ proj_w),
       b: [1, D] -> [N, D] float32 L2-normalized embeddings."""
    N, S = ids.shape
    V, D = fused_table.shape
    n_pad = _round_up(N, block_n)
    if n_pad != N:
        ids = jnp.pad(ids, ((0, n_pad - N), (0, 0)))
        mask = jnp.pad(mask, ((0, n_pad - N), (0, 0)))
    grid = (n_pad // block_n,)
    # TODO(synk): on v7x with a production vocab, single-buffer the grid-invariant
    #             fused_table/b inputs (pipeline_mode=pl.Buffered(1)) to halve resident VMEM.
    out = pl.pallas_call(
        _encode_kernel,
        out_shape=jax.ShapeDtypeStruct((n_pad, D), jnp.float32),
        grid=grid,
        in_specs=[
            pl.BlockSpec((block_n, S), lambda n: (n, 0)),
            pl.BlockSpec((block_n, S), lambda n: (n, 0)),
            pl.BlockSpec((V, D), lambda n: (0, 0)),       # fused table resident in VMEM
            pl.BlockSpec((1, D), lambda n: (0, 0)),
        ],
        out_specs=pl.BlockSpec((block_n, D), lambda n: (n, 0)),
        compiler_params=pltpu.CompilerParams(
            dimension_semantics=("parallel",),
            vmem_limit_bytes=32 * 1024 * 1024),
    )(ids, mask.astype(jnp.float32), fused_table, b)
    return out[:N]


# -----------------------------------------------------------------------------
# Kernel 2: retrieval scores  (einsum 'nd,md->nm' / temperature), 2-D tiled (queries x corpus)
# -----------------------------------------------------------------------------
def _score_kernel(q_ref, d_ref, o_ref, *, inv_temp):
    # contract dim 1 of both operands directly (no .T / XLU transpose); bf16 in, f32 acc
    logits = lax.dot_general(
        q_ref[...], d_ref[...],
        dimension_numbers=(((1,), (1,)), ((), ())),
        preferred_element_type=jnp.float32)
    o_ref[...] = logits * inv_temp


def score(q_emb, d_emb, *, temperature=1.0, block_q=256, block_docs=1024):
    """q_emb: [Nq, D], d_emb: [Ndoc, D] (bf16 recommended) -> scores [Nq, Ndoc] f32."""
    Nq, D = q_emb.shape
    Nd = d_emb.shape[0]
    if temperature == "sqrt":                    # BaseRetriever.score 'sqrt' mode
        inv_temp = 1.0 / float(np.sqrt(D))
    else:
        inv_temp = 1.0 / float(temperature)

    # query tiles: multiple of 8 sublanes -> unmasked output stores, filled MXU M dim
    block_q = max(8, min(block_q, _round_up(Nq, 8)))
    nq_pad = _round_up(Nq, block_q)
    if nq_pad != Nq:
        q_emb = jnp.pad(q_emb, ((0, nq_pad - Nq), (0, 0)))

    # lane-dense doc tiles (multiple of 256); clamp so tiny corpora don't over-pad
    block_docs = max(256, min(block_docs, _round_up(Nd, 256)))
    nd_pad = _round_up(Nd, block_docs)
    if nd_pad != Nd:
        d_emb = jnp.pad(d_emb, ((0, nd_pad - Nd), (0, 0)))

    grid = (nq_pad // block_q, nd_pad // block_docs)
    out = pl.pallas_call(
        functools.partial(_score_kernel, inv_temp=inv_temp),
        out_shape=jax.ShapeDtypeStruct((nq_pad, nd_pad), jnp.float32),
        grid=grid,
        in_specs=[
            pl.BlockSpec((block_q, D), lambda i, j: (i, 0)),
            pl.BlockSpec((block_docs, D), lambda i, j: (j, 0)),
        ],
        out_specs=pl.BlockSpec((block_q, block_docs), lambda i, j: (i, j)),
        compiler_params=pltpu.CompilerParams(
            dimension_semantics=("parallel", "parallel"),
            vmem_limit_bytes=32 * 1024 * 1024),
    )(q_emb, d_emb)
    return out[:Nq, :Nd]


# -----------------------------------------------------------------------------
# DenseRetriever.forward equivalent
# -----------------------------------------------------------------------------
def dense_retrieve(q_ids, q_mask, d_ids, d_mask, embed_table, proj_w, proj_b,
                   *, topk, temperature=1.0, block_n=256, block_q=256, block_docs=1024):
    Nq = q_ids.shape[0]

    # Algebraic fusion of the encoder's two matmuls: (hist @ table) @ W == hist @ (table @ W).
    # table @ W is done once in plain XLA (tiny, amortized over every encoded row); the kernel
    # then only keeps a [V, D] table resident instead of [V, H] + [H, D].
    fused_table = jnp.dot(embed_table, proj_w, precision=lax.Precision.HIGHEST)

    # retriever.query(...) / retriever.doc(...): one combined encoder launch
    ids = jnp.concatenate([q_ids, d_ids], axis=0)
    mask = jnp.concatenate([q_mask, d_mask], axis=0)
    emb = encode(ids, mask, fused_table, proj_b, block_n=block_n)
    q_emb = emb[:Nq]
    d_emb = emb[Nq:]

    # indexer.search_knn(...): inner-product scores over the indexed corpus.
    # bf16 halves HBM traffic for the memory-bound score pass; embeddings are unit-norm
    # so bf16 operand precision (with f32 accumulation) is ample.
    scores = score(q_emb.astype(jnp.bfloat16), d_emb.astype(jnp.bfloat16),
                   temperature=temperature, block_q=block_q, block_docs=block_docs)

    # TODO(synk): top-k + corpus docid->document dict lookup are host-side glue; for huge
    #             corpora a streaming per-block top-k inside the score kernel (running
    #             [Nq, topk] scratch, docs axis 'arbitrary') would avoid materializing the
    #             full [Nq, Ndoc] matrix in HBM (or at minimum emit bf16 scores).
    topk_scores, topk_idx = jax.lax.top_k(scores, topk)
    return scores, topk_scores, topk_idx, q_emb, d_emb


if __name__ == "__main__":
    VOCAB, SEQ, HIDDEN, EMB_D = 64, 8, 128, 128
    NQ, NDOC, TOPK = 2, 1024, 3
    TEMPERATURE = 1.0

    key = jax.random.PRNGKey(0)
    k_emb, k_w, k_q, k_d, k_mq, k_md = jax.random.split(key, 6)

    # deterministic parameter init (normal(0, 0.02) like _init_weights; zero bias)
    embed_table = (0.02 * jax.random.normal(k_emb, (VOCAB, HIDDEN))).astype(jnp.float32)
    proj_w = (0.02 * jax.random.normal(k_w, (HIDDEN, EMB_D))).astype(jnp.float32)
    proj_b = jnp.zeros((1, EMB_D), jnp.float32)

    # synthetic tokenized queries / corpus documents
    q_ids = jax.random.randint(k_q, (NQ, SEQ), 0, VOCAB, dtype=jnp.int32)
    d_ids = jax.random.randint(k_d, (NDOC, SEQ), 0, VOCAB, dtype=jnp.int32)
    q_lens = jax.random.randint(k_mq, (NQ,), 4, SEQ + 1)
    d_lens = jax.random.randint(k_md, (NDOC,), 4, SEQ + 1)
    q_mask = (jnp.arange(SEQ)[None, :] < q_lens[:, None]).astype(jnp.float32)
    d_mask = (jnp.arange(SEQ)[None, :] < d_lens[:, None]).astype(jnp.float32)

    scores, topk_scores, topk_idx, q_emb, d_emb = dense_retrieve(
        q_ids, q_mask, d_ids, d_mask, embed_table, proj_w, proj_b,
        topk=TOPK, temperature=TEMPERATURE)
    jax.block_until_ready((scores, topk_scores, topk_idx, q_emb, d_emb))

    # pure-JAX reference check (unfused, like the PyTorch module)
    def ref_encode(ids, mask):
        tok = jnp.take(embed_table, ids, axis=0)
        pooled = jnp.sum(tok * mask[..., None], axis=1) / jnp.sum(mask, axis=1, keepdims=True)
        emb = pooled @ proj_w + proj_b
        return emb / jnp.sqrt(jnp.sum(emb * emb, axis=-1, keepdims=True) + 1e-12)

    q_ref = ref_encode(q_ids, q_mask)
    d_ref = ref_encode(d_ids, d_mask)
    scores_ref_f32 = (q_ref @ d_ref.T) / TEMPERATURE

    # encoder kernel (f32 path): tight tolerance; atol slack covers the f32 reassociation
    # introduced by the table @ W fusion (expected sub-1e-6 drift).
    np.testing.assert_allclose(np.asarray(q_emb), np.asarray(q_ref), rtol=1e-5, atol=2e-5)
    np.testing.assert_allclose(np.asarray(d_emb), np.asarray(d_ref), rtol=1e-5, atol=2e-5)

    # score kernel: check against the same bf16-operand contraction it performs ...
    qb = q_emb.astype(jnp.bfloat16).astype(jnp.float32)
    db = d_emb.astype(jnp.bfloat16).astype(jnp.float32)
    scores_ref_bf16 = (qb @ db.T) / TEMPERATURE
    np.testing.assert_allclose(np.asarray(scores), np.asarray(scores_ref_bf16),
                               rtol=1e-4, atol=1e-4)
    # ... and end-to-end against the full-f32 reference at bf16-appropriate tolerance
    np.testing.assert_allclose(np.asarray(scores), np.asarray(scores_ref_f32),
                               rtol=2e-2, atol=2e-2)
    assert topk_idx.shape == (NQ, TOPK) and topk_scores.shape == (NQ, TOPK)

    print("KERNEL_OK")
</pallas_src>

<mosaic_0001>
module attributes {stable_mosaic.version = 11 : i64} {
  func.func @_encode_kernel(%arg0: i32, %arg1: memref<256x8xi32, #tpu.memory_space<vmem>>, %arg2: memref<256x8xf32, #tpu.memory_space<vmem>>, %arg3: memref<64x128xf32, #tpu.memory_space<vmem>>, %arg4: memref<1x128xf32, #tpu.memory_space<vmem>>, %arg5: memref<256x128xf32, #tpu.memory_space<vmem>>) attributes {dimension_semantics = [#tpu.dimension_semantics<parallel>], iteration_bounds = array<i64: 5>, scalar_prefetch = 0 : i64, scratch_operands = 0 : i64, tpu.core_type = #tpu.core_type<tc>, window_params = [{transform_indices = @transform_0, window_bounds = array<i64: 256, 8>}, {transform_indices = @transform_1, window_bounds = array<i64: 256, 8>}, {pipeline_mode = #tpu.pipeline_mode<synchronous>, transform_indices = @transform_2, window_bounds = array<i64: 64, 128>}, {pipeline_mode = #tpu.pipeline_mode<synchronous>, transform_indices = @transform_3, window_bounds = array<i64: 1, 128>}, {transform_indices = @transform_4, window_bounds = array<i64: 256, 128>}]} {
    %c0 = arith.constant 0 : index
    %c0_0 = arith.constant 0 : index
    %0 = vector.load %arg1[%c0, %c0_0] : memref<256x8xi32, #tpu.memory_space<vmem>>, vector<256x8xi32>
    %c0_1 = arith.constant 0 : index
    %c0_2 = arith.constant 0 : index
    %1 = vector.load %arg2[%c0_1, %c0_2] : memref<256x8xf32, #tpu.memory_space<vmem>>, vector<256x8xf32>
    %cst = arith.constant dense<0.000000e+00> : vector<256xf32>
    %2 = vector.multi_reduction <add>, %1, %cst [1] : vector<256x8xf32> to vector<256xf32>
    %3 = vector.shape_cast %2 : vector<256xf32> to vector<256x1xf32>
    %cst_3 = arith.constant 1.000000e+00 : f32
    %4 = vector.broadcast %cst_3 : f32 to vector<256x1xf32>
    %5 = arith.maximumf %3, %4 : vector<256x1xf32>
    %6 = tpu.reciprocal %5 : vector<256x1xf32> -> vector<256x1xf32>
    %7 = vector.broadcast %6 : vector<256x1xf32> to vector<256x8xf32>
    %8 = arith.mulf %1, %7 : vector<256x8xf32>
    %9 = tpu.iota {dimensions = array<i32: 1>} : vector<256x64xi32>
    %cst_4 = arith.constant 0.000000e+00 : f32
    %10 = vector.broadcast %cst_4 : f32 to vector<256x64xf32>
    %11 = vector.extract_strided_slice %0 {offsets = [0, 0], sizes = [256, 1], strides = [1, 1]} : vector<256x8xi32> to vector<256x1xi32>
    %12 = vector.broadcast %11 : vector<256x1xi32> to vector<256x64xi32>
    %13 = arith.cmpi eq, %12, %9 : vector<256x64xi32>
    %14 = vector.extract_strided_slice %8 {offsets = [0, 0], sizes = [256, 1], strides = [1, 1]} : vector<256x8xf32> to vector<256x1xf32>
    %cst_5 = arith.constant 0.000000e+00 : f32
    %15 = vector.shape_cast %14 : vector<256x1xf32> to vector<256x1xf32>
    %16 = vector.broadcast %15 : vector<256x1xf32> to vector<256x64xf32>
    %17 = vector.broadcast %cst_5 : f32 to vector<256x64xf32>
    %18 = arith.select %13, %16, %17 : vector<256x64xi1>, vector<256x64xf32>
    %19 = arith.addf %10, %18 : vector<256x64xf32>
    %20 = vector.extract_strided_slice %0 {offsets = [0, 1], sizes = [256, 1], strides = [1, 1]} : vector<256x8xi32> to vector<256x1xi32>
    %21 = vector.broadcast %20 : vector<256x1xi32> to vector<256x64xi32>
    %22 = arith.cmpi eq, %21, %9 : vector<256x64xi32>
    %23 = vector.extract_strided_slice %8 {offsets = [0, 1], sizes = [256, 1], strides = [1, 1]} : vector<256x8xf32> to vector<256x1xf32>
    %cst_6 = arith.constant 0.000000e+00 : f32
    %24 = vector.shape_cast %23 : vector<256x1xf32> to vector<256x1xf32>
    %25 = vector.broadcast %24 : vector<256x1xf32> to vector<256x64xf32>
    %26 = vector.broadcast %cst_6 : f32 to vector<256x64xf32>
    %27 = arith.select %22, %25, %26 : vector<256x64xi1>, vector<256x64xf32>
    %28 = arith.addf %19, %27 : vector<256x64xf32>
    %29 = vector.extract_strided_slice %0 {offsets = [0, 2], sizes = [256, 1], strides = [1, 1]} : vector<256x8xi32> to vector<256x1xi32>
    %30 = vector.broadcast %29 : vector<256x1xi32> to vector<256x64xi32>
    %31 = arith.cmpi eq, %30, %9 : vector<256x64xi32>
    %32 = vector.extract_strided_slice %8 {offsets = [0, 2], sizes = [256, 1], strides = [1, 1]} : vector<256x8xf32> to vector<256x1xf32>
    %cst_7 = arith.constant 0.000000e+00 : f32
    %33 = vector.shape_cast %32 : vector<256x1xf32> to vector<256x1xf32>
    %34 = vector.broadcast %33 : vector<256x1xf32> to vector<256x64xf32>
    %35 = vector.broadcast %cst_7 : f32 to vector<256x64xf32>
    %36 = arith.select %31, %34, %35 : vector<256x64xi1>, vector<256x64xf32>
    %37 = arith.addf %28, %36 : vector<256x64xf32>
    %38 = vector.extract_strided_slice %0 {offsets = [0, 3], sizes = [256, 1], strides = [1, 1]} : vector<256x8xi32> to vector<256x1xi32>
    %39 = vector.broadcast %38 : vector<256x1xi32> to vector<256x64xi32>
    %40 = arith.cmpi eq, %39, %9 : vector<256x64xi32>
    %41 = vector.extract_strided_slice %8 {offsets = [0, 3], sizes = [256, 1], strides = [1, 1]} : vector<256x8xf32> to vector<256x1xf32>
    %cst_8 = arith.constant 0.000000e+00 : f32
    %42 = vector.shape_cast %41 : vector<256x1xf32> to vector<256x1xf32>
    %43 = vector.broadcast %42 : vector<256x1xf32> to vector<256x64xf32>
    %44 = vector.broadcast %cst_8 : f32 to vector<256x64xf32>
    %45 = arith.select %40, %43, %44 : vector<256x64xi1>, vector<256x64xf32>
    %46 = arith.addf %37, %45 : vector<256x64xf32>
    %47 = vector.extract_strided_slice %0 {offsets = [0, 4], sizes = [256, 1], strides = [1, 1]} : vector<256x8xi32> to vector<256x1xi32>
    %48 = vector.broadcast %47 : vector<256x1xi32> to vector<256x64xi32>
    %49 = arith.cmpi eq, %48, %9 : vector<256x64xi32>
    %50 = vector.extract_strided_slice %8 {offsets = [0, 4], sizes = [256, 1], strides = [1, 1]} : vector<256x8xf32> to vector<256x1xf32>
    %cst_9 = arith.constant 0.000000e+00 : f32
    %51 = vector.shape_cast %50 : vector<256x1xf32> to vector<256x1xf32>
    %52 = vector.broadcast %51 : vector<256x1xf32> to vector<256x64xf32>
    %53 = vector.broadcast %cst_9 : f32 to vector<256x64xf32>
    %54 = arith.select %49, %52, %53 : vector<256x64xi1>, vector<256x64xf32>
    %55 = arith.addf %46, %54 : vector<256x64xf32>
    %56 = vector.extract_strided_slice %0 {offsets = [0, 5], sizes = [256, 1], strides = [1, 1]} : vector<256x8xi32> to vector<256x1xi32>
    %57 = vector.broadcast %56 : vector<256x1xi32> to vector<256x64xi32>
    %58 = arith.cmpi eq, %57, %9 : vector<256x64xi32>
    %59 = vector.extract_strided_slice %8 {offsets = [0, 5], sizes = [256, 1], strides = [1, 1]} : vector<256x8xf32> to vector<256x1xf32>
    %cst_10 = arith.constant 0.000000e+00 : f32
    %60 = vector.shape_cast %59 : vector<256x1xf32> to vector<256x1xf32>
    %61 = vector.broadcast %60 : vector<256x1xf32> to vector<256x64xf32>
    %62 = vector.broadcast %cst_10 : f32 to vector<256x64xf32>
    %63 = arith.select %58, %61, %62 : vector<256x64xi1>, vector<256x64xf32>
    %64 = arith.addf %55, %63 : vector<256x64xf32>
    %65 = vector.extract_strided_slice %0 {offsets = [0, 6], sizes = [256, 1], strides = [1, 1]} : vector<256x8xi32> to vector<256x1xi32>
    %66 = vector.broadcast %65 : vector<256x1xi32> to vector<256x64xi32>
    %67 = arith.cmpi eq, %66, %9 : vector<256x64xi32>
    %68 = vector.extract_strided_slice %8 {offsets = [0, 6], sizes = [256, 1], strides = [1, 1]} : vector<256x8xf32> to vector<256x1xf32>
    %cst_11 = arith.constant 0.000000e+00 : f32
    %69 = vector.shape_cast %68 : vector<256x1xf32> to vector<256x1xf32>
    %70 = vector.broadcast %69 : vector<256x1xf32> to vector<256x64xf32>
    %71 = vector.broadcast %cst_11 : f32 to vector<256x64xf32>
    %72 = arith.select %67, %70, %71 : vector<256x64xi1>, vector<256x64xf32>
    %73 = arith.addf %64, %72 : vector<256x64xf32>
    %74 = vector.extract_strided_slice %0 {offsets = [0, 7], sizes = [256, 1], strides = [1, 1]} : vector<256x8xi32> to vector<256x1xi32>
    %75 = vector.broadcast %74 : vector<256x1xi32> to vector<256x64xi32>
    %76 = arith.cmpi eq, %75, %9 : vector<256x64xi32>
    %77 = vector.extract_strided_slice %8 {offsets = [0, 7], sizes = [256, 1], strides = [1, 1]} : vector<256x8xf32> to vector<256x1xf32>
    %cst_12 = arith.constant 0.000000e+00 : f32
    %78 = vector.shape_cast %77 : vector<256x1xf32> to vector<256x1xf32>
    %79 = vector.broadcast %78 : vector<256x1xf32> to vector<256x64xf32>
    %80 = vector.broadcast %cst_12 : f32 to vector<256x64xf32>
    %81 = arith.select %76, %79, %80 : vector<256x64xi1>, vector<256x64xf32>
    %82 = arith.addf %73, %81 : vector<256x64xf32>
    %c0_13 = arith.constant 0 : index
    %c0_14 = arith.constant 0 : index
    %83 = vector.load %arg3[%c0_13, %c0_14] : memref<64x128xf32, #tpu.memory_space<vmem>>, vector<64x128xf32>
    %cst_15 = arith.constant dense<0.000000e+00> : vector<256x128xf32>
    %84 = tpu.matmul %82, %83, %cst_15 {dimension_numbers = #tpu.dot_dimension_numbers<[1], [0], [0], [1], [0, 0, 1, 1], [], []>} : vector<256x64xf32>, vector<64x128xf32>, vector<256x128xf32> -> vector<256x128xf32>
    %c0_16 = arith.constant 0 : index
    %c0_17 = arith.constant 0 : index
    %85 = vector.load %arg4[%c0_16, %c0_17] : memref<1x128xf32, #tpu.memory_space<vmem>>, vector<1x128xf32>
    %86 = vector.broadcast %85 : vector<1x128xf32> to vector<256x128xf32>
    %87 = arith.addf %84, %86 : vector<256x128xf32>
    %88 = arith.mulf %87, %87 : vector<256x128xf32>
    %cst_18 = arith.constant dense<0.000000e+00> : vector<256xf32>
    %89 = vector.multi_reduction <add>, %88, %cst_18 [1] : vector<256x128xf32> to vector<256xf32>
    %90 = vector.shape_cast %89 : vector<256xf32> to vector<256x1xf32>
    %cst_19 = arith.constant 9.99999996E-13 : f32
    %91 = vector.broadcast %cst_19 : f32 to vector<256x1xf32>
    %92 = arith.addf %90, %91 : vector<256x1xf32>
    %93 = math.rsqrt %92 : vector<256x1xf32>
    %94 = vector.broadcast %93 : vector<256x1xf32> to vector<256x128xf32>
    %95 = arith.mulf %87, %94 : vector<256x128xf32>
    %c0_20 = arith.constant 0 : index
    %c0_21 = arith.constant 0 : index
    %96 = vector.load %arg5[%c0_20, %c0_21] : memref<256x128xf32, #tpu.memory_space<vmem>>, vector<256x128xf32>
    tpu.vector_store %arg5[%c0_20, %c0_21], %95 {strides = array<i32>} : memref<256x128xf32, #tpu.memory_space<vmem>>, vector<256x128xf32>,
    return
  }
  func.func @transform_0(%arg0: i32) -> (i32, i32) {
    %c0_i32 = arith.constant 0 : i32
    %c0_i32_0 = arith.constant 0 : i32
    return %arg0, %c0_i32 : i32, i32
  }
  func.func @transform_1(%arg0: i32) -> (i32, i32) {
    %c0_i32 = arith.constant 0 : i32
    %c0_i32_0 = arith.constant 0 : i32
    return %arg0, %c0_i32 : i32, i32
  }
  func.func @transform_2(%arg0: i32) -> (i32, i32) {
    %c0_i32 = arith.constant 0 : i32
    %c0_i32_0 = arith.constant 0 : i32
    %c0_i32_1 = arith.constant 0 : i32
    return %c0_i32, %c0_i32_0 : i32, i32
  }
  func.func @transform_3(%arg0: i32) -> (i32, i32) {
    %c0_i32 = arith.constant 0 : i32
    %c0_i32_0 = arith.constant 0 : i32
    %c0_i32_1 = arith.constant 0 : i32
    return %c0_i32, %c0_i32_0 : i32, i32
  }
  func.func @transform_4(%arg0: i32) -> (i32, i32) {
    %c0_i32 = arith.constant 0 : i32
    %c0_i32_0 = arith.constant 0 : i32
    return %arg0, %c0_i32 : i32, i32
  }
}

</mosaic_0001>

<llo_original>
// kernel: tpu_custom_call.1
$region0: #{tpu_custom_call.1}
  #allocation0 [shape = 'u32[]', space=smem, size = 0x4, offset = 0x4, fixed_abs, tag = 'smem constant byte address 0x4 - core index']
  #allocation1 [shape = 'u32[144,128]{1,0:T(1,128)}', space=vmem, size = 0x12000, scoped, tag = 'internal scratch']
  %s0 = inlined_call_operand.vmem [shape: s32[1280,8], index: 0, kind: input, shape index: {}]
  %s1 = inlined_call_operand.vmem [shape: f32[1280,8], index: 1, kind: input, shape index: {}]
  %s2 = inlined_call_operand.vmem [shape: f32[64,128], index: 2, kind: input, shape index: {}]
  %s3 = inlined_call_operand.vmem [shape: f32[1,128], index: 3, kind: input, shape index: {}]
  %s4 = inlined_call_operand.hbm [shape: f32[1280,128], index: 4, kind: output, shape index: {}]
  %s5 = sld [smem:[#allocation0]]
  $region49: #{tpu_custom_call.1} parent=0
    _
  %s7 = ssub.s32 1, %s5
  %s8 = scalar_select 0, %s7, %s5
  $region1: #{tpu_custom_call.1} parent=0
    #allocation2 [shape = 'u8[262144]{0}', space=vmem, size = 0x40000, scoped, tag = 'output window, operand 0']
    #allocation3 [shape = 's32[2]{0}', space=sflag, size = 0x8, scoped, tag = 'scoped memory for tpu_custom_call.1']
    %9 = vsyncpa [#allocation3], 0
    %s10 = scalar_lea.sflag [#allocation3], 1
    %11 = vsyncpa %s10, 0
    loop: start=0, step=1, limit=7
    $region2: #{tpu_custom_call.1} parent=1 // loop_pre_header
      _
    $region3: #{tpu_custom_call.1} parent=1 // loop_header
      %s13 = sphi 0, %s17
      %p14 = scmp.ge.s32.totalorder %s13, 7
      %s23 = sphi 0, %s25
      %s26 = sphi 0, %s23
      %s27 = sphi 0, %s26
      %s43 = sphi 0, %s27
      %s49 = sphi 0, %s51
      %s52 = sphi 0, %s49
      %s53 = sphi 0, %s52
      %s69 = sphi 0, %s53
      %s73 = sphi 0, %s73
      %s75 = sphi 0, %s73
      %s76 = sphi 0, %s75
      %s90 = sphi 0, %s76
      %s94 = sphi 0, %s94
      %s96 = sphi 0, %s94
      %s97 = sphi 0, %s96
      %s111 = sphi 0, %s97
      %s117 = sphi 0, %s119
      %s120 = sphi 0, %s117
      %s121 = sphi 0, %s120
      %s137 = sphi 0, %s121
    $region4: #{tpu_custom_call.1} parent=1 // loop_header_branch
      %16 = sbr.rel (%p14) target = $region8
    $region5: #{tpu_custom_call.1} parent=1 // loop_body
      %s18 = ssub.s32 %s13, 1
      %s19 = ssub.s32 %s13, 2
      %s20 = sadd.s32 %s13, 1
      %s21 = ssub.s32 %s13, %s20
      %p22 = scmp.eq.s32.totalorder %s21, 0
      %s24 = sadd.s32 %s23, 1
      %s25 = scalar_select %p22, %s23, %s24
      %p28 = pneg %p22
      %p29 = scmp.eq.s32.totalorder %s13, 4
      %p30 = por %p28, %p29
      %p31 = scmp.ne.s32.totalorder %s23, %s26
      %p32 = scmp.eq.s32.totalorder %s13, 0
      %p33 = por %p31, %p32
      %p34 = scmp.ne.s32.totalorder %s23, %s26
      %p35 = scmp.eq.s32.totalorder %s18, 4
      %p36 = por %p34, %p35
      %p37 = scmp.ne.s32.totalorder %s26, %s27
      %p38 = scmp.eq.s32.totalorder %s18, 0
      %p39 = por %p37, %p38
      %p40 = scmp.ne.s32.totalorder %s26, %s27
      %p41 = scmp.eq.s32.totalorder %s19, 4
      %p42 = por %p40, %p41
      %p44 = scmp.ne.s32.totalorder %s27, %s43
      %p45 = scmp.eq.s32.totalorder %s19, 0
      %p46 = por %p44, %p45
      %s47 = ssub.s32 %s13, %s20
      %p48 = scmp.eq.s32.totalorder %s47, 0
      %s50 = sadd.s32 %s49, 1
      %s51 = scalar_select %p48, %s49, %s50
      %p54 = pneg %p48
      %p55 = scmp.eq.s32.totalorder %s13, 4
      %p56 = por %p54, %p55
      %p57 = scmp.ne.s32.totalorder %s49, %s52
      %p58 = scmp.eq.s32.totalorder %s13, 0
      %p59 = por %p57, %p58
      %p60 = scmp.ne.s32.totalorder %s49, %s52
      %p61 = scmp.eq.s32.totalorder %s18, 4
      %p62 = por %p60, %p61
      %p63 = scmp.ne.s32.totalorder %s52, %s53
      %p64 = scmp.eq.s32.totalorder %s18, 0
      %p65 = por %p63, %p64
      %p66 = scmp.ne.s32.totalorder %s52, %s53
      %p67 = scmp.eq.s32.totalorder %s19, 4
      %p68 = por %p66, %p67
      %p70 = scmp.ne.s32.totalorder %s53, %s69
      %p71 = scmp.eq.s32.totalorder %s19, 0
      %p72 = por %p70, %p71
      %s74 = sadd.s32 %s73, 1
      %p77 = scmp.eq.s32.totalorder %s13, 4
      %p78 = scmp.ne.s32.totalorder %s73, %s75
      %p79 = scmp.eq.s32.totalorder %s13, 0
      %p80 = por %p78, %p79
      %p81 = scmp.ne.s32.totalorder %s73, %s75
      %p82 = scmp.eq.s32.totalorder %s18, 4
      %p83 = por %p81, %p82
      %p84 = scmp.ne.s32.totalorder %s75, %s76
      %p85 = scmp.eq.s32.totalorder %s18, 0
      %p86 = por %p84, %p85
      %p87 = scmp.ne.s32.totalorder %s75, %s76
      %p88 = scmp.eq.s32.totalorder %s19, 4
      %p89 = por %p87, %p88
      %p91 = scmp.ne.s32.totalorder %s76, %s90
      %p92 = scmp.eq.s32.totalorder %s19, 0
      %p93 = por %p91, %p92
      %s95 = sadd.s32 %s94, 1
      %p98 = scmp.eq.s32.totalorder %s13, 4
      %p99 = scmp.ne.s32.totalorder %s94, %s96
      %p100 = scmp.eq.s32.totalorder %s13, 0
      %p101 = por %p99, %p100
      %p102 = scmp.ne.s32.totalorder %s94, %s96
      %p103 = scmp.eq.s32.totalorder %s18, 4
      %p104 = por %p102, %p103
      %p105 = scmp.ne.s32.totalorder %s96, %s97
      %p106 = scmp.eq.s32.totalorder %s18, 0
      %p107 = por %p105, %p106
      %p108 = scmp.ne.s32.totalorder %s96, %s97
      %p109 = scmp.eq.s32.totalorder %s19, 4
      %p110 = por %p108, %p109
      %p112 = scmp.ne.s32.totalorder %s97, %s111
      %p113 = scmp.eq.s32.totalorder %s19, 0
      %p114 = por %p112, %p113
      %s115 = ssub.s32 %s13, %s20
      %p116 = scmp.eq.s32.totalorder %s115, 0
      %s118 = sadd.s32 %s117, 1
      %s119 = scalar_select %p116, %s117, %s118
      %p122 = pneg %p116
      %p123 = scmp.eq.s32.totalorder %s13, 4
      %p124 = por %p122, %p123
      %p125 = scmp.ne.s32.totalorder %s117, %s120
      %p126 = scmp.eq.s32.totalorder %s13, 0
      %p127 = por %p125, %p126
      %p128 = scmp.ne.s32.totalorder %s117, %s120
      %p129 = scmp.eq.s32.totalorder %s18, 4
      %p130 = por %p128, %p129
      %p131 = scmp.ne.s32.totalorder %s120, %s121
      %p132 = scmp.eq.s32.totalorder %s18, 0
      %p133 = por %p131, %p132
      %p134 = scmp.ne.s32.totalorder %s120, %s121
      %p135 = scmp.eq.s32.totalorder %s19, 4
      %p136 = por %p134, %p135
      %p138 = scmp.ne.s32.totalorder %s121, %s137
      %p139 = scmp.eq.s32.totalorder %s19, 0
      %p140 = por %p138, %p139
      %p141 = scmp.le.s32.totalorder 1, %s13
      %p142 = scmp.lt.s32.totalorder %s13, 6
      %p143 = pnand %p141, %p142
      %p144 = pneg %p143
      // Predicated region
      $region9: #{tpu_custom_call.1} parent=5 // pred_check
        _
      $region10: #{tpu_custom_call.1} parent=5 // pred_check_branch
        %146 = sbr.rel (%p143) target = $region12
      $region11: #{tpu_custom_call.1} parent=5 // pred_region
        %s147 = ssub.s32 %s13, 1
        // Predicated region
        $region13: #{tpu_custom_call.1} parent=11 // pred_check
          %p148 = pneg %p86
        $region14: #{tpu_custom_call.1} parent=11 // pred_check_branch
          %150 = sbr.rel (%p148) target = $region16
        $region15: #{tpu_custom_call.1} parent=11 // pred_region
          _
        $region16: #{tpu_custom_call.1} parent=11 // pred_fallthru
          _
        // Predicated region
        $region17: #{tpu_custom_call.1} parent=11 // pred_check
          %p151 = pneg %p107
        $region18: #{tpu_custom_call.1} parent=11 // pred_check_branch
          %153 = sbr.rel (%p151) target = $region20
        $region19: #{tpu_custom_call.1} parent=11 // pred_region
          _
        $region20: #{tpu_custom_call.1} parent=11 // pred_fallthru
          _
      $region12: #{tpu_custom_call.1} parent=5 // pred_fallthru
        _
      %p154 = scmp.lt.s32.totalorder %s13, 5
      // Predicated region
      $region21: #{tpu_custom_call.1} parent=5 // pred_check
        %p155 = pneg %p154
      $region22: #{tpu_custom_call.1} parent=5 // pred_check_branch
        %157 = sbr.rel (%p155) target = $region24
      $region23: #{tpu_custom_call.1} parent=5 // pred_region
        // Predicated region
        $region25: #{tpu_custom_call.1} parent=23 // pred_check
          %p158 = pneg %p33
        $region26: #{tpu_custom_call.1} parent=23 // pred_check_branch
          %160 = sbr.rel (%p158) target = $region28
        $region27: #{tpu_custom_call.1} parent=23 // pred_region
          %s161 = smul.u32 32, %s13
          %p162 = scmp.lt.s32.totalorder %s161, 159
          %s163 = scalar_select %p162, %s161, 159
          %s164 = smul.addr %s163, 8
          %s165 = scalar_lea.vmem %s0, %s164
          %s166 = smul.u32 32, %s13
        $region28: #{tpu_custom_call.1} parent=23 // pred_fallthru
          _
        // Predicated region
        $region29: #{tpu_custom_call.1} parent=23 // pred_check
          %p167 = pneg %p59
        $region30: #{tpu_custom_call.1} parent=23 // pred_check_branch
          %169 = sbr.rel (%p167) target = $region32
        $region31: #{tpu_custom_call.1} parent=23 // pred_region
          %s170 = smul.u32 32, %s13
          %p171 = scmp.lt.s32.totalorder %s170, 159
          %s172 = scalar_select %p171, %s170, 159
          %s173 = smul.addr %s172, 8
          %s174 = scalar_lea.vmem %s1, %s173
          %s175 = smul.u32 32, %s13
        $region32: #{tpu_custom_call.1} parent=23 // pred_fallthru
          _
      $region24: #{tpu_custom_call.1} parent=5 // pred_fallthru
        _
      %p176 = scmp.le.s32.totalorder 1, %s13
      %p177 = scmp.lt.s32.totalorder %s13, 6
      %p178 = pnand %p176, %p177
      %p179 = pneg %p178
      // Predicated region
      $region33: #{tpu_custom_call.1} parent=5 // pred_check
        _
      $region34: #{tpu_custom_call.1} parent=5 // pred_check_branch
        %181 = sbr.rel (%p178) target = $region36
      $region35: #{tpu_custom_call.1} parent=5 // pred_region
        %s182 = ssub.s32 %s13, 1
        %s183 = smul.u32 32, %s18
        %p184 = scmp.lt.s32.totalorder %s183, 159
        %s185 = scalar_select %p184, %s183, 159
        %s186 = smul.addr %s185, 8
        %s187 = scalar_lea.vmem %s0, %s186
        %p188 = pneg %p39
        %p189 = pneg %p36
        %s190 = smul.u32 32, %s18
        %p191 = scmp.lt.s32.totalorder %s190, 159
        %s192 = scalar_select %p191, %s190, 159
        %s193 = smul.addr %s192, 8
        %s194 = scalar_lea.vmem %s1, %s193
        %p195 = pneg %p65
        %p196 = pneg %p62
        %p197 = pneg %p86
        %p198 = pneg %p83
        %p199 = pneg %p107
        %p200 = pneg %p104
        %p201 = pneg %p133
        %p202 = pneg %p130
        %s203 = sand.u32 %s120, 1
        %s204 = scalar_lea.sflag [#allocation3], %s203
        %s205 = sand.u32 %s120, 1
        %s206 = smul.addr %s205, 256
        %s207 = scalar_lea.vmem [#allocation2], %s206
        %s208 = smul.u32 32, %s18
        %p209 = scmp.lt.s32.totalorder %s208, 159
        %s210 = scalar_select %p209, %s208, 159
        %s211 = smul.addr %s210, 8
        %s212 = scalar_lea.vmem %s0, %s211
        %s213 = smul.u32 32, %s18
        %s214 = smul.u32 32, %s18
        %p215 = scmp.lt.s32.totalorder %s214, 159
        %s216 = scalar_select %p215, %s214, 159
        %s217 = smul.addr %s216, 8
        %s218 = scalar_lea.vmem %s1, %s217
        %s219 = smul.u32 32, %s18
        %s220 = smul.u32 32, %s18
        %v221 = vld [vmem:[%s212] sm:$0xff]
        %v222 = vld [vmem:[%s212 + $0x8] sm:$0xff]
        %v223 = vld [vmem:[%s212 + $0x10] sm:$0xff]
        %v224 = vld [vmem:[%s212 + $0x18] sm:$0xff]
        %v225 = vld [vmem:[%s212 + $0x20] sm:$0xff]
        %v226 = vld [vmem:[%s212 + $0x28] sm:$0xff]
        %v227 = vld [vmem:[%s212 + $0x30] sm:$0xff]
        %v228 = vld [vmem:[%s212 + $0x38] sm:$0xff]
        %v229 = vld [vmem:[%s212 + $0x40] sm:$0xff]
        %v230 = vld [vmem:[%s212 + $0x48] sm:$0xff]
        %v231 = vld [vmem:[%s212 + $0x50] sm:$0xff]
        %v232 = vld [vmem:[%s212 + $0x58] sm:$0xff]
        %v233 = vld [vmem:[%s212 + $0x60] sm:$0xff]
        %v234 = vld [vmem:[%s212 + $0x68] sm:$0xff]
        %v235 = vld [vmem:[%s212 + $0x70] sm:$0xff]
        %v236 = vld [vmem:[%s212 + $0x78] sm:$0xff]
        %v237 = vld [vmem:[%s212 + $0x80] sm:$0xff]
        %v238 = vld [vmem:[%s212 + $0x88] sm:$0xff]
        %v239 = vld [vmem:[%s212 + $0x90] sm:$0xff]
        %v240 = vld [vmem:[%s212 + $0x98] sm:$0xff]
        %v241 = vld [vmem:[%s212 + $0xa0] sm:$0xff]
        %v242 = vld [vmem:[%s212 + $0xa8] sm:$0xff]
        %v243 = vld [vmem:[%s212 + $0xb0] sm:$0xff]
        %v244 = vld [vmem:[%s212 + $0xb8] sm:$0xff]
        %v245 = vld [vmem:[%s212 + $0xc0] sm:$0xff]
        %v246 = vld [vmem:[%s212 + $0xc8] sm:$0xff]
        %v247 = vld [vmem:[%s212 + $0xd0] sm:$0xff]
        %v248 = vld [vmem:[%s212 + $0xd8] sm:$0xff]
        %v249 = vld [vmem:[%s212 + $0xe0] sm:$0xff]
        %v250 = vld [vmem:[%s212 + $0xe8] sm:$0xff]
        %v251 = vld [vmem:[%s212 + $0xf0] sm:$0xff]
        %v252 = vld [vmem:[%s212 + $0xf8] sm:$0xff]
        %v253 = vld [vmem:[%s218] sm:$0xff]
        %v254 = vld [vmem:[%s218 + $0x8] sm:$0xff]
        %v255 = vld [vmem:[%s218 + $0x10] sm:$0xff]
        %v256 = vld [vmem:[%s218 + $0x18] sm:$0xff]
        %v257 = vld [vmem:[%s218 + $0x20] sm:$0xff]
        %v258 = vld [vmem:[%s218 + $0x28] sm:$0xff]
        %v259 = vld [vmem:[%s218 + $0x30] sm:$0xff]
        %v260 = vld [vmem:[%s218 + $0x38] sm:$0xff]
        %v261 = vld [vmem:[%s218 + $0x40] sm:$0xff]
        %v262 = vld [vmem:[%s218 + $0x48] sm:$0xff]
        %v263 = vld [vmem:[%s218 + $0x50] sm:$0xff]
        %v264 = vld [vmem:[%s218 + $0x58] sm:$0xff]
        %v265 = vld [vmem:[%s218 + $0x60] sm:$0xff]
        %v266 = vld [vmem:[%s218 + $0x68] sm:$0xff]
        %v267 = vld [vmem:[%s218 + $0x70] sm:$0xff]
        %v268 = vld [vmem:[%s218 + $0x78] sm:$0xff]
        %v269 = vld [vmem:[%s218 + $0x80] sm:$0xff]
        %v270 = vld [vmem:[%s218 + $0x88] sm:$0xff]
        %v271 = vld [vmem:[%s218 + $0x90] sm:$0xff]
        %v272 = vld [vmem:[%s218 + $0x98] sm:$0xff]
        %v273 = vld [vmem:[%s218 + $0xa0] sm:$0xff]
        %v274 = vld [vmem:[%s218 + $0xa8] sm:$0xff]
        %v275 = vld [vmem:[%s218 + $0xb0] sm:$0xff]
        %v276 = vld [vmem:[%s218 + $0xb8] sm:$0xff]
        %v277 = vld [vmem:[%s218 + $0xc0] sm:$0xff]
        %v278 = vld [vmem:[%s218 + $0xc8] sm:$0xff]
        %v279 = vld [vmem:[%s218 + $0xd0] sm:$0xff]
        %v280 = vld [vmem:[%s218 + $0xd8] sm:$0xff]
        %v281 = vld [vmem:[%s218 + $0xe0] sm:$0xff]
        %v282 = vld [vmem:[%s218 + $0xe8] sm:$0xff]
        %v283 = vld [vmem:[%s218 + $0xf0] sm:$0xff]
        %v284 = vld [vmem:[%s218 + $0xf8] sm:$0xff]
        %vm285 = vcmask 64512
        %v286 = vsel %vm285, %v253, 0.0
        %287 = vadd.xlane.f32.xlu0 %v286
        %v288 = vpop.xlane.xlu0 %287
        %v289 = vsel %vm285, %v254, 0.0
        %290 = vadd.xlane.f32.xlu0 %v289
        %v291 = vpop.xlane.xlu0 %290
        %v292 = vsel %vm285, %v255, 0.0
        %293 = vadd.xlane.f32.xlu0 %v292
        %v294 = vpop.xlane.xlu0 %293
        %v295 = vsel %vm285, %v256, 0.0
        %296 = vadd.xlane.f32.xlu0 %v295
        %v297 = vpop.xlane.xlu0 %296
        %v298 = vsel %vm285, %v257, 0.0
        %299 = vadd.xlane.f32.xlu0 %v298
        %v300 = vpop.xlane.xlu0 %299
        %v301 = vsel %vm285, %v258, 0.0
        %302 = vadd.xlane.f32.xlu0 %v301
        %v303 = vpop.xlane.xlu0 %302
        %v304 = vsel %vm285, %v259, 0.0
        %305 = vadd.xlane.f32.xlu0 %v304
        %v306 = vpop.xlane.xlu0 %305
        %v307 = vsel %vm285, %v260, 0.0
        %308 = vadd.xlane.f32.xlu0 %v307
        %v309 = vpop.xlane.xlu0 %308
        %v310 = vsel %vm285, %v261, 0.0
        %311 = vadd.xlane.f32.xlu0 %v310
        %v312 = vpop.xlane.xlu0 %311
        %v313 = vsel %vm285, %v262, 0.0
        %314 = vadd.xlane.f32.xlu0 %v313
        %v315 = vpop.xlane.xlu0 %314
        %v316 = vsel %vm285, %v263, 0.0
        %317 = vadd.xlane.f32.xlu0 %v316
        %v318 = vpop.xlane.xlu0 %317
        %v319 = vsel %vm285, %v264, 0.0
        %320 = vadd.xlane.f32.xlu0 %v319
        %v321 = vpop.xlane.xlu0 %320
        %v322 = vsel %vm285, %v265, 0.0
        %323 = vadd.xlane.f32.xlu0 %v322
        %v324 = vpop.xlane.xlu0 %323
        %v325 = vsel %vm285, %v266, 0.0
        %326 = vadd.xlane.f32.xlu0 %v325
        %v327 = vpop.xlane.xlu0 %326
        %v328 = vsel %vm285, %v267, 0.0
        %329 = vadd.xlane.f32.xlu0 %v328
        %v330 = vpop.xlane.xlu0 %329
        %v331 = vsel %vm285, %v268, 0.0
        %332 = vadd.xlane.f32.xlu0 %v331
        %v333 = vpop.xlane.xlu0 %332
        %v334 = vsel %vm285, %v269, 0.0
        %335 = vadd.xlane.f32.xlu0 %v334
        %v336 = vpop.xlane.xlu0 %335
        %v337 = vsel %vm285, %v270, 0.0
        %338 = vadd.xlane.f32.xlu0 %v337
        %v339 = vpop.xlane.xlu0 %338
        %v340 = vsel %vm285, %v271, 0.0
        %341 = vadd.xlane.f32.xlu0 %v340
        %v342 = vpop.xlane.xlu0 %341
        %v343 = vsel %vm285, %v272, 0.0
        %344 = vadd.xlane.f32.xlu0 %v343
        %v345 = vpop.xlane.xlu0 %344
        %v346 = vsel %vm285, %v273, 0.0
        %347 = vadd.xlane.f32.xlu0 %v346
        %v348 = vpop.xlane.xlu0 %347
        %v349 = vsel %vm285, %v274, 0.0
        %350 = vadd.xlane.f32.xlu0 %v349
        %v351 = vpop.xlane.xlu0 %350
        %v352 = vsel %vm285, %v275, 0.0
        %353 = vadd.xlane.f32.xlu0 %v352
        %v354 = vpop.xlane.xlu0 %353
        %v355 = vsel %vm285, %v276, 0.0
        %356 = vadd.xlane.f32.xlu0 %v355
        %v357 = vpop.xlane.xlu0 %356
        %v358 = vsel %vm285, %v277, 0.0
        %359 = vadd.xlane.f32.xlu0 %v358
        %v360 = vpop.xlane.xlu0 %359
        %v361 = vsel %vm285, %v278, 0.0
        %362 = vadd.xlane.f32.xlu0 %v361
        %v363 = vpop.xlane.xlu0 %362
        %v364 = vsel %vm285, %v279, 0.0
        %365 = vadd.xlane.f32.xlu0 %v364
        %v366 = vpop.xlane.xlu0 %365
        %v367 = vsel %vm285, %v280, 0.0
        %368 = vadd.xlane.f32.xlu0 %v367
        %v369 = vpop.xlane.xlu0 %368
        %v370 = vsel %vm285, %v281, 0.0
        %371 = vadd.xlane.f32.xlu0 %v370
        %v372 = vpop.xlane.xlu0 %371
        %v373 = vsel %vm285, %v282, 0.0
        %374 = vadd.xlane.f32.xlu0 %v373
        %v375 = vpop.xlane.xlu0 %374
        %v376 = vsel %vm285, %v283, 0.0
        %377 = vadd.xlane.f32.xlu0 %v376
        %v378 = vpop.xlane.xlu0 %377
        %v379 = vsel %vm285, %v284, 0.0
        %380 = vadd.xlane.f32.xlu0 %v379
        %v381 = vpop.xlane.xlu0 %380
        %v382 = vmax.f32 %v288, 1.0
        %v383 = vmax.f32 %v291, 1.0
        %v384 = vmax.f32 %v294, 1.0
        %v385 = vmax.f32 %v297, 1.0
        %v386 = vmax.f32 %v300, 1.0
        %v387 = vmax.f32 %v303, 1.0
        %v388 = vmax.f32 %v306, 1.0
        %v389 = vmax.f32 %v309, 1.0
        %v390 = vmax.f32 %v312, 1.0
        %v391 = vmax.f32 %v315, 1.0
        %v392 = vmax.f32 %v318, 1.0
        %v393 = vmax.f32 %v321, 1.0
        %v394 = vmax.f32 %v324, 1.0
        %v395 = vmax.f32 %v327, 1.0
        %v396 = vmax.f32 %v330, 1.0
        %v397 = vmax.f32 %v333, 1.0
        %v398 = vmax.f32 %v336, 1.0
        %v399 = vmax.f32 %v339, 1.0
        %v400 = vmax.f32 %v342, 1.0
        %v401 = vmax.f32 %v345, 1.0
        %v402 = vmax.f32 %v348, 1.0
        %v403 = vmax.f32 %v351, 1.0
        %v404 = vmax.f32 %v354, 1.0
        %v405 = vmax.f32 %v357, 1.0
        %v406 = vmax.f32 %v360, 1.0
        %v407 = vmax.f32 %v363, 1.0
        %v408 = vmax.f32 %v366, 1.0
        %v409 = vmax.f32 %v369, 1.0
        %v410 = vmax.f32 %v372, 1.0
        %v411 = vmax.f32 %v375, 1.0
        %v412 = vmax.f32 %v378, 1.0
        %v413 = vmax.f32 %v381, 1.0
        %v414 = vrcp.pop %v382
        %v415 = vrcp.pop %v383
        %v416 = vrcp.pop %v384
        %v417 = vrcp.pop %v385
        %v418 = vrcp.pop %v386
        %v419 = vrcp.pop %v387
        %v420 = vrcp.pop %v388
        %v421 = vrcp.pop %v389
        %v422 = vrcp.pop %v390
        %v423 = vrcp.pop %v391
        %v424 = vrcp.pop %v392
        %v425 = vrcp.pop %v393
        %v426 = vrcp.pop %v394
        %v427 = vrcp.pop %v395
        %v428 = vrcp.pop %v396
        %v429 = vrcp.pop %v397
        %v430 = vrcp.pop %v398
        %v431 = vrcp.pop %v399
        %v432 = vrcp.pop %v400
        %v433 = vrcp.pop %v401
        %v434 = vrcp.pop %v402
        %v435 = vrcp.pop %v403
        %v436 = vrcp.pop %v404
        %v437 = vrcp.pop %v405
        %v438 = vrcp.pop %v406
        %v439 = vrcp.pop %v407
        %v440 = vrcp.pop %v408
        %v441 = vrcp.pop %v409
        %v442 = vrcp.pop %v410
        %v443 = vrcp.pop %v411
        %v444 = vrcp.pop %v412
        %v445 = vrcp.pop %v413
        %v446 = vmul.f32 %v253, %v414
        %v447 = vmul.f32 %v254, %v415
        %v448 = vmul.f32 %v255, %v416
        %v449 = vmul.f32 %v256, %v417
        %v450 = vmul.f32 %v257, %v418
        %v451 = vmul.f32 %v258, %v419
        %v452 = vmul.f32 %v259, %v420
        %v453 = vmul.f32 %v260, %v421
        %v454 = vmul.f32 %v261, %v422
        %v455 = vmul.f32 %v262, %v423
        %v456 = vmul.f32 %v263, %v424
        %v457 = vmul.f32 %v264, %v425
        %v458 = vmul.f32 %v265, %v426
        %v459 = vmul.f32 %v266, %v427
        %v460 = vmul.f32 %v267, %v428
        %v461 = vmul.f32 %v268, %v429
        %v462 = vmul.f32 %v269, %v430
        %v463 = vmul.f32 %v270, %v431
        %v464 = vmul.f32 %v271, %v432
        %v465 = vmul.f32 %v272, %v433
        %v466 = vmul.f32 %v273, %v434
        %v467 = vmul.f32 %v274, %v435
        %v468 = vmul.f32 %v275, %v436
        %v469 = vmul.f32 %v276, %v437
        %v470 = vmul.f32 %v277, %v438
        %v471 = vmul.f32 %v278, %v439
        %v472 = vmul.f32 %v279, %v440
        %v473 = vmul.f32 %v280, %v441
        %v474 = vmul.f32 %v281, %v442
        %v475 = vmul.f32 %v282, %v443
        %v476 = vmul.f32 %v283, %v444
        %v477 = vmul.f32 %v284, %v445
        %v478 = vlaneseq
        %v479 = vand.u32 %v478, 127
        %480 = vset.pattern.permute.xlu0 0
        %481 = vperm.xlu0 %480, %v221
        %v482 = vpop.permute.xlu0 %481
        %483 = vset.pattern.permute.xlu0 0
        %484 = vperm.xlu0 %483, %v222
        %v485 = vpop.permute.xlu0 %484
        %486 = vset.pattern.permute.xlu0 0
        %487 = vperm.xlu0 %486, %v223
        %v488 = vpop.permute.xlu0 %487
        %489 = vset.pattern.permute.xlu0 0
        %490 = vperm.xlu0 %489, %v224
        %v491 = vpop.permute.xlu0 %490
        %492 = vset.pattern.permute.xlu0 0
        %493 = vperm.xlu0 %492, %v225
        %v494 = vpop.permute.xlu0 %493
        %495 = vset.pattern.permute.xlu0 0
        %496 = vperm.xlu0 %495, %v226
        %v497 = vpop.permute.xlu0 %496
        %498 = vset.pattern.permute.xlu0 0
        %499 = vperm.xlu0 %498, %v227
        %v500 = vpop.permute.xlu0 %499
        %501 = vset.pattern.permute.xlu0 0
        %502 = vperm.xlu0 %501, %v228
        %v503 = vpop.permute.xlu0 %502
        %504 = vset.pattern.permute.xlu0 0
        %505 = vperm.xlu0 %504, %v229
        %v506 = vpop.permute.xlu0 %505
        %507 = vset.pattern.permute.xlu0 0
        %508 = vperm.xlu0 %507, %v230
        %v509 = vpop.permute.xlu0 %508
        %510 = vset.pattern.permute.xlu0 0
        %511 = vperm.xlu0 %510, %v231
        %v512 = vpop.permute.xlu0 %511
        %513 = vset.pattern.permute.xlu0 0
        %514 = vperm.xlu0 %513, %v232
        %v515 = vpop.permute.xlu0 %514
        %516 = vset.pattern.permute.xlu0 0
        %517 = vperm.xlu0 %516, %v233
        %v518 = vpop.permute.xlu0 %517
        %519 = vset.pattern.permute.xlu0 0
        %520 = vperm.xlu0 %519, %v234
        %v521 = vpop.permute.xlu0 %520
        %522 = vset.pattern.permute.xlu0 0
        %523 = vperm.xlu0 %522, %v235
        %v524 = vpop.permute.xlu0 %523
        %525 = vset.pattern.permute.xlu0 0
        %526 = vperm.xlu0 %525, %v236
        %v527 = vpop.permute.xlu0 %526
        %528 = vset.pattern.permute.xlu0 0
        %529 = vperm.xlu0 %528, %v237
        %v530 = vpop.permute.xlu0 %529
        %531 = vset.pattern.permute.xlu0 0
        %532 = vperm.xlu0 %531, %v238
        %v533 = vpop.permute.xlu0 %532
        %534 = vset.pattern.permute.xlu0 0
        %535 = vperm.xlu0 %534, %v239
        %v536 = vpop.permute.xlu0 %535
        %537 = vset.pattern.permute.xlu0 0
        %538 = vperm.xlu0 %537, %v240
        %v539 = vpop.permute.xlu0 %538
        %540 = vset.pattern.permute.xlu0 0
        %541 = vperm.xlu0 %540, %v241
        %v542 = vpop.permute.xlu0 %541
        %543 = vset.pattern.permute.xlu0 0
        %544 = vperm.xlu0 %543, %v242
        %v545 = vpop.permute.xlu0 %544
        %546 = vset.pattern.permute.xlu0 0
        %547 = vperm.xlu0 %546, %v243
        %v548 = vpop.permute.xlu0 %547
        %549 = vset.pattern.permute.xlu0 0
        %550 = vperm.xlu0 %549, %v244
        %v551 = vpop.permute.xlu0 %550
        %552 = vset.pattern.permute.xlu0 0
        %553 = vperm.xlu0 %552, %v245
        %v554 = vpop.permute.xlu0 %553
        %555 = vset.pattern.permute.xlu0 0
        %556 = vperm.xlu0 %555, %v246
        %v557 = vpop.permute.xlu0 %556
        %558 = vset.pattern.permute.xlu0 0
        %559 = vperm.xlu0 %558, %v247
        %v560 = vpop.permute.xlu0 %559
        %561 = vset.pattern.permute.xlu0 0
        %562 = vperm.xlu0 %561, %v248
        %v563 = vpop.permute.xlu0 %562
        %564 = vset.pattern.permute.xlu0 0
        %565 = vperm.xlu0 %564, %v249
        %v566 = vpop.permute.xlu0 %565
        %567 = vset.pattern.permute.xlu0 0
        %568 = vperm.xlu0 %567, %v250
        %v569 = vpop.permute.xlu0 %568
        %570 = vset.pattern.permute.xlu0 0
        %571 = vperm.xlu0 %570, %v251
        %v572 = vpop.permute.xlu0 %571
        %573 = vset.pattern.permute.xlu0 0
        %574 = vperm.xlu0 %573, %v252
        %v575 = vpop.permute.xlu0 %574
        %vm576 = vcmp.eq.s32.totalorder %v482, %v479
        %vm577 = vcmp.eq.s32.totalorder %v485, %v479
        %vm578 = vcmp.eq.s32.totalorder %v488, %v479
        %vm579 = vcmp.eq.s32.totalorder %v491, %v479
        %vm580 = vcmp.eq.s32.totalorder %v494, %v479
        %vm581 = vcmp.eq.s32.totalorder %v497, %v479
        %vm582 = vcmp.eq.s32.totalorder %v500, %v479
        %vm583 = vcmp.eq.s32.totalorder %v503, %v479
        %vm584 = vcmp.eq.s32.totalorder %v506, %v479
        %vm585 = vcmp.eq.s32.totalorder %v509, %v479
        %vm586 = vcmp.eq.s32.totalorder %v512, %v479
        %vm587 = vcmp.eq.s32.totalorder %v515, %v479
        %vm588 = vcmp.eq.s32.totalorder %v518, %v479
        %vm589 = vcmp.eq.s32.totalorder %v521, %v479
        %vm590 = vcmp.eq.s32.totalorder %v524, %v479
        %vm591 = vcmp.eq.s32.totalorder %v527, %v479
        %vm592 = vcmp.eq.s32.totalorder %v530, %v479
        %vm593 = vcmp.eq.s32.totalorder %v533, %v479
        %vm594 = vcmp.eq.s32.totalorder %v536, %v479
        %vm595 = vcmp.eq.s32.totalorder %v539, %v479
        %vm596 = vcmp.eq.s32.totalorder %v542, %v479
        %vm597 = vcmp.eq.s32.totalorder %v545, %v479
        %vm598 = vcmp.eq.s32.totalorder %v548, %v479
        %vm599 = vcmp.eq.s32.totalorder %v551, %v479
        %vm600 = vcmp.eq.s32.totalorder %v554, %v479
        %vm601 = vcmp.eq.s32.totalorder %v557, %v479
        %vm602 = vcmp.eq.s32.totalorder %v560, %v479
        %vm603 = vcmp.eq.s32.totalorder %v563, %v479
        %vm604 = vcmp.eq.s32.totalorder %v566, %v479
        %vm605 = vcmp.eq.s32.totalorder %v569, %v479
        %vm606 = vcmp.eq.s32.totalorder %v572, %v479
        %vm607 = vcmp.eq.s32.totalorder %v575, %v479
        %609 = vset.pattern.permute.xlu0 0
        %610 = vperm.xlu0 %609, %v446
        %v611 = vpop.permute.xlu0 %610
        %614 = vset.pattern.permute.xlu0 0
        %615 = vperm.xlu0 %614, %v447
        %v616 = vpop.permute.xlu0 %615
        %619 = vset.pattern.permute.xlu0 0
        %620 = vperm.xlu0 %619, %v448
        %v621 = vpop.permute.xlu0 %620
        %624 = vset.pattern.permute.xlu0 0
        %625 = vperm.xlu0 %624, %v449
        %v626 = vpop.permute.xlu0 %625
        %629 = vset.pattern.permute.xlu0 0
        %630 = vperm.xlu0 %629, %v450
        %v631 = vpop.permute.xlu0 %630
        %634 = vset.pattern.permute.xlu0 0
        %635 = vperm.xlu0 %634, %v451
        %v636 = vpop.permute.xlu0 %635
        %639 = vset.pattern.permute.xlu0 0
        %640 = vperm.xlu0 %639, %v452
        %v641 = vpop.permute.xlu0 %640
        %644 = vset.pattern.permute.xlu0 0
        %645 = vperm.xlu0 %644, %v453
        %v646 = vpop.permute.xlu0 %645
        %649 = vset.pattern.permute.xlu0 0
        %650 = vperm.xlu0 %649, %v454
        %v651 = vpop.permute.xlu0 %650
        %654 = vset.pattern.permute.xlu0 0
        %655 = vperm.xlu0 %654, %v455
        %v656 = vpop.permute.xlu0 %655
        %659 = vset.pattern.permute.xlu0 0
        %660 = vperm.xlu0 %659, %v456
        %v661 = vpop.permute.xlu0 %660
        %664 = vset.pattern.permute.xlu0 0
        %665 = vperm.xlu0 %664, %v457
        %v666 = vpop.permute.xlu0 %665
        %669 = vset.pattern.permute.xlu0 0
        %670 = vperm.xlu0 %669, %v458
        %v671 = vpop.permute.xlu0 %670
        %674 = vset.pattern.permute.xlu0 0
        %675 = vperm.xlu0 %674, %v459
        %v676 = vpop.permute.xlu0 %675
        %679 = vset.pattern.permute.xlu0 0
        %680 = vperm.xlu0 %679, %v460
        %v681 = vpop.permute.xlu0 %680
        %684 = vset.pattern.permute.xlu0 0
        %685 = vperm.xlu0 %684, %v461
        %v686 = vpop.permute.xlu0 %685
        %689 = vset.pattern.permute.xlu0 0
        %690 = vperm.xlu0 %689, %v462
        %v691 = vpop.permute.xlu0 %690
        %694 = vset.pattern.permute.xlu0 0
        %695 = vperm.xlu0 %694, %v463
        %v696 = vpop.permute.xlu0 %695
        %699 = vset.pattern.permute.xlu0 0
        %700 = vperm.xlu0 %699, %v464
        %v701 = vpop.permute.xlu0 %700
        %704 = vset.pattern.permute.xlu0 0
        %705 = vperm.xlu0 %704, %v465
        %v706 = vpop.permute.xlu0 %705
        %709 = vset.pattern.permute.xlu0 0
        %710 = vperm.xlu0 %709, %v466
        %v711 = vpop.permute.xlu0 %710
        %714 = vset.pattern.permute.xlu0 0
        %715 = vperm.xlu0 %714, %v467
        %v716 = vpop.permute.xlu0 %715
        %719 = vset.pattern.permute.xlu0 0
        %720 = vperm.xlu0 %719, %v468
        %v721 = vpop.permute.xlu0 %720
        %724 = vset.pattern.permute.xlu0 0
        %725 = vperm.xlu0 %724, %v469
        %v726 = vpop.permute.xlu0 %725
        %729 = vset.pattern.permute.xlu0 0
        %730 = vperm.xlu0 %729, %v470
        %v731 = vpop.permute.xlu0 %730
        %734 = vset.pattern.permute.xlu0 0
        %735 = vperm.xlu0 %734, %v471
        %v736 = vpop.permute.xlu0 %735
        %739 = vset.pattern.permute.xlu0 0
        %740 = vperm.xlu0 %739, %v472
        %v741 = vpop.permute.xlu0 %740
        %744 = vset.pattern.permute.xlu0 0
        %745 = vperm.xlu0 %744, %v473
        %v746 = vpop.permute.xlu0 %745
        %749 = vset.pattern.permute.xlu0 0
        %750 = vperm.xlu0 %749, %v474
        %v751 = vpop.permute.xlu0 %750
        %754 = vset.pattern.permute.xlu0 0
        %755 = vperm.xlu0 %754, %v475
        %v756 = vpop.permute.xlu0 %755
        %759 = vset.pattern.permute.xlu0 0
        %760 = vperm.xlu0 %759, %v476
        %v761 = vpop.permute.xlu0 %760
        %764 = vset.pattern.permute.xlu0 0
        %765 = vperm.xlu0 %764, %v477
        %v766 = vpop.permute.xlu0 %765
        %v768 = vsel %vm576, %v611, 0.0
        %v769 = vsel %vm577, %v616, 0.0
        %v770 = vsel %vm578, %v621, 0.0
        %v771 = vsel %vm579, %v626, 0.0
        %v772 = vsel %vm580, %v631, 0.0
        %v773 = vsel %vm581, %v636, 0.0
        %v774 = vsel %vm582, %v641, 0.0
        %v775 = vsel %vm583, %v646, 0.0
        %v776 = vsel %vm584, %v651, 0.0
        %v777 = vsel %vm585, %v656, 0.0
        %v778 = vsel %vm586, %v661, 0.0
        %v779 = vsel %vm587, %v666, 0.0
        %v780 = vsel %vm588, %v671, 0.0
        %v781 = vsel %vm589, %v676, 0.0
        %v782 = vsel %vm590, %v681, 0.0
        %v783 = vsel %vm591, %v686, 0.0
        %v784 = vsel %vm592, %v691, 0.0
        %v785 = vsel %vm593, %v696, 0.0
        %v786 = vsel %vm594, %v701, 0.0
        %v787 = vsel %vm595, %v706, 0.0
        %v788 = vsel %vm596, %v711, 0.0
        %v789 = vsel %vm597, %v716, 0.0
        %v790 = vsel %vm598, %v721, 0.0
        %v791 = vsel %vm599, %v726, 0.0
        %v792 = vsel %vm600, %v731, 0.0
        %v793 = vsel %vm601, %v736, 0.0
        %v794 = vsel %vm602, %v741, 0.0
        %v795 = vsel %vm603, %v746, 0.0
        %v796 = vsel %vm604, %v751, 0.0
        %v797 = vsel %vm605, %v756, 0.0
        %v798 = vsel %vm606, %v761, 0.0
        %v799 = vsel %vm607, %v766, 0.0
        %v800 = vadd.f32 %v768, 0.0
        %v801 = vadd.f32 %v769, 0.0
        %v802 = vadd.f32 %v770, 0.0
        %v803 = vadd.f32 %v771, 0.0
        %v804 = vadd.f32 %v772, 0.0
        %v805 = vadd.f32 %v773, 0.0
        %v806 = vadd.f32 %v774, 0.0
        %v807 = vadd.f32 %v775, 0.0
        %v808 = vadd.f32 %v776, 0.0
        %v809 = vadd.f32 %v777, 0.0
        %v810 = vadd.f32 %v778, 0.0
        %v811 = vadd.f32 %v779, 0.0
        %v812 = vadd.f32 %v780, 0.0
        %v813 = vadd.f32 %v781, 0.0
        %v814 = vadd.f32 %v782, 0.0
        %v815 = vadd.f32 %v783, 0.0
        %v816 = vadd.f32 %v784, 0.0
        %v817 = vadd.f32 %v785, 0.0
        %v818 = vadd.f32 %v786, 0.0
        %v819 = vadd.f32 %v787, 0.0
        %v820 = vadd.f32 %v788, 0.0
        %v821 = vadd.f32 %v789, 0.0
        %v822 = vadd.f32 %v790, 0.0
        %v823 = vadd.f32 %v791, 0.0
        %v824 = vadd.f32 %v792, 0.0
        %v825 = vadd.f32 %v793, 0.0
        %v826 = vadd.f32 %v794, 0.0
        %v827 = vadd.f32 %v795, 0.0
        %v828 = vadd.f32 %v796, 0.0
        %v829 = vadd.f32 %v797, 0.0
        %v830 = vadd.f32 %v798, 0.0
        %v831 = vadd.f32 %v799, 0.0
        %832 = vset.pattern.permute.xlu0 1
        %833 = vperm.xlu0 %832, %v221
        %v834 = vpop.permute.xlu0 %833
        %835 = vset.pattern.permute.xlu0 1
        %836 = vperm.xlu0 %835, %v222
        %v837 = vpop.permute.xlu0 %836
        %838 = vset.pattern.permute.xlu0 1
        %839 = vperm.xlu0 %838, %v223
        %v840 = vpop.permute.xlu0 %839
        %841 = vset.pattern.permute.xlu0 1
        %842 = vperm.xlu0 %841, %v224
        %v843 = vpop.permute.xlu0 %842
        %844 = vset.pattern.permute.xlu0 1
        %845 = vperm.xlu0 %844, %v225
        %v846 = vpop.permute.xlu0 %845
        %847 = vset.pattern.permute.xlu0 1
        %848 = vperm.xlu0 %847, %v226
        %v849 = vpop.permute.xlu0 %848
        %850 = vset.pattern.permute.xlu0 1
        %851 = vperm.xlu0 %850, %v227
        %v852 = vpop.permute.xlu0 %851
        %853 = vset.pattern.permute.xlu0 1
        %854 = vperm.xlu0 %853, %v228
        %v855 = vpop.permute.xlu0 %854
        %856 = vset.pattern.permute.xlu0 1
        %857 = vperm.xlu0 %856, %v229
        %v858 = vpop.permute.xlu0 %857
        %859 = vset.pattern.permute.xlu0 1
        %860 = vperm.xlu0 %859, %v230
        %v861 = vpop.permute.xlu0 %860
        %862 = vset.pattern.permute.xlu0 1
        %863 = vperm.xlu0 %862, %v231
        %v864 = vpop.permute.xlu0 %863
        %865 = vset.pattern.permute.xlu0 1
        %866 = vperm.xlu0 %865, %v232
        %v867 = vpop.permute.xlu0 %866
        %868 = vset.pattern.permute.xlu0 1
        %869 = vperm.xlu0 %868, %v233
        %v870 = vpop.permute.xlu0 %869
        %871 = vset.pattern.permute.xlu0 1
        %872 = vperm.xlu0 %871, %v234
        %v873 = vpop.permute.xlu0 %872
        %874 = vset.pattern.permute.xlu0 1
        %875 = vperm.xlu0 %874, %v235
        %v876 = vpop.permute.xlu0 %875
        %877 = vset.pattern.permute.xlu0 1
        %878 = vperm.xlu0 %877, %v236
        %v879 = vpop.permute.xlu0 %878
        %880 = vset.pattern.permute.xlu0 1
        %881 = vperm.xlu0 %880, %v237
        %v882 = vpop.permute.xlu0 %881
        %883 = vset.pattern.permute.xlu0 1
        %884 = vperm.xlu0 %883, %v238
        %v885 = vpop.permute.xlu0 %884
        %886 = vset.pattern.permute.xlu0 1
        %887 = vperm.xlu0 %886, %v239
        %v888 = vpop.permute.xlu0 %887
        %889 = vset.pattern.permute.xlu0 1
        %890 = vperm.xlu0 %889, %v240
        %v891 = vpop.permute.xlu0 %890
        %892 = vset.pattern.permute.xlu0 1
        %893 = vperm.xlu0 %892, %v241
        %v894 = vpop.permute.xlu0 %893
        %895 = vset.pattern.permute.xlu0 1
        %896 = vperm.xlu0 %895, %v242
        %v897 = vpop.permute.xlu0 %896
        %898 = vset.pattern.permute.xlu0 1
        %899 = vperm.xlu0 %898, %v243
        %v900 = vpop.permute.xlu0 %899
        %901 = vset.pattern.permute.xlu0 1
        %902 = vperm.xlu0 %901, %v244
        %v903 = vpop.permute.xlu0 %902
        %904 = vset.pattern.permute.xlu0 1
        %905 = vperm.xlu0 %904, %v245
        %v906 = vpop.permute.xlu0 %905
        %907 = vset.pattern.permute.xlu0 1
        %908 = vperm.xlu0 %907, %v246
        %v909 = vpop.permute.xlu0 %908
        %910 = vset.pattern.permute.xlu0 1
        %911 = vperm.xlu0 %910, %v247
        %v912 = vpop.permute.xlu0 %911
        %913 = vset.pattern.permute.xlu0 1
        %914 = vperm.xlu0 %913, %v248
        %v915 = vpop.permute.xlu0 %914
        %916 = vset.pattern.permute.xlu0 1
        %917 = vperm.xlu0 %916, %v249
        %v918 = vpop.permute.xlu0 %917
        %919 = vset.pattern.permute.xlu0 1
        %920 = vperm.xlu0 %919, %v250
        %v921 = vpop.permute.xlu0 %920
        %922 = vset.pattern.permute.xlu0 1
        %923 = vperm.xlu0 %922, %v251
        %v924 = vpop.permute.xlu0 %923
        %925 = vset.pattern.permute.xlu0 1
        %926 = vperm.xlu0 %925, %v252
        %v927 = vpop.permute.xlu0 %926
        %vm928 = vcmp.eq.s32.totalorder %v834, %v479
        %vm929 = vcmp.eq.s32.totalorder %v837, %v479
        %vm930 = vcmp.eq.s32.totalorder %v840, %v479
        %vm931 = vcmp.eq.s32.totalorder %v843, %v479
        %vm932 = vcmp.eq.s32.totalorder %v846, %v479
        %vm933 = vcmp.eq.s32.totalorder %v849, %v479
        %vm934 = vcmp.eq.s32.totalorder %v852, %v479
        %vm935 = vcmp.eq.s32.totalorder %v855, %v479
        %vm936 = vcmp.eq.s32.totalorder %v858, %v479
        %vm937 = vcmp.eq.s32.totalorder %v861, %v479
        %vm938 = vcmp.eq.s32.totalorder %v864, %v479
        %vm939 = vcmp.eq.s32.totalorder %v867, %v479
        %vm940 = vcmp.eq.s32.totalorder %v870, %v479
        %vm941 = vcmp.eq.s32.totalorder %v873, %v479
        %vm942 = vcmp.eq.s32.totalorder %v876, %v479
        %vm943 = vcmp.eq.s32.totalorder %v879, %v479
        %vm944 = vcmp.eq.s32.totalorder %v882, %v479
        %vm945 = vcmp.eq.s32.totalorder %v885, %v479
        %vm946 = vcmp.eq.s32.totalorder %v888, %v479
        %vm947 = vcmp.eq.s32.totalorder %v891, %v479
        %vm948 = vcmp.eq.s32.totalorder %v894, %v479
        %vm949 = vcmp.eq.s32.totalorder %v897, %v479
        %vm950 = vcmp.eq.s32.totalorder %v900, %v479
        %vm951 = vcmp.eq.s32.totalorder %v903, %v479
        %vm952 = vcmp.eq.s32.totalorder %v906, %v479
        %vm953 = vcmp.eq.s32.totalorder %v909, %v479
        %vm954 = vcmp.eq.s32.totalorder %v912, %v479
        %vm955 = vcmp.eq.s32.totalorder %v915, %v479
        %vm956 = vcmp.eq.s32.totalorder %v918, %v479
        %vm957 = vcmp.eq.s32.totalorder %v921, %v479
        %vm958 = vcmp.eq.s32.totalorder %v924, %v479
        %vm959 = vcmp.eq.s32.totalorder %v927, %v479
        %960 = vset.pattern.permute.xlu0 1
        %961 = vperm.xlu0 %960, %v446
        %v962 = vpop.permute.xlu0 %961
        %964 = vset.pattern.permute.xlu0 1
        %965 = vperm.xlu0 %964, %v447
        %v966 = vpop.permute.xlu0 %965
        %968 = vset.pattern.permute.xlu0 1
        %969 = vperm.xlu0 %968, %v448
        %v970 = vpop.permute.xlu0 %969
        %972 = vset.pattern.permute.xlu0 1
        %973 = vperm.xlu0 %972, %v449
        %v974 = vpop.permute.xlu0 %973
        %976 = vset.pattern.permute.xlu0 1
        %977 = vperm.xlu0 %976, %v450
        %v978 = vpop.permute.xlu0 %977
        %980 = vset.pattern.permute.xlu0 1
        %981 = vperm.xlu0 %980, %v451
        %v982 = vpop.permute.xlu0 %981
        %984 = vset.pattern.permute.xlu0 1
        %985 = vperm.xlu0 %984, %v452
        %v986 = vpop.permute.xlu0 %985
        %988 = vset.pattern.permute.xlu0 1
        %989 = vperm.xlu0 %988, %v453
        %v990 = vpop.permute.xlu0 %989
        %992 = vset.pattern.permute.xlu0 1
        %993 = vperm.xlu0 %992, %v454
        %v994 = vpop.permute.xlu0 %993
        %996 = vset.pattern.permute.xlu0 1
        %997 = vperm.xlu0 %996, %v455
        %v998 = vpop.permute.xlu0 %997
        %1000 = vset.pattern.permute.xlu0 1
        %1001 = vperm.xlu0 %1000, %v456
        %v1002 = vpop.permute.xlu0 %1001
        %1004 = vset.pattern.permute.xlu0 1
        %1005 = vperm.xlu0 %1004, %v457
        %v1006 = vpop.permute.xlu0 %1005
        %1008 = vset.pattern.permute.xlu0 1
        %1009 = vperm.xlu0 %1008, %v458
        %v1010 = vpop.permute.xlu0 %1009
        %1012 = vset.pattern.permute.xlu0 1
        %1013 = vperm.xlu0 %1012, %v459
        %v1014 = vpop.permute.xlu0 %1013
        %1016 = vset.pattern.permute.xlu0 1
        %1017 = vperm.xlu0 %1016, %v460
        %v1018 = vpop.permute.xlu0 %1017
        %1020 = vset.pattern.permute.xlu0 1
        %1021 = vperm.xlu0 %1020, %v461
        %v1022 = vpop.permute.xlu0 %1021
        %1024 = vset.pattern.permute.xlu0 1
        %1025 = vperm.xlu0 %1024, %v462
        %v1026 = vpop.permute.xlu0 %1025
        %1028 = vset.pattern.permute.xlu0 1
        %1029 = vperm.xlu0 %1028, %v463
        %v1030 = vpop.permute.xlu0 %1029
        %1032 = vset.pattern.permute.xlu0 1
        %1033 = vperm.xlu0 %1032, %v464
        %v1034 = vpop.permute.xlu0 %1033
        %1036 = vset.pattern.permute.xlu0 1
        %1037 = vperm.xlu0 %1036, %v465
        %v1038 = vpop.permute.xlu0 %1037
        %1040 = vset.pattern.permute.xlu0 1
        %1041 = vperm.xlu0 %1040, %v466
        %v1042 = vpop.permute.xlu0 %1041
        %1044 = vset.pattern.permute.xlu0 1
        %1045 = vperm.xlu0 %1044, %v467
        %v1046 = vpop.permute.xlu0 %1045
        %1048 = vset.pattern.permute.xlu0 1
        %1049 = vperm.xlu0 %1048, %v468
        %v1050 = vpop.permute.xlu0 %1049
        %1052 = vset.pattern.permute.xlu0 1
        %1053 = vperm.xlu0 %1052, %v469
        %v1054 = vpop.permute.xlu0 %1053
        %1056 = vset.pattern.permute.xlu0 1
        %1057 = vperm.xlu0 %1056, %v470
        %v1058 = vpop.permute.xlu0 %1057
        %1060 = vset.pattern.permute.xlu0 1
        %1061 = vperm.xlu0 %1060, %v471
        %v1062 = vpop.permute.xlu0 %1061
        %1064 = vset.pattern.permute.xlu0 1
        %1065 = vperm.xlu0 %1064, %v472
        %v1066 = vpop.permute.xlu0 %1065
        %1068 = vset.pattern.permute.xlu0 1
        %1069 = vperm.xlu0 %1068, %v473
        %v1070 = vpop.permute.xlu0 %1069
        %1072 = vset.pattern.permute.xlu0 1
        %1073 = vperm.xlu0 %1072, %v474
        %v1074 = vpop.permute.xlu0 %1073
        %1076 = vset.pattern.permute.xlu0 1
        %1077 = vperm.xlu0 %1076, %v475
        %v1078 = vpop.permute.xlu0 %1077
        %1080 = vset.pattern.permute.xlu0 1
        %1081 = vperm.xlu0 %1080, %v476
        %v1082 = vpop.permute.xlu0 %1081
        %1084 = vset.pattern.permute.xlu0 1
        %1085 = vperm.xlu0 %1084, %v477
        %v1086 = vpop.permute.xlu0 %1085
        %v1088 = vsel %vm928, %v962, 0.0
        %v1089 = vsel %vm929, %v966, 0.0
        %v1090 = vsel %vm930, %v970, 0.0
        %v1091 = vsel %vm931, %v974, 0.0
        %v1092 = vsel %vm932, %v978, 0.0
        %v1093 = vsel %vm933, %v982, 0.0
        %v1094 = vsel %vm934, %v986, 0.0
        %v1095 = vsel %vm935, %v990, 0.0
        %v1096 = vsel %vm936, %v994, 0.0
        %v1097 = vsel %vm937, %v998, 0.0
        %v1098 = vsel %vm938, %v1002, 0.0
        %v1099 = vsel %vm939, %v1006, 0.0
        %v1100 = vsel %vm940, %v1010, 0.0
        %v1101 = vsel %vm941, %v1014, 0.0
        %v1102 = vsel %vm942, %v1018, 0.0
        %v1103 = vsel %vm943, %v1022, 0.0
        %v1104 = vsel %vm944, %v1026, 0.0
        %v1105 = vsel %vm945, %v1030, 0.0
        %v1106 = vsel %vm946, %v1034, 0.0
        %v1107 = vsel %vm947, %v1038, 0.0
        %v1108 = vsel %vm948, %v1042, 0.0
        %v1109 = vsel %vm949, %v1046, 0.0
        %v1110 = vsel %vm950, %v1050, 0.0
        %v1111 = vsel %vm951, %v1054, 0.0
        %v1112 = vsel %vm952, %v1058, 0.0
        %v1113 = vsel %vm953, %v1062, 0.0
        %v1114 = vsel %vm954, %v1066, 0.0
        %v1115 = vsel %vm955, %v1070, 0.0
        %v1116 = vsel %vm956, %v1074, 0.0
        %v1117 = vsel %vm957, %v1078, 0.0
        %v1118 = vsel %vm958, %v1082, 0.0
        %v1119 = vsel %vm959, %v1086, 0.0
        %v1120 = vadd.f32 %v800, %v1088
        %v1121 = vadd.f32 %v801, %v1089
        %v1122 = vadd.f32 %v802, %v1090
        %v1123 = vadd.f32 %v803, %v1091
        %v1124 = vadd.f32 %v804, %v1092
        %v1125 = vadd.f32 %v805, %v1093
        %v1126 = vadd.f32 %v806, %v1094
        %v1127 = vadd.f32 %v807, %v1095
        %v1128 = vadd.f32 %v808, %v1096
        %v1129 = vadd.f32 %v809, %v1097
        %v1130 = vadd.f32 %v810, %v1098
        %v1131 = vadd.f32 %v811, %v1099
        %v1132 = vadd.f32 %v812, %v1100
        %v1133 = vadd.f32 %v813, %v1101
        %v1134 = vadd.f32 %v814, %v1102
        %v1135 = vadd.f32 %v815, %v1103
        %v1136 = vadd.f32 %v816, %v1104
        %v1137 = vadd.f32 %v817, %v1105
        %v1138 = vadd.f32 %v818, %v1106
        %v1139 = vadd.f32 %v819, %v1107
        %v1140 = vadd.f32 %v820, %v1108
        %v1141 = vadd.f32 %v821, %v1109
        %v1142 = vadd.f32 %v822, %v1110
        %v1143 = vadd.f32 %v823, %v1111
        %v1144 = vadd.f32 %v824, %v1112
        %v1145 = vadd.f32 %v825, %v1113
        %v1146 = vadd.f32 %v826, %v1114
        %v1147 = vadd.f32 %v827, %v1115
        %v1148 = vadd.f32 %v828, %v1116
        %v1149 = vadd.f32 %v829, %v1117
        %v1150 = vadd.f32 %v830, %v1118
        %v1151 = vadd.f32 %v831, %v1119
        %1152 = vset.pattern.permute.xlu0 2
        %1153 = vperm.xlu0 %1152, %v221
        %v1154 = vpop.permute.xlu0 %1153
        %1155 = vset.pattern.permute.xlu0 2
        %1156 = vperm.xlu0 %1155, %v222
        %v1157 = vpop.permute.xlu0 %1156
        %1158 = vset.pattern.permute.xlu0 2
        %1159 = vperm.xlu0 %1158, %v223
        %v1160 = vpop.permute.xlu0 %1159
        %1161 = vset.pattern.permute.xlu0 2
        %1162 = vperm.xlu0 %1161, %v224
        %v1163 = vpop.permute.xlu0 %1162
        %1164 = vset.pattern.permute.xlu0 2
        %1165 = vperm.xlu0 %1164, %v225
        %v1166 = vpop.permute.xlu0 %1165
        %1167 = vset.pattern.permute.xlu0 2
        %1168 = vperm.xlu0 %1167, %v226
        %v1169 = vpop.permute.xlu0 %1168
        %1170 = vset.pattern.permute.xlu0 2
        %1171 = vperm.xlu0 %1170, %v227
        %v1172 = vpop.permute.xlu0 %1171
        %1173 = vset.pattern.permute.xlu0 2
        %1174 = vperm.xlu0 %1173, %v228
        %v1175 = vpop.permute.xlu0 %1174
        %1176 = vset.pattern.permute.xlu0 2
        %1177 = vperm.xlu0 %1176, %v229
        %v1178 = vpop.permute.xlu0 %1177
        %1179 = vset.pattern.permute.xlu0 2
        %1180 = vperm.xlu0 %1179, %v230
        %v1181 = vpop.permute.xlu0 %1180
        %1182 = vset.pattern.permute.xlu0 2
        %1183 = vperm.xlu0 %1182, %v231
        %v1184 = vpop.permute.xlu0 %1183
        %1185 = vset.pattern.permute.xlu0 2
        %1186 = vperm.xlu0 %1185, %v232
        %v1187 = vpop.permute.xlu0 %1186
        %1188 = vset.pattern.permute.xlu0 2
        %1189 = vperm.xlu0 %1188, %v233
        %v1190 = vpop.permute.xlu0 %1189
        %1191 = vset.pattern.permute.xlu0 2
        %1192 = vperm.xlu0 %1191, %v234
        %v1193 = vpop.permute.xlu0 %1192
        %1194 = vset.pattern.permute.xlu0 2
        %1195 = vperm.xlu0 %1194, %v235
        %v1196 = vpop.permute.xlu0 %1195
        %1197 = vset.pattern.permute.xlu0 2
        %1198 = vperm.xlu0 %1197, %v236
        %v1199 = vpop.permute.xlu0 %1198
        %1200 = vset.pattern.permute.xlu0 2
        %1201 = vperm.xlu0 %1200, %v237
        %v1202 = vpop.permute.xlu0 %1201
        %1203 = vset.pattern.permute.xlu0 2
        %1204 = vperm.xlu0 %1203, %v238
        %v1205 = vpop.permute.xlu0 %1204
        %1206 = vset.pattern.permute.xlu0 2
        %1207 = vperm.xlu0 %1206, %v239
        %v1208 = vpop.permute.xlu0 %1207
        %1209 = vset.pattern.permute.xlu0 2
        %1210 = vperm.xlu0 %1209, %v240
        %v1211 = vpop.permute.xlu0 %1210
        %1212 = vset.pattern.permute.xlu0 2
        %1213 = vperm.xlu0 %1212, %v241
        %v1214 = vpop.permute.xlu0 %1213
        %1215 = vset.pattern.permute.xlu0 2
        %1216 = vperm.xlu0 %1215, %v242
        %v1217 = vpop.permute.xlu0 %1216
        %1218 = vset.pattern.permute.xlu0 2
        %1219 = vperm.xlu0 %1218, %v243
        %v1220 = vpop.permute.xlu0 %1219
        %1221 = vset.pattern.permute.xlu0 2
        %1222 = vperm.xlu0 %1221, %v244
        %v1223 = vpop.permute.xlu0 %1222
        %1224 = vset.pattern.permute.xlu0 2
        %1225 = vperm.xlu0 %1224, %v245
        %v1226 = vpop.permute.xlu0 %1225
        %1227 = vset.pattern.permute.xlu0 2
        %1228 = vperm.xlu0 %1227, %v246
        %v1229 = vpop.permute.xlu0 %1228
        %1230 = vset.pattern.permute.xlu0 2
        %1231 = vperm.xlu0 %1230, %v247
        %v1232 = vpop.permute.xlu0 %1231
        %1233 = vset.pattern.permute.xlu0 2
        %1234 = vperm.xlu0 %1233, %v248
        %v1235 = vpop.permute.xlu0 %1234
        %1236 = vset.pattern.permute.xlu0 2
        %1237 = vperm.xlu0 %1236, %v249
        %v1238 = vpop.permute.xlu0 %1237
        %1239 = vset.pattern.permute.xlu0 2
        %1240 = vperm.xlu0 %1239, %v250
        %v1241 = vpop.permute.xlu0 %1240
        %1242 = vset.pattern.permute.xlu0 2
        %1243 = vperm.xlu0 %1242, %v251
        %v1244 = vpop.permute.xlu0 %1243
        %1245 = vset.pattern.permute.xlu0 2
        %1246 = vperm.xlu0 %1245, %v252
        %v1247 = vpop.permute.xlu0 %1246
        %vm1248 = vcmp.eq.s32.totalorder %v1154, %v479
        %vm1249 = vcmp.eq.s32.totalorder %v1157, %v479
        %vm1250 = vcmp.eq.s32.totalorder %v1160, %v479
        %vm1251 = vcmp.eq.s32.totalorder %v1163, %v479
        %vm1252 = vcmp.eq.s32.totalorder %v1166, %v479
        %vm1253 = vcmp.eq.s32.totalorder %v1169, %v479
        %vm1254 = vcmp.eq.s32.totalorder %v1172, %v479
        %vm1255 = vcmp.eq.s32.totalorder %v1175, %v479
        %vm1256 = vcmp.eq.s32.totalorder %v1178, %v479
        %vm1257 = vcmp.eq.s32.totalorder %v1181, %v479
        %vm1258 = vcmp.eq.s32.totalorder %v1184, %v479
        %vm1259 = vcmp.eq.s32.totalorder %v1187, %v479
        %vm1260 = vcmp.eq.s32.totalorder %v1190, %v479
        %vm1261 = vcmp.eq.s32.totalorder %v1193, %v479
        %vm1262 = vcmp.eq.s32.totalorder %v1196, %v479
        %vm1263 = vcmp.eq.s32.totalorder %v1199, %v479
        %vm1264 = vcmp.eq.s32.totalorder %v1202, %v479
        %vm1265 = vcmp.eq.s32.totalorder %v1205, %v479
        %vm1266 = vcmp.eq.s32.totalorder %v1208, %v479
        %vm1267 = vcmp.eq.s32.totalorder %v1211, %v479
        %vm1268 = vcmp.eq.s32.totalorder %v1214, %v479
        %vm1269 = vcmp.eq.s32.totalorder %v1217, %v479
        %vm1270 = vcmp.eq.s32.totalorder %v1220, %v479
        %vm1271 = vcmp.eq.s32.totalorder %v1223, %v479
        %vm1272 = vcmp.eq.s32.totalorder %v1226, %v479
        %vm1273 = vcmp.eq.s32.totalorder %v1229, %v479
        %vm1274 = vcmp.eq.s32.totalorder %v1232, %v479
        %vm1275 = vcmp.eq.s32.totalorder %v1235, %v479
        %vm1276 = vcmp.eq.s32.totalorder %v1238, %v479
        %vm1277 = vcmp.eq.s32.totalorder %v1241, %v479
        %vm1278 = vcmp.eq.s32.totalorder %v1244, %v479
        %vm1279 = vcmp.eq.s32.totalorder %v1247, %v479
        %1280 = vset.pattern.permute.xlu0 2
        %1281 = vperm.xlu0 %1280, %v446
        %v1282 = vpop.permute.xlu0 %1281
        %1284 = vset.pattern.permute.xlu0 2
        %1285 = vperm.xlu0 %1284, %v447
        %v1286 = vpop.permute.xlu0 %1285
        %1288 = vset.pattern.permute.xlu0 2
        %1289 = vperm.xlu0 %1288, %v448
        %v1290 = vpop.permute.xlu0 %1289
        %1292 = vset.pattern.permute.xlu0 2
        %1293 = vperm.xlu0 %1292, %v449
        %v1294 = vpop.permute.xlu0 %1293
        %1296 = vset.pattern.permute.xlu0 2
        %1297 = vperm.xlu0 %1296, %v450
        %v1298 = vpop.permute.xlu0 %1297
        %1300 = vset.pattern.permute.xlu0 2
        %1301 = vperm.xlu0 %1300, %v451
        %v1302 = vpop.permute.xlu0 %1301
        %1304 = vset.pattern.permute.xlu0 2
        %1305 = vperm.xlu0 %1304, %v452
        %v1306 = vpop.permute.xlu0 %1305
        %1308 = vset.pattern.permute.xlu0 2
        %1309 = vperm.xlu0 %1308, %v453
        %v1310 = vpop.permute.xlu0 %1309
        %1312 = vset.pattern.permute.xlu0 2
        %1313 = vperm.xlu0 %1312, %v454
        %v1314 = vpop.permute.xlu0 %1313
        %1316 = vset.pattern.permute.xlu0 2
        %1317 = vperm.xlu0 %1316, %v455
        %v1318 = vpop.permute.xlu0 %1317
        %1320 = vset.pattern.permute.xlu0 2
        %1321 = vperm.xlu0 %1320, %v456
        %v1322 = vpop.permute.xlu0 %1321
        %1324 = vset.pattern.permute.xlu0 2
        %1325 = vperm.xlu0 %1324, %v457
        %v1326 = vpop.permute.xlu0 %1325
        %1328 = vset.pattern.permute.xlu0 2
        %1329 = vperm.xlu0 %1328, %v458
        %v1330 = vpop.permute.xlu0 %1329
        %1332 = vset.pattern.permute.xlu0 2
        %1333 = vperm.xlu0 %1332, %v459
        %v1334 = vpop.permute.xlu0 %1333
        %1336 = vset.pattern.permute.xlu0 2
        %1337 = vperm.xlu0 %1336, %v460
        %v1338 = vpop.permute.xlu0 %1337
        %1340 = vset.pattern.permute.xlu0 2
        %1341 = vperm.xlu0 %1340, %v461
        %v1342 = vpop.permute.xlu0 %1341
        %1344 = vset.pattern.permute.xlu0 2
        %1345 = vperm.xlu0 %1344, %v462
        %v1346 = vpop.permute.xlu0 %1345
        %1348 = vset.pattern.permute.xlu0 2
        %1349 = vperm.xlu0 %1348, %v463
        %v1350 = vpop.permute.xlu0 %1349
        %1352 = vset.pattern.permute.xlu0 2
        %1353 = vperm.xlu0 %1352, %v464
        %v1354 = vpop.permute.xlu0 %1353
        %1356 = vset.pattern.permute.xlu0 2
        %1357 = vperm.xlu0 %1356, %v465
        %v1358 = vpop.permute.xlu0 %1357
        %1360 = vset.pattern.permute.xlu0 2
        %1361 = vperm.xlu0 %1360, %v466
        %v1362 = vpop.permute.xlu0 %1361
        %1364 = vset.pattern.permute.xlu0 2
        %1365 = vperm.xlu0 %1364, %v467
        %v1366 = vpop.permute.xlu0 %1365
        %1368 = vset.pattern.permute.xlu0 2
        %1369 = vperm.xlu0 %1368, %v468
        %v1370 = vpop.permute.xlu0 %1369
        %1372 = vset.pattern.permute.xlu0 2
        %1373 = vperm.xlu0 %1372, %v469
        %v1374 = vpop.permute.xlu0 %1373
        %1376 = vset.pattern.permute.xlu0 2
        %1377 = vperm.xlu0 %1376, %v470
        %v1378 = vpop.permute.xlu0 %1377
        %1380 = vset.pattern.permute.xlu0 2
        %1381 = vperm.xlu0 %1380, %v471
        %v1382 = vpop.permute.xlu0 %1381
        %1384 = vset.pattern.permute.xlu0 2
        %1385 = vperm.xlu0 %1384, %v472
        %v1386 = vpop.permute.xlu0 %1385
        %1388 = vset.pattern.permute.xlu0 2
        %1389 = vperm.xlu0 %1388, %v473
        %v1390 = vpop.permute.xlu0 %1389
        %1392 = vset.pattern.permute.xlu0 2
        %1393 = vperm.xlu0 %1392, %v474
        %v1394 = vpop.permute.xlu0 %1393
        %1396 = vset.pattern.permute.xlu0 2
        %1397 = vperm.xlu0 %1396, %v475
        %v1398 = vpop.permute.xlu0 %1397
        %1400 = vset.pattern.permute.xlu0 2
        %1401 = vperm.xlu0 %1400, %v476
        %v1402 = vpop.permute.xlu0 %1401
        %1404 = vset.pattern.permute.xlu0 2
        %1405 = vperm.xlu0 %1404, %v477
        %v1406 = vpop.permute.xlu0 %1405
        %v1408 = vsel %vm1248, %v1282, 0.0
        %v1409 = vsel %vm1249, %v1286, 0.0
        %v1410 = vsel %vm1250, %v1290, 0.0
        %v1411 = vsel %vm1251, %v1294, 0.0
        %v1412 = vsel %vm1252, %v1298, 0.0
        %v1413 = vsel %vm1253, %v1302, 0.0
        %v1414 = vsel %vm1254, %v1306, 0.0
        %v1415 = vsel %vm1255, %v1310, 0.0
        %v1416 = vsel %vm1256, %v1314, 0.0
        %v1417 = vsel %vm1257, %v1318, 0.0
        %v1418 = vsel %vm1258, %v1322, 0.0
        %v1419 = vsel %vm1259, %v1326, 0.0
        %v1420 = vsel %vm1260, %v1330, 0.0
        %v1421 = vsel %vm1261, %v1334, 0.0
        %v1422 = vsel %vm1262, %v1338, 0.0
        %v1423 = vsel %vm1263, %v1342, 0.0
        %v1424 = vsel %vm1264, %v1346, 0.0
        %v1425 = vsel %vm1265, %v1350, 0.0
        %v1426 = vsel %vm1266, %v1354, 0.0
        %v1427 = vsel %vm1267, %v1358, 0.0
        %v1428 = vsel %vm1268, %v1362, 0.0
        %v1429 = vsel %vm1269, %v1366, 0.0
        %v1430 = vsel %vm1270, %v1370, 0.0
        %v1431 = vsel %vm1271, %v1374, 0.0
        %v1432 = vsel %vm1272, %v1378, 0.0
        %v1433 = vsel %vm1273, %v1382, 0.0
        %v1434 = vsel %vm1274, %v1386, 0.0
        %v1435 = vsel %vm1275, %v1390, 0.0
        %v1436 = vsel %vm1276, %v1394, 0.0
        %v1437 = vsel %vm1277, %v1398, 0.0
        %v1438 = vsel %vm1278, %v1402, 0.0
        %v1439 = vsel %vm1279, %v1406, 0.0
        %v1440 = vadd.f32 %v1120, %v1408
        %v1441 = vadd.f32 %v1121, %v1409
        %v1442 = vadd.f32 %v1122, %v1410
        %v1443 = vadd.f32 %v1123, %v1411
        %v1444 = vadd.f32 %v1124, %v1412
        %v1445 = vadd.f32 %v1125, %v1413
        %v1446 = vadd.f32 %v1126, %v1414
        %v1447 = vadd.f32 %v1127, %v1415
        %v1448 = vadd.f32 %v1128, %v1416
        %v1449 = vadd.f32 %v1129, %v1417
        %v1450 = vadd.f32 %v1130, %v1418
        %v1451 = vadd.f32 %v1131, %v1419
        %v1452 = vadd.f32 %v1132, %v1420
        %v1453 = vadd.f32 %v1133, %v1421
        %v1454 = vadd.f32 %v1134, %v1422
        %v1455 = vadd.f32 %v1135, %v1423
        %v1456 = vadd.f32 %v1136, %v1424
        %v1457 = vadd.f32 %v1137, %v1425
        %v1458 = vadd.f32 %v1138, %v1426
        %v1459 = vadd.f32 %v1139, %v1427
        %v1460 = vadd.f32 %v1140, %v1428
        %v1461 = vadd.f32 %v1141, %v1429
        %v1462 = vadd.f32 %v1142, %v1430
        %v1463 = vadd.f32 %v1143, %v1431
        %v1464 = vadd.f32 %v1144, %v1432
        %v1465 = vadd.f32 %v1145, %v1433
        %v1466 = vadd.f32 %v1146, %v1434
        %v1467 = vadd.f32 %v1147, %v1435
        %v1468 = vadd.f32 %v1148, %v1436
        %v1469 = vadd.f32 %v1149, %v1437
        %v1470 = vadd.f32 %v1150, %v1438
        %v1471 = vadd.f32 %v1151, %v1439
        %1472 = vset.pattern.permute.xlu0 3
        %1473 = vperm.xlu0 %1472, %v221
        %v1474 = vpop.permute.xlu0 %1473
        %1475 = vset.pattern.permute.xlu0 3
        %1476 = vperm.xlu0 %1475, %v222
        %v1477 = vpop.permute.xlu0 %1476
        %1478 = vset.pattern.permute.xlu0 3
        %1479 = vperm.xlu0 %1478, %v223
        %v1480 = vpop.permute.xlu0 %1479
        %1481 = vset.pattern.permute.xlu0 3
        %1482 = vperm.xlu0 %1481, %v224
        %v1483 = vpop.permute.xlu0 %1482
        %1484 = vset.pattern.permute.xlu0 3
        %1485 = vperm.xlu0 %1484, %v225
        %v1486 = vpop.permute.xlu0 %1485
        %1487 = vset.pattern.permute.xlu0 3
        %1488 = vperm.xlu0 %1487, %v226
        %v1489 = vpop.permute.xlu0 %1488
        %1490 = vset.pattern.permute.xlu0 3
        %1491 = vperm.xlu0 %1490, %v227
        %v1492 = vpop.permute.xlu0 %1491
        %1493 = vset.pattern.permute.xlu0 3
        %1494 = vperm.xlu0 %1493, %v228
        %v1495 = vpop.permute.xlu0 %1494
        %1496 = vset.pattern.permute.xlu0 3
        %1497 = vperm.xlu0 %1496, %v229
        %v1498 = vpop.permute.xlu0 %1497
        %1499 = vset.pattern.permute.xlu0 3
        %1500 = vperm.xlu0 %1499, %v230
        %v1501 = vpop.permute.xlu0 %1500
        %1502 = vset.pattern.permute.xlu0 3
        %1503 = vperm.xlu0 %1502, %v231
        %v1504 = vpop.permute.xlu0 %1503
        %1505 = vset.pattern.permute.xlu0 3
        %1506 = vperm.xlu0 %1505, %v232
        %v1507 = vpop.permute.xlu0 %1506
        %1508 = vset.pattern.permute.xlu0 3
        %1509 = vperm.xlu0 %1508, %v233
        %v1510 = vpop.permute.xlu0 %1509
        %1511 = vset.pattern.permute.xlu0 3
        %1512 = vperm.xlu0 %1511, %v234
        %v1513 = vpop.permute.xlu0 %1512
        %1514 = vset.pattern.permute.xlu0 3
        %1515 = vperm.xlu0 %1514, %v235
        %v1516 = vpop.permute.xlu0 %1515
        %1517 = vset.pattern.permute.xlu0 3
        %1518 = vperm.xlu0 %1517, %v236
        %v1519 = vpop.permute.xlu0 %1518
        %1520 = vset.pattern.permute.xlu0 3
        %1521 = vperm.xlu0 %1520, %v237
        %v1522 = vpop.permute.xlu0 %1521
        %1523 = vset.pattern.permute.xlu0 3
        %1524 = vperm.xlu0 %1523, %v238
        %v1525 = vpop.permute.xlu0 %1524
        %1526 = vset.pattern.permute.xlu0 3
        %1527 = vperm.xlu0 %1526, %v239
        %v1528 = vpop.permute.xlu0 %1527
        %1529 = vset.pattern.permute.xlu0 3
        %1530 = vperm.xlu0 %1529, %v240
        %v1531 = vpop.permute.xlu0 %1530
        %1532 = vset.pattern.permute.xlu0 3
        %1533 = vperm.xlu0 %1532, %v241
        %v1534 = vpop.permute.xlu0 %1533
        %1535 = vset.pattern.permute.xlu0 3
        %1536 = vperm.xlu0 %1535, %v242
        %v1537 = vpop.permute.xlu0 %1536
        %1538 = vset.pattern.permute.xlu0 3
        %1539 = vperm.xlu0 %1538, %v243
        %v1540 = vpop.permute.xlu0 %1539
        %1541 = vset.pattern.permute.xlu0 3
        %1542 = vperm.xlu0 %1541, %v244
        %v1543 = vpop.permute.xlu0 %1542
        %1544 = vset.pattern.permute.xlu0 3
        %1545 = vperm.xlu0 %1544, %v245
        %v1546 = vpop.permute.xlu0 %1545
        %1547 = vset.pattern.permute.xlu0 3
        %1548 = vperm.xlu0 %1547, %v246
        %v1549 = vpop.permute.xlu0 %1548
        %1550 = vset.pattern.permute.xlu0 3
        %1551 = vperm.xlu0 %1550, %v247
        %v1552 = vpop.permute.xlu0 %1551
        %1553 = vset.pattern.permute.xlu0 3
        %1554 = vperm.xlu0 %1553, %v248
        %v1555 = vpop.permute.xlu0 %1554
        %1556 = vset.pattern.permute.xlu0 3
        %1557 = vperm.xlu0 %1556, %v249
        %v1558 = vpop.permute.xlu0 %1557
        %1559 = vset.pattern.permute.xlu0 3
        %1560 = vperm.xlu0 %1559, %v250
        %v1561 = vpop.permute.xlu0 %1560
        %1562 = vset.pattern.permute.xlu0 3
        %1563 = vperm.xlu0 %1562, %v251
        %v1564 = vpop.permute.xlu0 %1563
        %1565 = vset.pattern.permute.xlu0 3
        %1566 = vperm.xlu0 %1565, %v252
        %v1567 = vpop.permute.xlu0 %1566
        %vm1568 = vcmp.eq.s32.totalorder %v1474, %v479
        %vm1569 = vcmp.eq.s32.totalorder %v1477, %v479
        %vm1570 = vcmp.eq.s32.totalorder %v1480, %v479
        %vm1571 = vcmp.eq.s32.totalorder %v1483, %v479
        %vm1572 = vcmp.eq.s32.totalorder %v1486, %v479
        %vm1573 = vcmp.eq.s32.totalorder %v1489, %v479
        %vm1574 = vcmp.eq.s32.totalorder %v1492, %v479
        %vm1575 = vcmp.eq.s32.totalorder %v1495, %v479
        %vm1576 = vcmp.eq.s32.totalorder %v1498, %v479
        %vm1577 = vcmp.eq.s32.totalorder %v1501, %v479
        %vm1578 = vcmp.eq.s32.totalorder %v1504, %v479
        %vm1579 = vcmp.eq.s32.totalorder %v1507, %v479
        %vm1580 = vcmp.eq.s32.totalorder %v1510, %v479
        %vm1581 = vcmp.eq.s32.totalorder %v1513, %v479
        %vm1582 = vcmp.eq.s32.totalorder %v1516, %v479
        %vm1583 = vcmp.eq.s32.totalorder %v1519, %v479
        %vm1584 = vcmp.eq.s32.totalorder %v1522, %v479
        %vm1585 = vcmp.eq.s32.totalorder %v1525, %v479
        %vm1586 = vcmp.eq.s32.totalorder %v1528, %v479
        %vm1587 = vcmp.eq.s32.totalorder %v1531, %v479
        %vm1588 = vcmp.eq.s32.totalorder %v1534, %v479
        %vm1589 = vcmp.eq.s32.totalorder %v1537, %v479
        %vm1590 = vcmp.eq.s32.totalorder %v1540, %v479
        %vm1591 = vcmp.eq.s32.totalorder %v1543, %v479
        %vm1592 = vcmp.eq.s32.totalorder %v1546, %v479
        %vm1593 = vcmp.eq.s32.totalorder %v1549, %v479
        %vm1594 = vcmp.eq.s32.totalorder %v1552, %v479
        %vm1595 = vcmp.eq.s32.totalorder %v1555, %v479
        %vm1596 = vcmp.eq.s32.totalorder %v1558, %v479
        %vm1597 = vcmp.eq.s32.totalorder %v1561, %v479
        %vm1598 = vcmp.eq.s32.totalorder %v1564, %v479
        %vm1599 = vcmp.eq.s32.totalorder %v1567, %v479
        %1600 = vset.pattern.permute.xlu0 3
        %1601 = vperm.xlu0 %1600, %v446
        %v1602 = vpop.permute.xlu0 %1601
        %1604 = vset.pattern.permute.xlu0 3
        %1605 = vperm.xlu0 %1604, %v447
        %v1606 = vpop.permute.xlu0 %1605
        %1608 = vset.pattern.permute.xlu0 3
        %1609 = vperm.xlu0 %1608, %v448
        %v1610 = vpop.permute.xlu0 %1609
        %1612 = vset.pattern.permute.xlu0 3
        %1613 = vperm.xlu0 %1612, %v449
        %v1614 = vpop.permute.xlu0 %1613
        %1616 = vset.pattern.permute.xlu0 3
        %1617 = vperm.xlu0 %1616, %v450
        %v1618 = vpop.permute.xlu0 %1617
        %1620 = vset.pattern.permute.xlu0 3
        %1621 = vperm.xlu0 %1620, %v451
        %v1622 = vpop.permute.xlu0 %1621
        %1624 = vset.pattern.permute.xlu0 3
        %1625 = vperm.xlu0 %1624, %v452
        %v1626 = vpop.permute.xlu0 %1625
        %1628 = vset.pattern.permute.xlu0 3
        %1629 = vperm.xlu0 %1628, %v453
        %v1630 = vpop.permute.xlu0 %1629
        %1632 = vset.pattern.permute.xlu0 3
        %1633 = vperm.xlu0 %1632, %v454
        %v1634 = vpop.permute.xlu0 %1633
        %1636 = vset.pattern.permute.xlu0 3
        %1637 = vperm.xlu0 %1636, %v455
        %v1638 = vpop.permute.xlu0 %1637
        %1640 = vset.pattern.permute.xlu0 3
        %1641 = vperm.xlu0 %1640, %v456
        %v1642 = vpop.permute.xlu0 %1641
        %1644 = vset.pattern.permute.xlu0 3
        %1645 = vperm.xlu0 %1644, %v457
        %v1646 = vpop.permute.xlu0 %1645
        %1648 = vset.pattern.permute.xlu0 3
        %1649 = vperm.xlu0 %1648, %v458
        %v1650 = vpop.permute.xlu0 %1649
        %1652 = vset.pattern.permute.xlu0 3
        %1653 = vperm.xlu0 %1652, %v459
        %v1654 = vpop.permute.xlu0 %1653
        %1656 = vset.pattern.permute.xlu0 3
        %1657 = vperm.xlu0 %1656, %v460
        %v1658 = vpop.permute.xlu0 %1657
        %1660 = vset.pattern.permute.xlu0 3
        %1661 = vperm.xlu0 %1660, %v461
        %v1662 = vpop.permute.xlu0 %1661
        %1664 = vset.pattern.permute.xlu0 3
        %1665 = vperm.xlu0 %1664, %v462
        %v1666 = vpop.permute.xlu0 %1665
        %1668 = vset.pattern.permute.xlu0 3
        %1669 = vperm.xlu0 %1668, %v463
        %v1670 = vpop.permute.xlu0 %1669
        %1672 = vset.pattern.permute.xlu0 3
        %1673 = vperm.xlu0 %1672, %v464
        %v1674 = vpop.permute.xlu0 %1673
        %1676 = vset.pattern.permute.xlu0 3
        %1677 = vperm.xlu0 %1676, %v465
        %v1678 = vpop.permute.xlu0 %1677
        %1680 = vset.pattern.permute.xlu0 3
        %1681 = vperm.xlu0 %1680, %v466
        %v1682 = vpop.permute.xlu0 %1681
        %1684 = vset.pattern.permute.xlu0 3
        %1685 = vperm.xlu0 %1684, %v467
        %v1686 = vpop.permute.xlu0 %1685
        %1688 = vset.pattern.permute.xlu0 3
        %1689 = vperm.xlu0 %1688, %v468
        %v1690 = vpop.permute.xlu0 %1689
        %1692 = vset.pattern.permute.xlu0 3
        %1693 = vperm.xlu0 %1692, %v469
        %v1694 = vpop.permute.xlu0 %1693
        %1696 = vset.pattern.permute.xlu0 3
        %1697 = vperm.xlu0 %1696, %v470
        %v1698 = vpop.permute.xlu0 %1697
        %1700 = vset.pattern.permute.xlu0 3
        %1701 = vperm.xlu0 %1700, %v471
        %v1702 = vpop.permute.xlu0 %1701
        %1704 = vset.pattern.permute.xlu0 3
        %1705 = vperm.xlu0 %1704, %v472
        %v1706 = vpop.permute.xlu0 %1705
        %1708 = vset.pattern.permute.xlu0 3
        %1709 = vperm.xlu0 %1708, %v473
        %v1710 = vpop.permute.xlu0 %1709
        %1712 = vset.pattern.permute.xlu0 3
        %1713 = vperm.xlu0 %1712, %v474
        %v1714 = vpop.permute.xlu0 %1713
        %1716 = vset.pattern.permute.xlu0 3
        %1717 = vperm.xlu0 %1716, %v475
        %v1718 = vpop.permute.xlu0 %1717
        %1720 = vset.pattern.permute.xlu0 3
        %1721 = vperm.xlu0 %1720, %v476
        %v1722 = vpop.permute.xlu0 %1721
        %1724 = vset.pattern.permute.xlu0 3
        %1725 = vperm.xlu0 %1724, %v477
        %v1726 = vpop.permute.xlu0 %1725
        %v1728 = vsel %vm1568, %v1602, 0.0
        %v1729 = vsel %vm1569, %v1606, 0.0
        %v1730 = vsel %vm1570, %v1610, 0.0
        %v1731 = vsel %vm1571, %v1614, 0.0
        %v1732 = vsel %vm1572, %v1618, 0.0
        %v1733 = vsel %vm1573, %v1622, 0.0
        %v1734 = vsel %vm1574, %v1626, 0.0
        %v1735 = vsel %vm1575, %v1630, 0.0
        %v1736 = vsel %vm1576, %v1634, 0.0
        %v1737 = vsel %vm1577, %v1638, 0.0
        %v1738 = vsel %vm1578, %v1642, 0.0
        %v1739 = vsel %vm1579, %v1646, 0.0
        %v1740 = vsel %vm1580, %v1650, 0.0
        %v1741 = vsel %vm1581, %v1654, 0.0
        %v1742 = vsel %vm1582, %v1658, 0.0
        %v1743 = vsel %vm1583, %v1662, 0.0
        %v1744 = vsel %vm1584, %v1666, 0.0
        %v1745 = vsel %vm1585, %v1670, 0.0
        %v1746 = vsel %vm1586, %v1674, 0.0
        %v1747 = vsel %vm1587, %v1678, 0.0
        %v1748 = vsel %vm1588, %v1682, 0.0
        %v1749 = vsel %vm1589, %v1686, 0.0
        %v1750 = vsel %vm1590, %v1690, 0.0
        %v1751 = vsel %vm1591, %v1694, 0.0
        %v1752 = vsel %vm1592, %v1698, 0.0
        %v1753 = vsel %vm1593, %v1702, 0.0
        %v1754 = vsel %vm1594, %v1706, 0.0
        %v1755 = vsel %vm1595, %v1710, 0.0
        %v1756 = vsel %vm1596, %v1714, 0.0
        %v1757 = vsel %vm1597, %v1718, 0.0
        %v1758 = vsel %vm1598, %v1722, 0.0
        %v1759 = vsel %vm1599, %v1726, 0.0
        %v1760 = vadd.f32 %v1440, %v1728
        %v1761 = vadd.f32 %v1441, %v1729
        %v1762 = vadd.f32 %v1442, %v1730
        %v1763 = vadd.f32 %v1443, %v1731
        %v1764 = vadd.f32 %v1444, %v1732
        %v1765 = vadd.f32 %v1445, %v1733
        %v1766 = vadd.f32 %v1446, %v1734
        %v1767 = vadd.f32 %v1447, %v1735
        %v1768 = vadd.f32 %v1448, %v1736
        %v1769 = vadd.f32 %v1449, %v1737
        %v1770 = vadd.f32 %v1450, %v1738
        %v1771 = vadd.f32 %v1451, %v1739
        %v1772 = vadd.f32 %v1452, %v1740
        %v1773 = vadd.f32 %v1453, %v1741
        %v1774 = vadd.f32 %v1454, %v1742
        %v1775 = vadd.f32 %v1455, %v1743
        %v1776 = vadd.f32 %v1456, %v1744
        %v1777 = vadd.f32 %v1457, %v1745
        %v1778 = vadd.f32 %v1458, %v1746
        %v1779 = vadd.f32 %v1459, %v1747
        %v1780 = vadd.f32 %v1460, %v1748
        %v1781 = vadd.f32 %v1461, %v1749
        %v1782 = vadd.f32 %v1462, %v1750
        %v1783 = vadd.f32 %v1463, %v1751
        %v1784 = vadd.f32 %v1464, %v1752
        %v1785 = vadd.f32 %v1465, %v1753
        %v1786 = vadd.f32 %v1466, %v1754
        %v1787 = vadd.f32 %v1467, %v1755
        %v1788 = vadd.f32 %v1468, %v1756
        %v1789 = vadd.f32 %v1469, %v1757
        %v1790 = vadd.f32 %v1470, %v1758
        %v1791 = vadd.f32 %v1471, %v1759
        %1792 = vset.pattern.permute.xlu0 4
        %1793 = vperm.xlu0 %1792, %v221
        %v1794 = vpop.permute.xlu0 %1793
        %1795 = vset.pattern.permute.xlu0 4
        %1796 = vperm.xlu0 %1795, %v222
        %v1797 = vpop.permute.xlu0 %1796
        %1798 = vset.pattern.permute.xlu0 4
        %1799 = vperm.xlu0 %1798, %v223
        %v1800 = vpop.permute.xlu0 %1799
        %1801 = vset.pattern.permute.xlu0 4
        %1802 = vperm.xlu0 %1801, %v224
        %v1803 = vpop.permute.xlu0 %1802
        %1804 = vset.pattern.permute.xlu0 4
        %1805 = vperm.xlu0 %1804, %v225
        %v1806 = vpop.permute.xlu0 %1805
        %1807 = vset.pattern.permute.xlu0 4
        %1808 = vperm.xlu0 %1807, %v226
        %v1809 = vpop.permute.xlu0 %1808
        %1810 = vset.pattern.permute.xlu0 4
        %1811 = vperm.xlu0 %1810, %v227
        %v1812 = vpop.permute.xlu0 %1811
        %1813 = vset.pattern.permute.xlu0 4
        %1814 = vperm.xlu0 %1813, %v228
        %v1815 = vpop.permute.xlu0 %1814
        %1816 = vset.pattern.permute.xlu0 4
        %1817 = vperm.xlu0 %1816, %v229
        %v1818 = vpop.permute.xlu0 %1817
        %1819 = vset.pattern.permute.xlu0 4
        %1820 = vperm.xlu0 %1819, %v230
        %v1821 = vpop.permute.xlu0 %1820
        %1822 = vset.pattern.permute.xlu0 4
        %1823 = vperm.xlu0 %1822, %v231
        %v1824 = vpop.permute.xlu0 %1823
        %1825 = vset.pattern.permute.xlu0 4
        %1826 = vperm.xlu0 %1825, %v232
        %v1827 = vpop.permute.xlu0 %1826
        %1828 = vset.pattern.permute.xlu0 4
        %1829 = vperm.xlu0 %1828, %v233
        %v1830 = vpop.permute.xlu0 %1829
        %1831 = vset.pattern.permute.xlu0 4
        %1832 = vperm.xlu0 %1831, %v234
        %v1833 = vpop.permute.xlu0 %1832
        %1834 = vset.pattern.permute.xlu0 4
        %1835 = vperm.xlu0 %1834, %v235
        %v1836 = vpop.permute.xlu0 %1835
        %1837 = vset.pattern.permute.xlu0 4
        %1838 = vperm.xlu0 %1837, %v236
        %v1839 = vpop.permute.xlu0 %1838
        %1840 = vset.pattern.permute.xlu0 4
        %1841 = vperm.xlu0 %1840, %v237
        %v1842 = vpop.permute.xlu0 %1841
        %1843 = vset.pattern.permute.xlu0 4
        %1844 = vperm.xlu0 %1843, %v238
        %v1845 = vpop.permute.xlu0 %1844
        %1846 = vset.pattern.permute.xlu0 4
        %1847 = vperm.xlu0 %1846, %v239
        %v1848 = vpop.permute.xlu0 %1847
        %1849 = vset.pattern.permute.xlu0 4
        %1850 = vperm.xlu0 %1849, %v240
        %v1851 = vpop.permute.xlu0 %1850
        %1852 = vset.pattern.permute.xlu0 4
        %1853 = vperm.xlu0 %1852, %v241
        %v1854 = vpop.permute.xlu0 %1853
        %1855 = vset.pattern.permute.xlu0 4
        %1856 = vperm.xlu0 %1855, %v242
        %v1857 = vpop.permute.xlu0 %1856
        %1858 = vset.pattern.permute.xlu0 4
        %1859 = vperm.xlu0 %1858, %v243
        %v1860 = vpop.permute.xlu0 %1859
        %1861 = vset.pattern.permute.xlu0 4
        %1862 = vperm.xlu0 %1861, %v244
        %v1863 = vpop.permute.xlu0 %1862
        %1864 = vset.pattern.permute.xlu0 4
        %1865 = vperm.xlu0 %1864, %v245
        %v1866 = vpop.permute.xlu0 %1865
        %1867 = vset.pattern.permute.xlu0 4
        %1868 = vperm.xlu0 %1867, %v246
        %v1869 = vpop.permute.xlu0 %1868
        %1870 = vset.pattern.permute.xlu0 4
        %1871 = vperm.xlu0 %1870, %v247
        %v1872 = vpop.permute.xlu0 %1871
        %1873 = vset.pattern.permute.xlu0 4
        %1874 = vperm.xlu0 %1873, %v248
        %v1875 = vpop.permute.xlu0 %1874
        %1876 = vset.pattern.permute.xlu0 4
        %1877 = vperm.xlu0 %1876, %v249
        %v1878 = vpop.permute.xlu0 %1877
        %1879 = vset.pattern.permute.xlu0 4
        %1880 = vperm.xlu0 %1879, %v250
        %v1881 = vpop.permute.xlu0 %1880
        %1882 = vset.pattern.permute.xlu0 4
        %1883 = vperm.xlu0 %1882, %v251
        %v1884 = vpop.permute.xlu0 %1883
        %1885 = vset.pattern.permute.xlu0 4
        %1886 = vperm.xlu0 %1885, %v252
        %v1887 = vpop.permute.xlu0 %1886
        %vm1888 = vcmp.eq.s32.totalorder %v1794, %v479
        %vm1889 = vcmp.eq.s32.totalorder %v1797, %v479
        %vm1890 = vcmp.eq.s32.totalorder %v1800, %v479
        %vm1891 = vcmp.eq.s32.totalorder %v1803, %v479
        %vm1892 = vcmp.eq.s32.totalorder %v1806, %v479
        %vm1893 = vcmp.eq.s32.totalorder %v1809, %v479
        %vm1894 = vcmp.eq.s32.totalorder %v1812, %v479
        %vm1895 = vcmp.eq.s32.totalorder %v1815, %v479
        %vm1896 = vcmp.eq.s32.totalorder %v1818, %v479
        %vm1897 = vcmp.eq.s32.totalorder %v1821, %v479
        %vm1898 = vcmp.eq.s32.totalorder %v1824, %v479
        %vm1899 = vcmp.eq.s32.totalorder %v1827, %v479
        %vm1900 = vcmp.eq.s32.totalorder %v1830, %v479
        %vm1901 = vcmp.eq.s32.totalorder %v1833, %v479
        %vm1902 = vcmp.eq.s32.totalorder %v1836, %v479
        %vm1903 = vcmp.eq.s32.totalorder %v1839, %v479
        %vm1904 = vcmp.eq.s32.totalorder %v1842, %v479
        %vm1905 = vcmp.eq.s32.totalorder %v1845, %v479
        %vm1906 = vcmp.eq.s32.totalorder %v1848, %v479
        %vm1907 = vcmp.eq.s32.totalorder %v1851, %v479
        %vm1908 = vcmp.eq.s32.totalorder %v1854, %v479
        %vm1909 = vcmp.eq.s32.totalorder %v1857, %v479
        %vm1910 = vcmp.eq.s32.totalorder %v1860, %v479
        %vm1911 = vcmp.eq.s32.totalorder %v1863, %v479
        %vm1912 = vcmp.eq.s32.totalorder %v1866, %v479
        %vm1913 = vcmp.eq.s32.totalorder %v1869, %v479
        %vm1914 = vcmp.eq.s32.totalorder %v1872, %v479
        %vm1915 = vcmp.eq.s32.totalorder %v1875, %v479
        %vm1916 = vcmp.eq.s32.totalorder %v1878, %v479
        %vm1917 = vcmp.eq.s32.totalorder %v1881, %v479
        %vm1918 = vcmp.eq.s32.totalorder %v1884, %v479
        %vm1919 = vcmp.eq.s32.totalorder %v1887, %v479
        %1920 = vset.pattern.permute.xlu0 4
        %1921 = vperm.xlu0 %1920, %v446
        %v1922 = vpop.permute.xlu0 %1921
        %1924 = vset.pattern.permute.xlu0 4
        %1925 = vperm.xlu0 %1924, %v447
        %v1926 = vpop.permute.xlu0 %1925
        %1928 = vset.pattern.permute.xlu0 4
        %1929 = vperm.xlu0 %1928, %v448
        %v1930 = vpop.permute.xlu0 %1929
        %1932 = vset.pattern.permute.xlu0 4
        %1933 = vperm.xlu0 %1932, %v449
        %v1934 = vpop.permute.xlu0 %1933
        %1936 = vset.pattern.permute.xlu0 4
        %1937 = vperm.xlu0 %1936, %v450
        %v1938 = vpop.permute.xlu0 %1937
        %1940 = vset.pattern.permute.xlu0 4
        %1941 = vperm.xlu0 %1940, %v451
        %v1942 = vpop.permute.xlu0 %1941
        %1944 = vset.pattern.permute.xlu0 4
        %1945 = vperm.xlu0 %1944, %v452
        %v1946 = vpop.permute.xlu0 %1945
        %1948 = vset.pattern.permute.xlu0 4
        %1949 = vperm.xlu0 %1948, %v453
        %v1950 = vpop.permute.xlu0 %1949
        %1952 = vset.pattern.permute.xlu0 4
        %1953 = vperm.xlu0 %1952, %v454
        %v1954 = vpop.permute.xlu0 %1953
        %1956 = vset.pattern.permute.xlu0 4
        %1957 = vperm.xlu0 %1956, %v455
        %v1958 = vpop.permute.xlu0 %1957
        %1960 = vset.pattern.permute.xlu0 4
        %1961 = vperm.xlu0 %1960, %v456
        %v1962 = vpop.permute.xlu0 %1961
        %1964 = vset.pattern.permute.xlu0 4
        %1965 = vperm.xlu0 %1964, %v457
        %v1966 = vpop.permute.xlu0 %1965
        %1968 = vset.pattern.permute.xlu0 4
        %1969 = vperm.xlu0 %1968, %v458
        %v1970 = vpop.permute.xlu0 %1969
        %1972 = vset.pattern.permute.xlu0 4
        %1973 = vperm.xlu0 %1972, %v459
        %v1974 = vpop.permute.xlu0 %1973
        %1976 = vset.pattern.permute.xlu0 4
        %1977 = vperm.xlu0 %1976, %v460
        %v1978 = vpop.permute.xlu0 %1977
        %1980 = vset.pattern.permute.xlu0 4
        %1981 = vperm.xlu0 %1980, %v461
        %v1982 = vpop.permute.xlu0 %1981
        %1984 = vset.pattern.permute.xlu0 4
        %1985 = vperm.xlu0 %1984, %v462
        %v1986 = vpop.permute.xlu0 %1985
        %1988 = vset.pattern.permute.xlu0 4
        %1989 = vperm.xlu0 %1988, %v463
        %v1990 = vpop.permute.xlu0 %1989
        %1992 = vset.pattern.permute.xlu0 4
        %1993 = vperm.xlu0 %1992, %v464
        %v1994 = vpop.permute.xlu0 %1993
        %1996 = vset.pattern.permute.xlu0 4
        %1997 = vperm.xlu0 %1996, %v465
        %v1998 = vpop.permute.xlu0 %1997
        %2000 = vset.pattern.permute.xlu0 4
        %2001 = vperm.xlu0 %2000, %v466
        %v2002 = vpop.permute.xlu0 %2001
        %2004 = vset.pattern.permute.xlu0 4
        %2005 = vperm.xlu0 %2004, %v467
        %v2006 = vpop.permute.xlu0 %2005
        %2008 = vset.pattern.permute.xlu0 4
        %2009 = vperm.xlu0 %2008, %v468
        %v2010 = vpop.permute.xlu0 %2009
        %2012 = vset.pattern.permute.xlu0 4
        %2013 = vperm.xlu0 %2012, %v469
        %v2014 = vpop.permute.xlu0 %2013
        %2016 = vset.pattern.permute.xlu0 4
        %2017 = vperm.xlu0 %2016, %v470
        %v2018 = vpop.permute.xlu0 %2017
        %2020 = vset.pattern.permute.xlu0 4
        %2021 = vperm.xlu0 %2020, %v471
        %v2022 = vpop.permute.xlu0 %2021
        %2024 = vset.pattern.permute.xlu0 4
        %2025 = vperm.xlu0 %2024, %v472
        %v2026 = vpop.permute.xlu0 %2025
        %2028 = vset.pattern.permute.xlu0 4
        %2029 = vperm.xlu0 %2028, %v473
        %v2030 = vpop.permute.xlu0 %2029
        %2032 = vset.pattern.permute.xlu0 4
        %2033 = vperm.xlu0 %2032, %v474
        %v2034 = vpop.permute.xlu0 %2033
        %2036 = vset.pattern.permute.xlu0 4
        %2037 = vperm.xlu0 %2036, %v475
        %v2038 = vpop.permute.xlu0 %2037
        %2040 = vset.pattern.permute.xlu0 4
        %2041 = vperm.xlu0 %2040, %v476
        %v2042 = vpop.permute.xlu0 %2041
        %2044 = vset.pattern.permute.xlu0 4
        %2045 = vperm.xlu0 %2044, %v477
        %v2046 = vpop.permute.xlu0 %2045
        %v2048 = vsel %vm1888, %v1922, 0.0
        %v2049 = vsel %vm1889, %v1926, 0.0
        %v2050 = vsel %vm1890, %v1930, 0.0
        %v2051 = vsel %vm1891, %v1934, 0.0
        %v2052 = vsel %vm1892, %v1938, 0.0
        %v2053 = vsel %vm1893, %v1942, 0.0
        %v2054 = vsel %vm1894, %v1946, 0.0
        %v2055 = vsel %vm1895, %v1950, 0.0
        %v2056 = vsel %vm1896, %v1954, 0.0
        %v2057 = vsel %vm1897, %v1958, 0.0
        %v2058 = vsel %vm1898, %v1962, 0.0
        %v2059 = vsel %vm1899, %v1966, 0.0
        %v2060 = vsel %vm1900, %v1970, 0.0
        %v2061 = vsel %vm1901, %v1974, 0.0
        %v2062 = vsel %vm1902, %v1978, 0.0
        %v2063 = vsel %vm1903, %v1982, 0.0
        %v2064 = vsel %vm1904, %v1986, 0.0
        %v2065 = vsel %vm1905, %v1990, 0.0
        %v2066 = vsel %vm1906, %v1994, 0.0
        %v2067 = vsel %vm1907, %v1998, 0.0
        %v2068 = vsel %vm1908, %v2002, 0.0
        %v2069 = vsel %vm1909, %v2006, 0.0
        %v2070 = vsel %vm1910, %v2010, 0.0
        %v2071 = vsel %vm1911, %v2014, 0.0
        %v2072 = vsel %vm1912, %v2018, 0.0
        %v2073 = vsel %vm1913, %v2022, 0.0
        %v2074 = vsel %vm1914, %v2026, 0.0
        %v2075 = vsel %vm1915, %v2030, 0.0
        %v2076 = vsel %vm1916, %v2034, 0.0
        %v2077 = vsel %vm1917, %v2038, 0.0
        %v2078 = vsel %vm1918, %v2042, 0.0
        %v2079 = vsel %vm1919, %v2046, 0.0
        %v2080 = vadd.f32 %v1760, %v2048
        %v2081 = vadd.f32 %v1761, %v2049
        %v2082 = vadd.f32 %v1762, %v2050
        %v2083 = vadd.f32 %v1763, %v2051
        %v2084 = vadd.f32 %v1764, %v2052
        %v2085 = vadd.f32 %v1765, %v2053
        %v2086 = vadd.f32 %v1766, %v2054
        %v2087 = vadd.f32 %v1767, %v2055
        %v2088 = vadd.f32 %v1768, %v2056
        %v2089 = vadd.f32 %v1769, %v2057
        %v2090 = vadd.f32 %v1770, %v2058
        %v2091 = vadd.f32 %v1771, %v2059
        %v2092 = vadd.f32 %v1772, %v2060
        %v2093 = vadd.f32 %v1773, %v2061
        %v2094 = vadd.f32 %v1774, %v2062
        %v2095 = vadd.f32 %v1775, %v2063
        %v2096 = vadd.f32 %v1776, %v2064
        %v2097 = vadd.f32 %v1777, %v2065
        %v2098 = vadd.f32 %v1778, %v2066
        %v2099 = vadd.f32 %v1779, %v2067
        %v2100 = vadd.f32 %v1780, %v2068
        %v2101 = vadd.f32 %v1781, %v2069
        %v2102 = vadd.f32 %v1782, %v2070
        %v2103 = vadd.f32 %v1783, %v2071
        %v2104 = vadd.f32 %v1784, %v2072
        %v2105 = vadd.f32 %v1785, %v2073
        %v2106 = vadd.f32 %v1786, %v2074
        %v2107 = vadd.f32 %v1787, %v2075
        %v2108 = vadd.f32 %v1788, %v2076
        %v2109 = vadd.f32 %v1789, %v2077
        %v2110 = vadd.f32 %v1790, %v2078
        %v2111 = vadd.f32 %v1791, %v2079
        %2112 = vset.pattern.permute.xlu0 5
        %2113 = vperm.xlu0 %2112, %v221
        %v2114 = vpop.permute.xlu0 %2113
        %2115 = vset.pattern.permute.xlu0 5
        %2116 = vperm.xlu0 %2115, %v222
        %v2117 = vpop.permute.xlu0 %2116
        %2118 = vset.pattern.permute.xlu0 5
        %2119 = vperm.xlu0 %2118, %v223
        %v2120 = vpop.permute.xlu0 %2119
        %2121 = vset.pattern.permute.xlu0 5
        %2122 = vperm.xlu0 %2121, %v224
        %v2123 = vpop.permute.xlu0 %2122
        %2124 = vset.pattern.permute.xlu0 5
        %2125 = vperm.xlu0 %2124, %v225
        %v2126 = vpop.permute.xlu0 %2125
        %2127 = vset.pattern.permute.xlu0 5
        %2128 = vperm.xlu0 %2127, %v226
        %v2129 = vpop.permute.xlu0 %2128
        %2130 = vset.pattern.permute.xlu0 5
        %2131 = vperm.xlu0 %2130, %v227
        %v2132 = vpop.permute.xlu0 %2131
        %2133 = vset.pattern.permute.xlu0 5
        %2134 = vperm.xlu0 %2133, %v228
        %v2135 = vpop.permute.xlu0 %2134
        %2136 = vset.pattern.permute.xlu0 5
        %2137 = vperm.xlu0 %2136, %v229
        %v2138 = vpop.permute.xlu0 %2137
        %2139 = vset.pattern.permute.xlu0 5
        %2140 = vperm.xlu0 %2139, %v230
        %v2141 = vpop.permute.xlu0 %2140
        %2142 = vset.pattern.permute.xlu0 5
        %2143 = vperm.xlu0 %2142, %v231
        %v2144 = vpop.permute.xlu0 %2143
        %2145 = vset.pattern.permute.xlu0 5
        %2146 = vperm.xlu0 %2145, %v232
        %v2147 = vpop.permute.xlu0 %2146
        %2148 = vset.pattern.permute.xlu0 5
        %2149 = vperm.xlu0 %2148, %v233
        %v2150 = vpop.permute.xlu0 %2149
        %2151 = vset.pattern.permute.xlu0 5
        %2152 = vperm.xlu0 %2151, %v234
        %v2153 = vpop.permute.xlu0 %2152
        %2154 = vset.pattern.permute.xlu0 5
        %2155 = vperm.xlu0 %2154, %v235
        %v2156 = vpop.permute.xlu0 %2155
        %2157 = vset.pattern.permute.xlu0 5
        %2158 = vperm.xlu0 %2157, %v236
        %v2159 = vpop.permute.xlu0 %2158
        %2160 = vset.pattern.permute.xlu0 5
        %2161 = vperm.xlu0 %2160, %v237
        %v2162 = vpop.permute.xlu0 %2161
        %2163 = vset.pattern.permute.xlu0 5
        %2164 = vperm.xlu0 %2163, %v238
        %v2165 = vpop.permute.xlu0 %2164
        %2166 = vset.pattern.permute.xlu0 5
        %2167 = vperm.xlu0 %2166, %v239
        %v2168 = vpop.permute.xlu0 %2167
        %2169 = vset.pattern.permute.xlu0 5
        %2170 = vperm.xlu0 %2169, %v240
        %v2171 = vpop.permute.xlu0 %2170
        %2172 = vset.pattern.permute.xlu0 5
        %2173 = vperm.xlu0 %2172, %v241
        %v2174 = vpop.permute.xlu0 %2173
        %2175 = vset.pattern.permute.xlu0 5
        %2176 = vperm.xlu0 %2175, %v242
        %v2177 = vpop.permute.xlu0 %2176
        %2178 = vset.pattern.permute.xlu0 5
        %2179 = vperm.xlu0 %2178, %v243
        %v2180 = vpop.permute.xlu0 %2179
        %2181 = vset.pattern.permute.xlu0 5
        %2182 = vperm.xlu0 %2181, %v244
        %v2183 = vpop.permute.xlu0 %2182
        %2184 = vset.pattern.permute.xlu0 5
        %2185 = vperm.xlu0 %2184, %v245
        %v2186 = vpop.permute.xlu0 %2185
        %2187 = vset.pattern.permute.xlu0 5
        %2188 = vperm.xlu0 %2187, %v246
        %v2189 = vpop.permute.xlu0 %2188
        %2190 = vset.pattern.permute.xlu0 5
        %2191 = vperm.xlu0 %2190, %v247
        %v2192 = vpop.permute.xlu0 %2191
        %2193 = vset.pattern.permute.xlu0 5
        %2194 = vperm.xlu0 %2193, %v248
        %v2195 = vpop.permute.xlu0 %2194
        %2196 = vset.pattern.permute.xlu0 5
        %2197 = vperm.xlu0 %2196, %v249
        %v2198 = vpop.permute.xlu0 %2197
        %2199 = vset.pattern.permute.xlu0 5
        %2200 = vperm.xlu0 %2199, %v250
        %v2201 = vpop.permute.xlu0 %2200
        %2202 = vset.pattern.permute.xlu0 5
        %2203 = vperm.xlu0 %2202, %v251
        %v2204 = vpop.permute.xlu0 %2203
        %2205 = vset.pattern.permute.xlu0 5
        %2206 = vperm.xlu0 %2205, %v252
        %v2207 = vpop.permute.xlu0 %2206
        %vm2208 = vcmp.eq.s32.totalorder %v2114, %v479
        %vm2209 = vcmp.eq.s32.totalorder %v2117, %v479
        %vm2210 = vcmp.eq.s32.totalorder %v2120, %v479
        %vm2211 = vcmp.eq.s32.totalorder %v2123, %v479
        %vm2212 = vcmp.eq.s32.totalorder %v2126, %v479
        %vm2213 = vcmp.eq.s32.totalorder %v2129, %v479
        %vm2214 = vcmp.eq.s32.totalorder %v2132, %v479
        %vm2215 = vcmp.eq.s32.totalorder %v2135, %v479
        %vm2216 = vcmp.eq.s32.totalorder %v2138, %v479
        %vm2217 = vcmp.eq.s32.totalorder %v2141, %v479
        %vm2218 = vcmp.eq.s32.totalorder %v2144, %v479
        %vm2219 = vcmp.eq.s32.totalorder %v2147, %v479
        %vm2220 = vcmp.eq.s32.totalorder %v2150, %v479
        %vm2221 = vcmp.eq.s32.totalorder %v2153, %v479
        %vm2222 = vcmp.eq.s32.totalorder %v2156, %v479
        %vm2223 = vcmp.eq.s32.totalorder %v2159, %v479
        %vm2224 = vcmp.eq.s32.totalorder %v2162, %v479
        %vm2225 = vcmp.eq.s32.totalorder %v2165, %v479
        %vm2226 = vcmp.eq.s32.totalorder %v2168, %v479
        %vm2227 = vcmp.eq.s32.totalorder %v2171, %v479
        %vm2228 = vcmp.eq.s32.totalorder %v2174, %v479
        %vm2229 = vcmp.eq.s32.totalorder %v2177, %v479
        %vm2230 = vcmp.eq.s32.totalorder %v2180, %v479
        %vm2231 = vcmp.eq.s32.totalorder %v2183, %v479
        %vm2232 = vcmp.eq.s32.totalorder %v2186, %v479
        %vm2233 = vcmp.eq.s32.totalorder %v2189, %v479
        %vm2234 = vcmp.eq.s32.totalorder %v2192, %v479
        %vm2235 = vcmp.eq.s32.totalorder %v2195, %v479
        %vm2236 = vcmp.eq.s32.totalorder %v2198, %v479
        %vm2237 = vcmp.eq.s32.totalorder %v2201, %v479
        %vm2238 = vcmp.eq.s32.totalorder %v2204, %v479
        %vm2239 = vcmp.eq.s32.totalorder %v2207, %v479
        %2240 = vset.pattern.permute.xlu0 5
        %2241 = vperm.xlu0 %2240, %v446
        %v2242 = vpop.permute.xlu0 %2241
        %2244 = vset.pattern.permute.xlu0 5
        %2245 = vperm.xlu0 %2244, %v447
        %v2246 = vpop.permute.xlu0 %2245
        %2248 = vset.pattern.permute.xlu0 5
        %2249 = vperm.xlu0 %2248, %v448
        %v2250 = vpop.permute.xlu0 %2249
        %2252 = vset.pattern.permute.xlu0 5
        %2253 = vperm.xlu0 %2252, %v449
        %v2254 = vpop.permute.xlu0 %2253
        %2256 = vset.pattern.permute.xlu0 5
        %2257 = vperm.xlu0 %2256, %v450
        %v2258 = vpop.permute.xlu0 %2257
        %2260 = vset.pattern.permute.xlu0 5
        %2261 = vperm.xlu0 %2260, %v451
        %v2262 = vpop.permute.xlu0 %2261
        %2264 = vset.pattern.permute.xlu0 5
        %2265 = vperm.xlu0 %2264, %v452
        %v2266 = vpop.permute.xlu0 %2265
        %2268 = vset.pattern.permute.xlu0 5
        %2269 = vperm.xlu0 %2268, %v453
        %v2270 = vpop.permute.xlu0 %2269
        %2272 = vset.pattern.permute.xlu0 5
        %2273 = vperm.xlu0 %2272, %v454
        %v2274 = vpop.permute.xlu0 %2273
        %2276 = vset.pattern.permute.xlu0 5
        %2277 = vperm.xlu0 %2276, %v455
        %v2278 = vpop.permute.xlu0 %2277
        %2280 = vset.pattern.permute.xlu0 5
        %2281 = vperm.xlu0 %2280, %v456
        %v2282 = vpop.permute.xlu0 %2281
        %2284 = vset.pattern.permute.xlu0 5
        %2285 = vperm.xlu0 %2284, %v457
        %v2286 = vpop.permute.xlu0 %2285
        %2288 = vset.pattern.permute.xlu0 5
        %2289 = vperm.xlu0 %2288, %v458
        %v2290 = vpop.permute.xlu0 %2289
        %2292 = vset.pattern.permute.xlu0 5
        %2293 = vperm.xlu0 %2292, %v459
        %v2294 = vpop.permute.xlu0 %2293
        %2296 = vset.pattern.permute.xlu0 5
        %2297 = vperm.xlu0 %2296, %v460
        %v2298 = vpop.permute.xlu0 %2297
        %2300 = vset.pattern.permute.xlu0 5
        %2301 = vperm.xlu0 %2300, %v461
        %v2302 = vpop.permute.xlu0 %2301
        %2304 = vset.pattern.permute.xlu0 5
        %2305 = vperm.xlu0 %2304, %v462
        %v2306 = vpop.permute.xlu0 %2305
        %2308 = vset.pattern.permute.xlu0 5
        %2309 = vperm.xlu0 %2308, %v463
        %v2310 = vpop.permute.xlu0 %2309
        %2312 = vset.pattern.permute.xlu0 5
        %2313 = vperm.xlu0 %2312, %v464
        %v2314 = vpop.permute.xlu0 %2313
        %2316 = vset.pattern.permute.xlu0 5
        %2317 = vperm.xlu0 %2316, %v465
        %v2318 = vpop.permute.xlu0 %2317
        %2320 = vset.pattern.permute.xlu0 5
        %2321 = vperm.xlu0 %2320, %v466
        %v2322 = vpop.permute.xlu0 %2321
        %2324 = vset.pattern.permute.xlu0 5
        %2325 = vperm.xlu0 %2324, %v467
        %v2326 = vpop.permute.xlu0 %2325
        %2328 = vset.pattern.permute.xlu0 5
        %2329 = vperm.xlu0 %2328, %v468
        %v2330 = vpop.permute.xlu0 %2329
        %2332 = vset.pattern.permute.xlu0 5
        %2333 = vperm.xlu0 %2332, %v469
        %v2334 = vpop.permute.xlu0 %2333
        %2336 = vset.pattern.permute.xlu0 5
        %2337 = vperm.xlu0 %2336, %v470
        %v2338 = vpop.permute.xlu0 %2337
        %2340 = vset.pattern.permute.xlu0 5
        %2341 = vperm.xlu0 %2340, %v471
        %v2342 = vpop.permute.xlu0 %2341
        %2344 = vset.pattern.permute.xlu0 5
        %2345 = vperm.xlu0 %2344, %v472
        %v2346 = vpop.permute.xlu0 %2345
        %2348 = vset.pattern.permute.xlu0 5
        %2349 = vperm.xlu0 %2348, %v473
        %v2350 = vpop.permute.xlu0 %2349
        %2352 = vset.pattern.permute.xlu0 5
        %2353 = vperm.xlu0 %2352, %v474
        %v2354 = vpop.permute.xlu0 %2353
        %2356 = vset.pattern.permute.xlu0 5
        %2357 = vperm.xlu0 %2356, %v475
        %v2358 = vpop.permute.xlu0 %2357
        %2360 = vset.pattern.permute.xlu0 5
        %2361 = vperm.xlu0 %2360, %v476
        %v2362 = vpop.permute.xlu0 %2361
        %2364 = vset.pattern.permute.xlu0 5
        %2365 = vperm.xlu0 %2364, %v477
        %v2366 = vpop.permute.xlu0 %2365
        %v2368 = vsel %vm2208, %v2242, 0.0
        %v2369 = vsel %vm2209, %v2246, 0.0
        %v2370 = vsel %vm2210, %v2250, 0.0
        %v2371 = vsel %vm2211, %v2254, 0.0
        %v2372 = vsel %vm2212, %v2258, 0.0
        %v2373 = vsel %vm2213, %v2262, 0.0
        %v2374 = vsel %vm2214, %v2266, 0.0
        %v2375 = vsel %vm2215, %v2270, 0.0
        %v2376 = vsel %vm2216, %v2274, 0.0
        %v2377 = vsel %vm2217, %v2278, 0.0
        %v2378 = vsel %vm2218, %v2282, 0.0
        %v2379 = vsel %vm2219, %v2286, 0.0
        %v2380 = vsel %vm2220, %v2290, 0.0
        %v2381 = vsel %vm2221, %v2294, 0.0
        %v2382 = vsel %vm2222, %v2298, 0.0
        %v2383 = vsel %vm2223, %v2302, 0.0
        %v2384 = vsel %vm2224, %v2306, 0.0
        %v2385 = vsel %vm2225, %v2310, 0.0
        %v2386 = vsel %vm2226, %v2314, 0.0
        %v2387 = vsel %vm2227, %v2318, 0.0
        %v2388 = vsel %vm2228, %v2322, 0.0
        %v2389 = vsel %vm2229, %v2326, 0.0
        %v2390 = vsel %vm2230, %v2330, 0.0
        %v2391 = vsel %vm2231, %v2334, 0.0
        %v2392 = vsel %vm2232, %v2338, 0.0
        %v2393 = vsel %vm2233, %v2342, 0.0
        %v2394 = vsel %vm2234, %v2346, 0.0
        %v2395 = vsel %vm2235, %v2350, 0.0
        %v2396 = vsel %vm2236, %v2354, 0.0
        %v2397 = vsel %vm2237, %v2358, 0.0
        %v2398 = vsel %vm2238, %v2362, 0.0
        %v2399 = vsel %vm2239, %v2366, 0.0
        %v2400 = vadd.f32 %v2080, %v2368
        %v2401 = vadd.f32 %v2081, %v2369
        %v2402 = vadd.f32 %v2082, %v2370
        %v2403 = vadd.f32 %v2083, %v2371
        %v2404 = vadd.f32 %v2084, %v2372
        %v2405 = vadd.f32 %v2085, %v2373
        %v2406 = vadd.f32 %v2086, %v2374
        %v2407 = vadd.f32 %v2087, %v2375
        %v2408 = vadd.f32 %v2088, %v2376
        %v2409 = vadd.f32 %v2089, %v2377
        %v2410 = vadd.f32 %v2090, %v2378
        %v2411 = vadd.f32 %v2091, %v2379
        %v2412 = vadd.f32 %v2092, %v2380
        %v2413 = vadd.f32 %v2093, %v2381
        %v2414 = vadd.f32 %v2094, %v2382
        %v2415 = vadd.f32 %v2095, %v2383
        %v2416 = vadd.f32 %v2096, %v2384
        %v2417 = vadd.f32 %v2097, %v2385
        %v2418 = vadd.f32 %v2098, %v2386
        %v2419 = vadd.f32 %v2099, %v2387
        %v2420 = vadd.f32 %v2100, %v2388
        %v2421 = vadd.f32 %v2101, %v2389
        %v2422 = vadd.f32 %v2102, %v2390
        %v2423 = vadd.f32 %v2103, %v2391
        %v2424 = vadd.f32 %v2104, %v2392
        %v2425 = vadd.f32 %v2105, %v2393
        %v2426 = vadd.f32 %v2106, %v2394
        %v2427 = vadd.f32 %v2107, %v2395
        %v2428 = vadd.f32 %v2108, %v2396
        %v2429 = vadd.f32 %v2109, %v2397
        %v2430 = vadd.f32 %v2110, %v2398
        %v2431 = vadd.f32 %v2111, %v2399
        %2432 = vset.pattern.permute.xlu0 6
        %2433 = vperm.xlu0 %2432, %v221
        %v2434 = vpop.permute.xlu0 %2433
        %2435 = vset.pattern.permute.xlu0 6
        %2436 = vperm.xlu0 %2435, %v222
        %v2437 = vpop.permute.xlu0 %2436
        %2438 = vset.pattern.permute.xlu0 6
        %2439 = vperm.xlu0 %2438, %v223
        %v2440 = vpop.permute.xlu0 %2439
        %2441 = vset.pattern.permute.xlu0 6
        %2442 = vperm.xlu0 %2441, %v224
        %v2443 = vpop.permute.xlu0 %2442
        %2444 = vset.pattern.permute.xlu0 6
        %2445 = vperm.xlu0 %2444, %v225
        %v2446 = vpop.permute.xlu0 %2445
        %2447 = vset.pattern.permute.xlu0 6
        %2448 = vperm.xlu0 %2447, %v226
        %v2449 = vpop.permute.xlu0 %2448
        %2450 = vset.pattern.permute.xlu0 6
        %2451 = vperm.xlu0 %2450, %v227
        %v2452 = vpop.permute.xlu0 %2451
        %2453 = vset.pattern.permute.xlu0 6
        %2454 = vperm.xlu0 %2453, %v228
        %v2455 = vpop.permute.xlu0 %2454
        %2456 = vset.pattern.permute.xlu0 6
        %2457 = vperm.xlu0 %2456, %v229
        %v2458 = vpop.permute.xlu0 %2457
        %2459 = vset.pattern.permute.xlu0 6
        %2460 = vperm.xlu0 %2459, %v230
        %v2461 = vpop.permute.xlu0 %2460
        %2462 = vset.pattern.permute.xlu0 6
        %2463 = vperm.xlu0 %2462, %v231
        %v2464 = vpop.permute.xlu0 %2463
        %2465 = vset.pattern.permute.xlu0 6
        %2466 = vperm.xlu0 %2465, %v232
        %v2467 = vpop.permute.xlu0 %2466
        %2468 = vset.pattern.permute.xlu0 6
        %2469 = vperm.xlu0 %2468, %v233
        %v2470 = vpop.permute.xlu0 %2469
        %2471 = vset.pattern.permute.xlu0 6
        %2472 = vperm.xlu0 %2471, %v234
        %v2473 = vpop.permute.xlu0 %2472
        %2474 = vset.pattern.permute.xlu0 6
        %2475 = vperm.xlu0 %2474, %v235
        %v2476 = vpop.permute.xlu0 %2475
        %2477 = vset.pattern.permute.xlu0 6
        %2478 = vperm.xlu0 %2477, %v236
        %v2479 = vpop.permute.xlu0 %2478
        %2480 = vset.pattern.permute.xlu0 6
        %2481 = vperm.xlu0 %2480, %v237
        %v2482 = vpop.permute.xlu0 %2481
        %2483 = vset.pattern.permute.xlu0 6
        %2484 = vperm.xlu0 %2483, %v238
        %v2485 = vpop.permute.xlu0 %2484
        %2486 = vset.pattern.permute.xlu0 6
        %2487 = vperm.xlu0 %2486, %v239
        %v2488 = vpop.permute.xlu0 %2487
        %2489 = vset.pattern.permute.xlu0 6
        %2490 = vperm.xlu0 %2489, %v240
        %v2491 = vpop.permute.xlu0 %2490
        %2492 = vset.pattern.permute.xlu0 6
        %2493 = vperm.xlu0 %2492, %v241
        %v2494 = vpop.permute.xlu0 %2493
        %2495 = vset.pattern.permute.xlu0 6
        %2496 = vperm.xlu0 %2495, %v242
        %v2497 = vpop.permute.xlu0 %2496
        %2498 = vset.pattern.permute.xlu0 6
        %2499 = vperm.xlu0 %2498, %v243
        %v2500 = vpop.permute.xlu0 %2499
        %2501 = vset.pattern.permute.xlu0 6
        %2502 = vperm.xlu0 %2501, %v244
        %v2503 = vpop.permute.xlu0 %2502
        %2504 = vset.pattern.permute.xlu0 6
        %2505 = vperm.xlu0 %2504, %v245
        %v2506 = vpop.permute.xlu0 %2505
        %2507 = vset.pattern.permute.xlu0 6
        %2508 = vperm.xlu0 %2507, %v246
        %v2509 = vpop.permute.xlu0 %2508
        %2510 = vset.pattern.permute.xlu0 6
        %2511 = vperm.xlu0 %2510, %v247
        %v2512 = vpop.permute.xlu0 %2511
        %2513 = vset.pattern.permute.xlu0 6
        %2514 = vperm.xlu0 %2513, %v248
        %v2515 = vpop.permute.xlu0 %2514
        %2516 = vset.pattern.permute.xlu0 6
        %2517 = vperm.xlu0 %2516, %v249
        %v2518 = vpop.permute.xlu0 %2517
        %2519 = vset.pattern.permute.xlu0 6
        %2520 = vperm.xlu0 %2519, %v250
        %v2521 = vpop.permute.xlu0 %2520
        %2522 = vset.pattern.permute.xlu0 6
        %2523 = vperm.xlu0 %2522, %v251
        %v2524 = vpop.permute.xlu0 %2523
        %2525 = vset.pattern.permute.xlu0 6
        %2526 = vperm.xlu0 %2525, %v252
        %v2527 = vpop.permute.xlu0 %2526
        %vm2528 = vcmp.eq.s32.totalorder %v2434, %v479
        %vm2529 = vcmp.eq.s32.totalorder %v2437, %v479
        %vm2530 = vcmp.eq.s32.totalorder %v2440, %v479
        %vm2531 = vcmp.eq.s32.totalorder %v2443, %v479
        %vm2532 = vcmp.eq.s32.totalorder %v2446, %v479
        %vm2533 = vcmp.eq.s32.totalorder %v2449, %v479
        %vm2534 = vcmp.eq.s32.totalorder %v2452, %v479
        %vm2535 = vcmp.eq.s32.totalorder %v2455, %v479
        %vm2536 = vcmp.eq.s32.totalorder %v2458, %v479
        %vm2537 = vcmp.eq.s32.totalorder %v2461, %v479
        %vm2538 = vcmp.eq.s32.totalorder %v2464, %v479
        %vm2539 = vcmp.eq.s32.totalorder %v2467, %v479
        %vm2540 = vcmp.eq.s32.totalorder %v2470, %v479
        %vm2541 = vcmp.eq.s32.totalorder %v2473, %v479
        %vm2542 = vcmp.eq.s32.totalorder %v2476, %v479
        %vm2543 = vcmp.eq.s32.totalorder %v2479, %v479
        %vm2544 = vcmp.eq.s32.totalorder %v2482, %v479
        %vm2545 = vcmp.eq.s32.totalorder %v2485, %v479
        %vm2546 = vcmp.eq.s32.totalorder %v2488, %v479
        %vm2547 = vcmp.eq.s32.totalorder %v2491, %v479
        %vm2548 = vcmp.eq.s32.totalorder %v2494, %v479
        %vm2549 = vcmp.eq.s32.totalorder %v2497, %v479
        %vm2550 = vcmp.eq.s32.totalorder %v2500, %v479
        %vm2551 = vcmp.eq.s32.totalorder %v2503, %v479
        %vm2552 = vcmp.eq.s32.totalorder %v2506, %v479
        %vm2553 = vcmp.eq.s32.totalorder %v2509, %v479
        %vm2554 = vcmp.eq.s32.totalorder %v2512, %v479
        %vm2555 = vcmp.eq.s32.totalorder %v2515, %v479
        %vm2556 = vcmp.eq.s32.totalorder %v2518, %v479
        %vm2557 = vcmp.eq.s32.totalorder %v2521, %v479
        %vm2558 = vcmp.eq.s32.totalorder %v2524, %v479
        %vm2559 = vcmp.eq.s32.totalorder %v2527, %v479
        %2560 = vset.pattern.permute.xlu0 6
        %2561 = vperm.xlu0 %2560, %v446
        %v2562 = vpop.permute.xlu0 %2561
        %2564 = vset.pattern.permute.xlu0 6
        %2565 = vperm.xlu0 %2564, %v447
        %v2566 = vpop.permute.xlu0 %2565
        %2568 = vset.pattern.permute.xlu0 6
        %2569 = vperm.xlu0 %2568, %v448
        %v2570 = vpop.permute.xlu0 %2569
        %2572 = vset.pattern.permute.xlu0 6
        %2573 = vperm.xlu0 %2572, %v449
        %v2574 = vpop.permute.xlu0 %2573
        %2576 = vset.pattern.permute.xlu0 6
        %2577 = vperm.xlu0 %2576, %v450
        %v2578 = vpop.permute.xlu0 %2577
        %2580 = vset.pattern.permute.xlu0 6
        %2581 = vperm.xlu0 %2580, %v451
        %v2582 = vpop.permute.xlu0 %2581
        %2584 = vset.pattern.permute.xlu0 6
        %2585 = vperm.xlu0 %2584, %v452
        %v2586 = vpop.permute.xlu0 %2585
        %2588 = vset.pattern.permute.xlu0 6
        %2589 = vperm.xlu0 %2588, %v453
        %v2590 = vpop.permute.xlu0 %2589
        %2592 = vset.pattern.permute.xlu0 6
        %2593 = vperm.xlu0 %2592, %v454
        %v2594 = vpop.permute.xlu0 %2593
        %2596 = vset.pattern.permute.xlu0 6
        %2597 = vperm.xlu0 %2596, %v455
        %v2598 = vpop.permute.xlu0 %2597
        %2600 = vset.pattern.permute.xlu0 6
        %2601 = vperm.xlu0 %2600, %v456
        %v2602 = vpop.permute.xlu0 %2601
        %2604 = vset.pattern.permute.xlu0 6
        %2605 = vperm.xlu0 %2604, %v457
        %v2606 = vpop.permute.xlu0 %2605
        %2608 = vset.pattern.permute.xlu0 6
        %2609 = vperm.xlu0 %2608, %v458
        %v2610 = vpop.permute.xlu0 %2609
        %2612 = vset.pattern.permute.xlu0 6
        %2613 = vperm.xlu0 %2612, %v459
        %v2614 = vpop.permute.xlu0 %2613
        %2616 = vset.pattern.permute.xlu0 6
        %2617 = vperm.xlu0 %2616, %v460
        %v2618 = vpop.permute.xlu0 %2617
        %2620 = vset.pattern.permute.xlu0 6
        %2621 = vperm.xlu0 %2620, %v461
        %v2622 = vpop.permute.xlu0 %2621
        %2624 = vset.pattern.permute.xlu0 6
        %2625 = vperm.xlu0 %2624, %v462
        %v2626 = vpop.permute.xlu0 %2625
        %2628 = vset.pattern.permute.xlu0 6
        %2629 = vperm.xlu0 %2628, %v463
        %v2630 = vpop.permute.xlu0 %2629
        %2632 = vset.pattern.permute.xlu0 6
        %2633 = vperm.xlu0 %2632, %v464
        %v2634 = vpop.permute.xlu0 %2633
        %2636 = vset.pattern.permute.xlu0 6
        %2637 = vperm.xlu0 %2636, %v465
        %v2638 = vpop.permute.xlu0 %2637
        %2640 = vset.pattern.permute.xlu0 6
        %2641 = vperm.xlu0 %2640, %v466
        %v2642 = vpop.permute.xlu0 %2641
        %2644 = vset.pattern.permute.xlu0 6
        %2645 = vperm.xlu0 %2644, %v467
        %v2646 = vpop.permute.xlu0 %2645
        %2648 = vset.pattern.permute.xlu0 6
        %2649 = vperm.xlu0 %2648, %v468
        %v2650 = vpop.permute.xlu0 %2649
        %2652 = vset.pattern.permute.xlu0 6
        %2653 = vperm.xlu0 %2652, %v469
        %v2654 = vpop.permute.xlu0 %2653
        %2656 = vset.pattern.permute.xlu0 6
        %2657 = vperm.xlu0 %2656, %v470
        %v2658 = vpop.permute.xlu0 %2657
        %2660 = vset.pattern.permute.xlu0 6
        %2661 = vperm.xlu0 %2660, %v471
        %v2662 = vpop.permute.xlu0 %2661
        %2664 = vset.pattern.permute.xlu0 6
        %2665 = vperm.xlu0 %2664, %v472
        %v2666 = vpop.permute.xlu0 %2665
        %2668 = vset.pattern.permute.xlu0 6
        %2669 = vperm.xlu0 %2668, %v473
        %v2670 = vpop.permute.xlu0 %2669
        %2672 = vset.pattern.permute.xlu0 6
        %2673 = vperm.xlu0 %2672, %v474
        %v2674 = vpop.permute.xlu0 %2673
        %2676 = vset.pattern.permute.xlu0 6
        %2677 = vperm.xlu0 %2676, %v475
        %v2678 = vpop.permute.xlu0 %2677
        %2680 = vset.pattern.permute.xlu0 6
        %2681 = vperm.xlu0 %2680, %v476
        %v2682 = vpop.permute.xlu0 %2681
        %2684 = vset.pattern.permute.xlu0 6
        %2685 = vperm.xlu0 %2684, %v477
        %v2686 = vpop.permute.xlu0 %2685
        %v2688 = vsel %vm2528, %v2562, 0.0
        %v2689 = vsel %vm2529, %v2566, 0.0
        %v2690 = vsel %vm2530, %v2570, 0.0
        %v2691 = vsel %vm2531, %v2574, 0.0
        %v2692 = vsel %vm2532, %v2578, 0.0
        %v2693 = vsel %vm2533, %v2582, 0.0
        %v2694 = vsel %vm2534, %v2586, 0.0
        %v2695 = vsel %vm2535, %v2590, 0.0
        %v2696 = vsel %vm2536, %v2594, 0.0
        %v2697 = vsel %vm2537, %v2598, 0.0
        %v2698 = vsel %vm2538, %v2602, 0.0
        %v2699 = vsel %vm2539, %v2606, 0.0
        %v2700 = vsel %vm2540, %v2610, 0.0
        %v2701 = vsel %vm2541, %v2614, 0.0
        %v2702 = vsel %vm2542, %v2618, 0.0
        %v2703 = vsel %vm2543, %v2622, 0.0
        %v2704 = vsel %vm2544, %v2626, 0.0
        %v2705 = vsel %vm2545, %v2630, 0.0
        %v2706 = vsel %vm2546, %v2634, 0.0
        %v2707 = vsel %vm2547, %v2638, 0.0
        %v2708 = vsel %vm2548, %v2642, 0.0
        %v2709 = vsel %vm2549, %v2646, 0.0
        %v2710 = vsel %vm2550, %v2650, 0.0
        %v2711 = vsel %vm2551, %v2654, 0.0
        %v2712 = vsel %vm2552, %v2658, 0.0
        %v2713 = vsel %vm2553, %v2662, 0.0
        %v2714 = vsel %vm2554, %v2666, 0.0
        %v2715 = vsel %vm2555, %v2670, 0.0
        %v2716 = vsel %vm2556, %v2674, 0.0
        %v2717 = vsel %vm2557, %v2678, 0.0
        %v2718 = vsel %vm2558, %v2682, 0.0
        %v2719 = vsel %vm2559, %v2686, 0.0
        %v2720 = vadd.f32 %v2400, %v2688
        %v2721 = vadd.f32 %v2401, %v2689
        %v2722 = vadd.f32 %v2402, %v2690
        %v2723 = vadd.f32 %v2403, %v2691
        %v2724 = vadd.f32 %v2404, %v2692
        %v2725 = vadd.f32 %v2405, %v2693
        %v2726 = vadd.f32 %v2406, %v2694
        %v2727 = vadd.f32 %v2407, %v2695
        %v2728 = vadd.f32 %v2408, %v2696
        %v2729 = vadd.f32 %v2409, %v2697
        %v2730 = vadd.f32 %v2410, %v2698
        %v2731 = vadd.f32 %v2411, %v2699
        %v2732 = vadd.f32 %v2412, %v2700
        %v2733 = vadd.f32 %v2413, %v2701
        %v2734 = vadd.f32 %v2414, %v2702
        %v2735 = vadd.f32 %v2415, %v2703
        %v2736 = vadd.f32 %v2416, %v2704
        %v2737 = vadd.f32 %v2417, %v2705
        %v2738 = vadd.f32 %v2418, %v2706
        %v2739 = vadd.f32 %v2419, %v2707
        %v2740 = vadd.f32 %v2420, %v2708
        %v2741 = vadd.f32 %v2421, %v2709
        %v2742 = vadd.f32 %v2422, %v2710
        %v2743 = vadd.f32 %v2423, %v2711
        %v2744 = vadd.f32 %v2424, %v2712
        %v2745 = vadd.f32 %v2425, %v2713
        %v2746 = vadd.f32 %v2426, %v2714
        %v2747 = vadd.f32 %v2427, %v2715
        %v2748 = vadd.f32 %v2428, %v2716
        %v2749 = vadd.f32 %v2429, %v2717
        %v2750 = vadd.f32 %v2430, %v2718
        %v2751 = vadd.f32 %v2431, %v2719
        %2752 = vset.pattern.permute.xlu0 7
        %2753 = vperm.xlu0 %2752, %v221
        %v2754 = vpop.permute.xlu0 %2753
        %2755 = vset.pattern.permute.xlu0 7
        %2756 = vperm.xlu0 %2755, %v222
        %v2757 = vpop.permute.xlu0 %2756
        %2758 = vset.pattern.permute.xlu0 7
        %2759 = vperm.xlu0 %2758, %v223
        %v2760 = vpop.permute.xlu0 %2759
        %2761 = vset.pattern.permute.xlu0 7
        %2762 = vperm.xlu0 %2761, %v224
        %v2763 = vpop.permute.xlu0 %2762
        %2764 = vset.pattern.permute.xlu0 7
        %2765 = vperm.xlu0 %2764, %v225
        %v2766 = vpop.permute.xlu0 %2765
        %2767 = vset.pattern.permute.xlu0 7
        %2768 = vperm.xlu0 %2767, %v226
        %v2769 = vpop.permute.xlu0 %2768
        %2770 = vset.pattern.permute.xlu0 7
        %2771 = vperm.xlu0 %2770, %v227
        %v2772 = vpop.permute.xlu0 %2771
        %2773 = vset.pattern.permute.xlu0 7
        %2774 = vperm.xlu0 %2773, %v228
        %v2775 = vpop.permute.xlu0 %2774
        %2776 = vset.pattern.permute.xlu0 7
        %2777 = vperm.xlu0 %2776, %v229
        %v2778 = vpop.permute.xlu0 %2777
        %2779 = vset.pattern.permute.xlu0 7
        %2780 = vperm.xlu0 %2779, %v230
        %v2781 = vpop.permute.xlu0 %2780
        %2782 = vset.pattern.permute.xlu0 7
        %2783 = vperm.xlu0 %2782, %v231
        %v2784 = vpop.permute.xlu0 %2783
        %2785 = vset.pattern.permute.xlu0 7
        %2786 = vperm.xlu0 %2785, %v232
        %v2787 = vpop.permute.xlu0 %2786
        %2788 = vset.pattern.permute.xlu0 7
        %2789 = vperm.xlu0 %2788, %v233
        %v2790 = vpop.permute.xlu0 %2789
        %2791 = vset.pattern.permute.xlu0 7
        %2792 = vperm.xlu0 %2791, %v234
        %v2793 = vpop.permute.xlu0 %2792
        %2794 = vset.pattern.permute.xlu0 7
        %2795 = vperm.xlu0 %2794, %v235
        %v2796 = vpop.permute.xlu0 %2795
        %2797 = vset.pattern.permute.xlu0 7
        %2798 = vperm.xlu0 %2797, %v236
        %v2799 = vpop.permute.xlu0 %2798
        %2800 = vset.pattern.permute.xlu0 7
        %2801 = vperm.xlu0 %2800, %v237
        %v2802 = vpop.permute.xlu0 %2801
        %2803 = vset.pattern.permute.xlu0 7
        %2804 = vperm.xlu0 %2803, %v238
        %v2805 = vpop.permute.xlu0 %2804
        %2806 = vset.pattern.permute.xlu0 7
        %2807 = vperm.xlu0 %2806, %v239
        %v2808 = vpop.permute.xlu0 %2807
        %2809 = vset.pattern.permute.xlu0 7
        %2810 = vperm.xlu0 %2809, %v240
        %v2811 = vpop.permute.xlu0 %2810
        %2812 = vset.pattern.permute.xlu0 7
        %2813 = vperm.xlu0 %2812, %v241
        %v2814 = vpop.permute.xlu0 %2813
        %2815 = vset.pattern.permute.xlu0 7
        %2816 = vperm.xlu0 %2815, %v242
        %v2817 = vpop.permute.xlu0 %2816
        %2818 = vset.pattern.permute.xlu0 7
        %2819 = vperm.xlu0 %2818, %v243
        %v2820 = vpop.permute.xlu0 %2819
        %2821 = vset.pattern.permute.xlu0 7
        %2822 = vperm.xlu0 %2821, %v244
        %v2823 = vpop.permute.xlu0 %2822
        %2824 = vset.pattern.permute.xlu0 7
        %2825 = vperm.xlu0 %2824, %v245
        %v2826 = vpop.permute.xlu0 %2825
        %2827 = vset.pattern.permute.xlu0 7
        %2828 = vperm.xlu0 %2827, %v246
        %v2829 = vpop.permute.xlu0 %2828
        %2830 = vset.pattern.permute.xlu0 7
        %2831 = vperm.xlu0 %2830, %v247
        %v2832 = vpop.permute.xlu0 %2831
        %2833 = vset.pattern.permute.xlu0 7
        %2834 = vperm.xlu0 %2833, %v248
        %v2835 = vpop.permute.xlu0 %2834
        %2836 = vset.pattern.permute.xlu0 7
        %2837 = vperm.xlu0 %2836, %v249
        %v2838 = vpop.permute.xlu0 %2837
        %2839 = vset.pattern.permute.xlu0 7
        %2840 = vperm.xlu0 %2839, %v250
        %v2841 = vpop.permute.xlu0 %2840
        %2842 = vset.pattern.permute.xlu0 7
        %2843 = vperm.xlu0 %2842, %v251
        %v2844 = vpop.permute.xlu0 %2843
        %2845 = vset.pattern.permute.xlu0 7
        %2846 = vperm.xlu0 %2845, %v252
        %v2847 = vpop.permute.xlu0 %2846
        %vm2848 = vcmp.eq.s32.totalorder %v2754, %v479
        %vm2849 = vcmp.eq.s32.totalorder %v2757, %v479
        %vm2850 = vcmp.eq.s32.totalorder %v2760, %v479
        %vm2851 = vcmp.eq.s32.totalorder %v2763, %v479
        %vm2852 = vcmp.eq.s32.totalorder %v2766, %v479
        %vm2853 = vcmp.eq.s32.totalorder %v2769, %v479
        %vm2854 = vcmp.eq.s32.totalorder %v2772, %v479
        %vm2855 = vcmp.eq.s32.totalorder %v2775, %v479
        %vm2856 = vcmp.eq.s32.totalorder %v2778, %v479
        %vm2857 = vcmp.eq.s32.totalorder %v2781, %v479
        %vm2858 = vcmp.eq.s32.totalorder %v2784, %v479
        %vm2859 = vcmp.eq.s32.totalorder %v2787, %v479
        %vm2860 = vcmp.eq.s32.totalorder %v2790, %v479
        %vm2861 = vcmp.eq.s32.totalorder %v2793, %v479
        %vm2862 = vcmp.eq.s32.totalorder %v2796, %v479
        %vm2863 = vcmp.eq.s32.totalorder %v2799, %v479
        %vm2864 = vcmp.eq.s32.totalorder %v2802, %v479
        %vm2865 = vcmp.eq.s32.totalorder %v2805, %v479
        %vm2866 = vcmp.eq.s32.totalorder %v2808, %v479
        %vm2867 = vcmp.eq.s32.totalorder %v2811, %v479
        %vm2868 = vcmp.eq.s32.totalorder %v2814, %v479
        %vm2869 = vcmp.eq.s32.totalorder %v2817, %v479
        %vm2870 = vcmp.eq.s32.totalorder %v2820, %v479
        %vm2871 = vcmp.eq.s32.totalorder %v2823, %v479
        %vm2872 = vcmp.eq.s32.totalorder %v2826, %v479
        %vm2873 = vcmp.eq.s32.totalorder %v2829, %v479
        %vm2874 = vcmp.eq.s32.totalorder %v2832, %v479
        %vm2875 = vcmp.eq.s32.totalorder %v2835, %v479
        %vm2876 = vcmp.eq.s32.totalorder %v2838, %v479
        %vm2877 = vcmp.eq.s32.totalorder %v2841, %v479
        %vm2878 = vcmp.eq.s32.totalorder %v2844, %v479
        %vm2879 = vcmp.eq.s32.totalorder %v2847, %v479
        %2880 = vset.pattern.permute.xlu0 7
        %2881 = vperm.xlu0 %2880, %v446
        %v2882 = vpop.permute.xlu0 %2881
        %2884 = vset.pattern.permute.xlu0 7
        %2885 = vperm.xlu0 %2884, %v447
        %v2886 = vpop.permute.xlu0 %2885
        %2888 = vset.pattern.permute.xlu0 7
        %2889 = vperm.xlu0 %2888, %v448
        %v2890 = vpop.permute.xlu0 %2889
        %2892 = vset.pattern.permute.xlu0 7
        %2893 = vperm.xlu0 %2892, %v449
        %v2894 = vpop.permute.xlu0 %2893
        %2896 = vset.pattern.permute.xlu0 7
        %2897 = vperm.xlu0 %2896, %v450
        %v2898 = vpop.permute.xlu0 %2897
        %2900 = vset.pattern.permute.xlu0 7
        %2901 = vperm.xlu0 %2900, %v451
        %v2902 = vpop.permute.xlu0 %2901
        %2904 = vset.pattern.permute.xlu0 7
        %2905 = vperm.xlu0 %2904, %v452
        %v2906 = vpop.permute.xlu0 %2905
        %2908 = vset.pattern.permute.xlu0 7
        %2909 = vperm.xlu0 %2908, %v453
        %v2910 = vpop.permute.xlu0 %2909
        %2912 = vset.pattern.permute.xlu0 7
        %2913 = vperm.xlu0 %2912, %v454
        %v2914 = vpop.permute.xlu0 %2913
        %2916 = vset.pattern.permute.xlu0 7
        %2917 = vperm.xlu0 %2916, %v455
        %v2918 = vpop.permute.xlu0 %2917
        %2920 = vset.pattern.permute.xlu0 7
        %2921 = vperm.xlu0 %2920, %v456
        %v2922 = vpop.permute.xlu0 %2921
        %2924 = vset.pattern.permute.xlu0 7
        %2925 = vperm.xlu0 %2924, %v457
        %v2926 = vpop.permute.xlu0 %2925
        %2928 = vset.pattern.permute.xlu0 7
        %2929 = vperm.xlu0 %2928, %v458
        %v2930 = vpop.permute.xlu0 %2929
        %2932 = vset.pattern.permute.xlu0 7
        %2933 = vperm.xlu0 %2932, %v459
        %v2934 = vpop.permute.xlu0 %2933
        %2936 = vset.pattern.permute.xlu0 7
        %2937 = vperm.xlu0 %2936, %v460
        %v2938 = vpop.permute.xlu0 %2937
        %2940 = vset.pattern.permute.xlu0 7
        %2941 = vperm.xlu0 %2940, %v461
        %v2942 = vpop.permute.xlu0 %2941
        %2944 = vset.pattern.permute.xlu0 7
        %2945 = vperm.xlu0 %2944, %v462
        %v2946 = vpop.permute.xlu0 %2945
        %2948 = vset.pattern.permute.xlu0 7
        %2949 = vperm.xlu0 %2948, %v463
        %v2950 = vpop.permute.xlu0 %2949
        %2952 = vset.pattern.permute.xlu0 7
        %2953 = vperm.xlu0 %2952, %v464
        %v2954 = vpop.permute.xlu0 %2953
        %2956 = vset.pattern.permute.xlu0 7
        %2957 = vperm.xlu0 %2956, %v465
        %v2958 = vpop.permute.xlu0 %2957
        %2960 = vset.pattern.permute.xlu0 7
        %2961 = vperm.xlu0 %2960, %v466
        %v2962 = vpop.permute.xlu0 %2961
        %2964 = vset.pattern.permute.xlu0 7
        %2965 = vperm.xlu0 %2964, %v467
        %v2966 = vpop.permute.xlu0 %2965
        %2968 = vset.pattern.permute.xlu0 7
        %2969 = vperm.xlu0 %2968, %v468
        %v2970 = vpop.permute.xlu0 %2969
        %2972 = vset.pattern.permute.xlu0 7
        %2973 = vperm.xlu0 %2972, %v469
        %v2974 = vpop.permute.xlu0 %2973
        %2976 = vset.pattern.permute.xlu0 7
        %2977 = vperm.xlu0 %2976, %v470
        %v2978 = vpop.permute.xlu0 %2977
        %2980 = vset.pattern.permute.xlu0 7
        %2981 = vperm.xlu0 %2980, %v471
        %v2982 = vpop.permute.xlu0 %2981
        %2984 = vset.pattern.permute.xlu0 7
        %2985 = vperm.xlu0 %2984, %v472
        %v2986 = vpop.permute.xlu0 %2985
        %2988 = vset.pattern.permute.xlu0 7
        %2989 = vperm.xlu0 %2988, %v473
        %v2990 = vpop.permute.xlu0 %2989
        %2992 = vset.pattern.permute.xlu0 7
        %2993 = vperm.xlu0 %2992, %v474
        %v2994 = vpop.permute.xlu0 %2993
        %2996 = vset.pattern.permute.xlu0 7
        %2997 = vperm.xlu0 %2996, %v475
        %v2998 = vpop.permute.xlu0 %2997
        %3000 = vset.pattern.permute.xlu0 7
        %3001 = vperm.xlu0 %3000, %v476
        %v3002 = vpop.permute.xlu0 %3001
        %3004 = vset.pattern.permute.xlu0 7
        %3005 = vperm.xlu0 %3004, %v477
        %v3006 = vpop.permute.xlu0 %3005
        %v3008 = vsel %vm2848, %v2882, 0.0
        %v3009 = vsel %vm2849, %v2886, 0.0
        %v3010 = vsel %vm2850, %v2890, 0.0
        %v3011 = vsel %vm2851, %v2894, 0.0
        %v3012 = vsel %vm2852, %v2898, 0.0
        %v3013 = vsel %vm2853, %v2902, 0.0
        %v3014 = vsel %vm2854, %v2906, 0.0
        %v3015 = vsel %vm2855, %v2910, 0.0
        %v3016 = vsel %vm2856, %v2914, 0.0
        %v3017 = vsel %vm2857, %v2918, 0.0
        %v3018 = vsel %vm2858, %v2922, 0.0
        %v3019 = vsel %vm2859, %v2926, 0.0
        %v3020 = vsel %vm2860, %v2930, 0.0
        %v3021 = vsel %vm2861, %v2934, 0.0
        %v3022 = vsel %vm2862, %v2938, 0.0
        %v3023 = vsel %vm2863, %v2942, 0.0
        %v3024 = vsel %vm2864, %v2946, 0.0
        %v3025 = vsel %vm2865, %v2950, 0.0
        %v3026 = vsel %vm2866, %v2954, 0.0
        %v3027 = vsel %vm2867, %v2958, 0.0
        %v3028 = vsel %vm2868, %v2962, 0.0
        %v3029 = vsel %vm2869, %v2966, 0.0
        %v3030 = vsel %vm2870, %v2970, 0.0
        %v3031 = vsel %vm2871, %v2974, 0.0
        %v3032 = vsel %vm2872, %v2978, 0.0
        %v3033 = vsel %vm2873, %v2982, 0.0
        %v3034 = vsel %vm2874, %v2986, 0.0
        %v3035 = vsel %vm2875, %v2990, 0.0
        %v3036 = vsel %vm2876, %v2994, 0.0
        %v3037 = vsel %vm2877, %v2998, 0.0
        %v3038 = vsel %vm2878, %v3002, 0.0
        %v3039 = vsel %vm2879, %v3006, 0.0
        %v3040 = vadd.f32 %v2720, %v3008
        %v3041 = vadd.f32 %v2721, %v3009
        %v3042 = vadd.f32 %v2722, %v3010
        %v3043 = vadd.f32 %v2723, %v3011
        %v3044 = vadd.f32 %v2724, %v3012
        %v3045 = vadd.f32 %v2725, %v3013
        %v3046 = vadd.f32 %v2726, %v3014
        %v3047 = vadd.f32 %v2727, %v3015
        %v3048 = vadd.f32 %v2728, %v3016
        %v3049 = vadd.f32 %v2729, %v3017
        %v3050 = vadd.f32 %v2730, %v3018
        %v3051 = vadd.f32 %v2731, %v3019
        %v3052 = vadd.f32 %v2732, %v3020
        %v3053 = vadd.f32 %v2733, %v3021
        %v3054 = vadd.f32 %v2734, %v3022
        %v3055 = vadd.f32 %v2735, %v3023
        %v3056 = vadd.f32 %v2736, %v3024
        %v3057 = vadd.f32 %v2737, %v3025
        %v3058 = vadd.f32 %v2738, %v3026
        %v3059 = vadd.f32 %v2739, %v3027
        %v3060 = vadd.f32 %v2740, %v3028
        %v3061 = vadd.f32 %v2741, %v3029
        %v3062 = vadd.f32 %v2742, %v3030
        %v3063 = vadd.f32 %v2743, %v3031
        %v3064 = vadd.f32 %v2744, %v3032
        %v3065 = vadd.f32 %v2745, %v3033
        %v3066 = vadd.f32 %v2746, %v3034
        %v3067 = vadd.f32 %v2747, %v3035
        %v3068 = vadd.f32 %v2748, %v3036
        %v3069 = vadd.f32 %v2749, %v3037
        %v3070 = vadd.f32 %v2750, %v3038
        %v3071 = vadd.f32 %v2751, %v3039
        %v3072 = vld [vmem:[%s2] sm:$0xff]
        %v3073 = vld [vmem:[%s2 + $0x8] sm:$0xff]
        %v3074 = vld [vmem:[%s2 + $0x10] sm:$0xff]
        %v3075 = vld [vmem:[%s2 + $0x18] sm:$0xff]
        %v3076 = vld [vmem:[%s2 + $0x20] sm:$0xff]
        %v3077 = vld [vmem:[%s2 + $0x28] sm:$0xff]
        %v3078 = vld [vmem:[%s2 + $0x30] sm:$0xff]
        %v3079 = vld [vmem:[%s2 + $0x38] sm:$0xff]
        %v3080 = vld [vmem:[%s3] sm:$0x1]
        %v3082 = vlaneseq
        %v3083 = vshrl.u32 %v3082, 7
        %v3084 = vsub.s32 0, %v3083
        %v3085 = vrot.slane %v3080, %v3084
        %vm3087 = vcmask 523264
        %v3089 = vsel %vm3087, %v3040, 0
        %v3092 = vsel %vm3087, %v3041, 0
        %v3095 = vsel %vm3087, %v3042, 0
        %v3098 = vsel %vm3087, %v3043, 0
        %v3101 = vsel %vm3087, %v3044, 0
        %v3104 = vsel %vm3087, %v3045, 0
        %v3107 = vsel %vm3087, %v3046, 0
        %v3110 = vsel %vm3087, %v3047, 0
        %v3113 = vsel %vm3087, %v3048, 0
        %v3116 = vsel %vm3087, %v3049, 0
        %v3119 = vsel %vm3087, %v3050, 0
        %v3122 = vsel %vm3087, %v3051, 0
        %v3125 = vsel %vm3087, %v3052, 0
        %v3128 = vsel %vm3087, %v3053, 0
        %v3131 = vsel %vm3087, %v3054, 0
        %v3134 = vsel %vm3087, %v3055, 0
        %v3137 = vsel %vm3087, %v3056, 0
        %v3140 = vsel %vm3087, %v3057, 0
        %v3143 = vsel %vm3087, %v3058, 0
        %v3146 = vsel %vm3087, %v3059, 0
        %v3149 = vsel %vm3087, %v3060, 0
        %v3152 = vsel %vm3087, %v3061, 0
        %v3155 = vsel %vm3087, %v3062, 0
        %v3158 = vsel %vm3087, %v3063, 0
        %v3161 = vsel %vm3087, %v3064, 0
        %v3164 = vsel %vm3087, %v3065, 0
        %v3167 = vsel %vm3087, %v3066, 0
        %v3170 = vsel %vm3087, %v3067, 0
        %v3173 = vsel %vm3087, %v3068, 0
        %v3176 = vsel %vm3087, %v3069, 0
        %v3179 = vsel %vm3087, %v3070, 0
        %v3182 = vsel %vm3087, %v3071, 0
        %3184 = vmatprep.subr.mxu0 0.0
        %3185 = vmatpush1.msra.mxu0 %v3072
        %3186 = vmatprep.subr.mxu0 0.0
        %3187 = vmatpush1.msra.mxu0 %v3073
        %3188 = vmatprep.subr.mxu0 0.0
        %3189 = vmatpush1.msra.mxu0 %v3074
        %3190 = vmatprep.subr.mxu0 0.0
        %3191 = vmatpush1.msra.mxu0 %v3075
        %3192 = vmatprep.subr.mxu0 0.0
        %3193 = vmatpush1.msra.mxu0 %v3076
        %3194 = vmatprep.subr.mxu0 0.0
        %3195 = vmatpush1.msra.mxu0 %v3077
        %3196 = vmatprep.subr.mxu0 0.0
        %3197 = vmatpush1.msra.mxu0 %v3078
        %3198 = vmatprep.subr.mxu0 0.0
        %3199 = vmatpush1.msra.mxu0 %v3079
        %3200 = vmatprep.subr.mxu0 0.0
        %3201 = vmatpush1.msra.mxu0 0.0
        %3202 = vmatprep.subr.mxu0 0.0
        %3203 = vmatpush1.msra.mxu0 0.0
        %3204 = vmatprep.subr.mxu0 0.0
        %3205 = vmatpush1.msra.mxu0 0.0
        %3206 = vmatprep.subr.mxu0 0.0
        %3207 = vmatpush1.msra.mxu0 0.0
        %3208 = vmatprep.subr.mxu0 0.0
        %3209 = vmatpush1.msra.mxu0 0.0
        %3210 = vmatprep.subr.mxu0 0.0
        %3211 = vmatpush1.msra.mxu0 0.0
        %3212 = vmatprep.subr.mxu0 0.0
        %3213 = vmatpush1.msra.mxu0 0.0
        %3214 = vmatprep.subr.mxu0 0.0
        %3215 = vmatpush1.msra.mxu0 0.0
        %3216 = vmatprep.subr.mxu0 0.0
        %3217 = vmatpush1.msra.mxu0 0.0
        %3218 = vmatprep.subr.mxu0 0.0
        %3219 = vmatpush1.msra.mxu0 0.0
        %3220 = vmatprep.subr.mxu0 0.0
        %3221 = vmatpush1.msra.mxu0 0.0
        %3222 = vmatprep.subr.mxu0 0.0
        %3223 = vmatpush1.msra.mxu0 0.0
        %3224 = vmatprep.subr.mxu0 0.0
        %3225 = vmatpush1.msra.mxu0 0.0
        %3226 = vmatprep.subr.mxu0 0.0
        %3227 = vmatpush1.msra.mxu0 0.0
        %3228 = vmatprep.subr.mxu0 0.0
        %3229 = vmatpush1.msra.mxu0 0.0
        %3230 = vmatprep.subr.mxu0 0.0
        %3231 = vmatpush1.msra.mxu0 0.0
        %3232 = vmatprep.subr.mxu0 0.0
        %3233 = vmatpush1.msra.mxu0 0.0
        %3234 = vmatprep.subr.mxu0 0.0
        %3235 = vmatpush1.msra.mxu0 0.0
        %3236 = vmatprep.subr.mxu0 0.0
        %3237 = vmatpush1.msra.mxu0 0.0
        %3238 = vmatprep.subr.mxu0 0.0
        %3239 = vmatpush1.msra.mxu0 0.0
        %3240 = vmatprep.subr.mxu0 0.0
        %3241 = vmatpush1.msra.mxu0 0.0
        %3242 = vmatprep.subr.mxu0 0.0
        %3243 = vmatpush1.msra.mxu0 0.0
        %3244 = vmatprep.subr.mxu0 0.0
        %3245 = vmatpush1.msra.mxu0 0.0
        %3246 = vmatprep.subr.mxu0 0.0
        %3247 = vmatpush1.msra.mxu0 0.0
        %3248 = vmatprep.mubr.f32.mxu0 0.0
        %3249 = vmatmul.mubr.f32.gmra.mrb[0].mxu0 %v3089
        %v3250 = vpop.f32.mrb[0].mxu0
        %v3251 = vadd.f32 %v3085, %v3250
        %v3252 = vpop.f32.mrb[0].mxu0
        %3253 = vmatprep.mubr.f32.mxu0 0.0
        %3254 = vmatmul.mubr.f32.gmra.mrb[0].mxu0 %v3092
        %v3255 = vpop.f32.mrb[0].mxu0
        %v3256 = vadd.f32 %v3085, %v3255
        %v3257 = vpop.f32.mrb[0].mxu0
        %3258 = vmatprep.mubr.f32.mxu0 0.0
        %3259 = vmatmul.mubr.f32.gmra.mrb[0].mxu0 %v3095
        %v3260 = vpop.f32.mrb[0].mxu0
        %v3261 = vadd.f32 %v3085, %v3260
        %v3262 = vpop.f32.mrb[0].mxu0
        %3263 = vmatprep.mubr.f32.mxu0 0.0
        %3264 = vmatmul.mubr.f32.gmra.mrb[0].mxu0 %v3098
        %v3265 = vpop.f32.mrb[0].mxu0
        %v3266 = vadd.f32 %v3085, %v3265
        %v3267 = vpop.f32.mrb[0].mxu0
        %3268 = vmatprep.mubr.f32.mxu0 0.0
        %3269 = vmatmul.mubr.f32.gmra.mrb[0].mxu0 %v3101
        %v3270 = vpop.f32.mrb[0].mxu0
        %v3271 = vadd.f32 %v3085, %v3270
        %v3272 = vpop.f32.mrb[0].mxu0
        %3273 = vmatprep.mubr.f32.mxu0 0.0
        %3274 = vmatmul.mubr.f32.gmra.mrb[0].mxu0 %v3104
        %v3275 = vpop.f32.mrb[0].mxu0
        %v3276 = vadd.f32 %v3085, %v3275
        %v3277 = vpop.f32.mrb[0].mxu0
        %3278 = vmatprep.mubr.f32.mxu0 0.0
        %3279 = vmatmul.mubr.f32.gmra.mrb[0].mxu0 %v3107
        %v3280 = vpop.f32.mrb[0].mxu0
        %v3281 = vadd.f32 %v3085, %v3280
        %v3282 = vpop.f32.mrb[0].mxu0
        %3283 = vmatprep.mubr.f32.mxu0 0.0
        %3284 = vmatmul.mubr.f32.gmra.mrb[0].mxu0 %v3110
        %v3285 = vpop.f32.mrb[0].mxu0
        %v3286 = vadd.f32 %v3085, %v3285
        %v3287 = vpop.f32.mrb[0].mxu0
        %3288 = vmatprep.mubr.f32.mxu0 0.0
        %3289 = vmatmul.mubr.f32.gmra.mrb[0].mxu0 %v3113
        %v3290 = vpop.f32.mrb[0].mxu0
        %v3291 = vadd.f32 %v3085, %v3290
        %v3292 = vpop.f32.mrb[0].mxu0
        %3293 = vmatprep.mubr.f32.mxu0 0.0
        %3294 = vmatmul.mubr.f32.gmra.mrb[0].mxu0 %v3116
        %v3295 = vpop.f32.mrb[0].mxu0
        %v3296 = vadd.f32 %v3085, %v3295
        %v3297 = vpop.f32.mrb[0].mxu0
        %3298 = vmatprep.mubr.f32.mxu0 0.0
        %3299 = vmatmul.mubr.f32.gmra.mrb[0].mxu0 %v3119
        %v3300 = vpop.f32.mrb[0].mxu0
        %v3301 = vadd.f32 %v3085, %v3300
        %v3302 = vpop.f32.mrb[0].mxu0
        %3303 = vmatprep.mubr.f32.mxu0 0.0
        %3304 = vmatmul.mubr.f32.gmra.mrb[0].mxu0 %v3122
        %v3305 = vpop.f32.mrb[0].mxu0
        %v3306 = vadd.f32 %v3085, %v3305
        %v3307 = vpop.f32.mrb[0].mxu0
        %3308 = vmatprep.mubr.f32.mxu0 0.0
        %3309 = vmatmul.mubr.f32.gmra.mrb[0].mxu0 %v3125
        %v3310 = vpop.f32.mrb[0].mxu0
        %v3311 = vadd.f32 %v3085, %v3310
        %v3312 = vpop.f32.mrb[0].mxu0
        %3313 = vmatprep.mubr.f32.mxu0 0.0
        %3314 = vmatmul.mubr.f32.gmra.mrb[0].mxu0 %v3128
        %v3315 = vpop.f32.mrb[0].mxu0
        %v3316 = vadd.f32 %v3085, %v3315
        %v3317 = vpop.f32.mrb[0].mxu0
        %3318 = vmatprep.mubr.f32.mxu0 0.0
        %3319 = vmatmul.mubr.f32.gmra.mrb[0].mxu0 %v3131
        %v3320 = vpop.f32.mrb[0].mxu0
        %v3321 = vadd.f32 %v3085, %v3320
        %v3322 = vpop.f32.mrb[0].mxu0
        %3323 = vmatprep.mubr.f32.mxu0 0.0
        %3324 = vmatmul.mubr.f32.gmra.mrb[0].mxu0 %v3134
        %v3325 = vpop.f32.mrb[0].mxu0
        %v3326 = vadd.f32 %v3085, %v3325
        %v3327 = vpop.f32.mrb[0].mxu0
        %3328 = vmatprep.mubr.f32.mxu0 0.0
        %3329 = vmatmul.mubr.f32.gmra.mrb[0].mxu0 %v3137
        %v3330 = vpop.f32.mrb[0].mxu0
        %v3331 = vadd.f32 %v3085, %v3330
        %v3332 = vpop.f32.mrb[0].mxu0
        %3333 = vmatprep.mubr.f32.mxu0 0.0
        %3334 = vmatmul.mubr.f32.gmra.mrb[0].mxu0 %v3140
        %v3335 = vpop.f32.mrb[0].mxu0
        %v3336 = vadd.f32 %v3085, %v3335
        %v3337 = vpop.f32.mrb[0].mxu0
        %3338 = vmatprep.mubr.f32.mxu0 0.0
        %3339 = vmatmul.mubr.f32.gmra.mrb[0].mxu0 %v3143
        %v3340 = vpop.f32.mrb[0].mxu0
        %v3341 = vadd.f32 %v3085, %v3340
        %v3342 = vpop.f32.mrb[0].mxu0
        %3343 = vmatprep.mubr.f32.mxu0 0.0
        %3344 = vmatmul.mubr.f32.gmra.mrb[0].mxu0 %v3146
        %v3345 = vpop.f32.mrb[0].mxu0
        %v3346 = vadd.f32 %v3085, %v3345
        %v3347 = vpop.f32.mrb[0].mxu0
        %3348 = vmatprep.mubr.f32.mxu0 0.0
        %3349 = vmatmul.mubr.f32.gmra.mrb[0].mxu0 %v3149
        %v3350 = vpop.f32.mrb[0].mxu0
        %v3351 = vadd.f32 %v3085, %v3350
        %v3352 = vpop.f32.mrb[0].mxu0
        %3353 = vmatprep.mubr.f32.mxu0 0.0
        %3354 = vmatmul.mubr.f32.gmra.mrb[0].mxu0 %v3152
        %v3355 = vpop.f32.mrb[0].mxu0
        %v3356 = vadd.f32 %v3085, %v3355
        %v3357 = vpop.f32.mrb[0].mxu0
        %3358 = vmatprep.mubr.f32.mxu0 0.0
        %3359 = vmatmul.mubr.f32.gmra.mrb[0].mxu0 %v3155
        %v3360 = vpop.f32.mrb[0].mxu0
        %v3361 = vadd.f32 %v3085, %v3360
        %v3362 = vpop.f32.mrb[0].mxu0
        %3363 = vmatprep.mubr.f32.mxu0 0.0
        %3364 = vmatmul.mubr.f32.gmra.mrb[0].mxu0 %v3158
        %v3365 = vpop.f32.mrb[0].mxu0
        %v3366 = vadd.f32 %v3085, %v3365
        %v3367 = vpop.f32.mrb[0].mxu0
        %3368 = vmatprep.mubr.f32.mxu0 0.0
        %3369 = vmatmul.mubr.f32.gmra.mrb[0].mxu0 %v3161
        %v3370 = vpop.f32.mrb[0].mxu0
        %v3371 = vadd.f32 %v3085, %v3370
        %v3372 = vpop.f32.mrb[0].mxu0
        %3373 = vmatprep.mubr.f32.mxu0 0.0
        %3374 = vmatmul.mubr.f32.gmra.mrb[0].mxu0 %v3164
        %v3375 = vpop.f32.mrb[0].mxu0
        %v3376 = vadd.f32 %v3085, %v3375
        %v3377 = vpop.f32.mrb[0].mxu0
        %3378 = vmatprep.mubr.f32.mxu0 0.0
        %3379 = vmatmul.mubr.f32.gmra.mrb[0].mxu0 %v3167
        %v3380 = vpop.f32.mrb[0].mxu0
        %v3381 = vadd.f32 %v3085, %v3380
        %v3382 = vpop.f32.mrb[0].mxu0
        %3383 = vmatprep.mubr.f32.mxu0 0.0
        %3384 = vmatmul.mubr.f32.gmra.mrb[0].mxu0 %v3170
        %v3385 = vpop.f32.mrb[0].mxu0
        %v3386 = vadd.f32 %v3085, %v3385
        %v3387 = vpop.f32.mrb[0].mxu0
        %3388 = vmatprep.mubr.f32.mxu0 0.0
        %3389 = vmatmul.mubr.f32.gmra.mrb[0].mxu0 %v3173
        %v3390 = vpop.f32.mrb[0].mxu0
        %v3391 = vadd.f32 %v3085, %v3390
        %v3392 = vpop.f32.mrb[0].mxu0
        %3393 = vmatprep.mubr.f32.mxu0 0.0
        %3394 = vmatmul.mubr.f32.gmra.mrb[0].mxu0 %v3176
        %v3395 = vpop.f32.mrb[0].mxu0
        %v3396 = vadd.f32 %v3085, %v3395
        %v3397 = vpop.f32.mrb[0].mxu0
        %3398 = vmatprep.mubr.f32.mxu0 0.0
        %3399 = vmatmul.mubr.f32.gmra.mrb[0].mxu0 %v3179
        %v3400 = vpop.f32.mrb[0].mxu0
        %v3401 = vadd.f32 %v3085, %v3400
        %v3402 = vpop.f32.mrb[0].mxu0
        %3403 = vmatprep.mubr.f32.mxu0 0.0
        %3404 = vmatmul.mubr.f32.gmra.mrb[0].mxu0 %v3182
        %v3405 = vpop.f32.mrb[0].mxu0
        %v3406 = vadd.f32 %v3085, %v3405
        %v3407 = vpop.f32.mrb[0].mxu0
        %3408 = vdwg.mxu0
        %v3409 = vmul.f32 %v3251, %v3251
        %v3410 = vmul.f32 %v3256, %v3256
        %v3411 = vmul.f32 %v3261, %v3261
        %v3412 = vmul.f32 %v3266, %v3266
        %v3413 = vmul.f32 %v3271, %v3271
        %v3414 = vmul.f32 %v3276, %v3276
        %v3415 = vmul.f32 %v3281, %v3281
        %v3416 = vmul.f32 %v3286, %v3286
        %v3417 = vmul.f32 %v3291, %v3291
        %v3418 = vmul.f32 %v3296, %v3296
        %v3419 = vmul.f32 %v3301, %v3301
        %v3420 = vmul.f32 %v3306, %v3306
        %v3421 = vmul.f32 %v3311, %v3311
        %v3422 = vmul.f32 %v3316, %v3316
        %v3423 = vmul.f32 %v3321, %v3321
        %v3424 = vmul.f32 %v3326, %v3326
        %v3425 = vmul.f32 %v3331, %v3331
        %v3426 = vmul.f32 %v3336, %v3336
        %v3427 = vmul.f32 %v3341, %v3341
        %v3428 = vmul.f32 %v3346, %v3346
        %v3429 = vmul.f32 %v3351, %v3351
        %v3430 = vmul.f32 %v3356, %v3356
        %v3431 = vmul.f32 %v3361, %v3361
        %v3432 = vmul.f32 %v3366, %v3366
        %v3433 = vmul.f32 %v3371, %v3371
        %v3434 = vmul.f32 %v3376, %v3376
        %v3435 = vmul.f32 %v3381, %v3381
        %v3436 = vmul.f32 %v3386, %v3386
        %v3437 = vmul.f32 %v3391, %v3391
        %v3438 = vmul.f32 %v3396, %v3396
        %v3439 = vmul.f32 %v3401, %v3401
        %v3440 = vmul.f32 %v3406, %v3406
        %3441 = vadd.xlane.f32.xlu0 %v3409
        %v3442 = vpop.xlane.xlu0 %3441
        %3443 = vadd.xlane.f32.xlu0 %v3410
        %v3444 = vpop.xlane.xlu0 %3443
        %3445 = vadd.xlane.f32.xlu0 %v3411
        %v3446 = vpop.xlane.xlu0 %3445
        %3447 = vadd.xlane.f32.xlu0 %v3412
        %v3448 = vpop.xlane.xlu0 %3447
        %3449 = vadd.xlane.f32.xlu0 %v3413
        %v3450 = vpop.xlane.xlu0 %3449
        %3451 = vadd.xlane.f32.xlu0 %v3414
        %v3452 = vpop.xlane.xlu0 %3451
        %3453 = vadd.xlane.f32.xlu0 %v3415
        %v3454 = vpop.xlane.xlu0 %3453
        %3455 = vadd.xlane.f32.xlu0 %v3416
        %v3456 = vpop.xlane.xlu0 %3455
        %3457 = vadd.xlane.f32.xlu0 %v3417
        %v3458 = vpop.xlane.xlu0 %3457
        %3459 = vadd.xlane.f32.xlu0 %v3418
        %v3460 = vpop.xlane.xlu0 %3459
        %3461 = vadd.xlane.f32.xlu0 %v3419
        %v3462 = vpop.xlane.xlu0 %3461
        %3463 = vadd.xlane.f32.xlu0 %v3420
        %v3464 = vpop.xlane.xlu0 %3463
        %3465 = vadd.xlane.f32.xlu0 %v3421
        %v3466 = vpop.xlane.xlu0 %3465
        %3467 = vadd.xlane.f32.xlu0 %v3422
        %v3468 = vpop.xlane.xlu0 %3467
        %3469 = vadd.xlane.f32.xlu0 %v3423
        %v3470 = vpop.xlane.xlu0 %3469
        %3471 = vadd.xlane.f32.xlu0 %v3424
        %v3472 = vpop.xlane.xlu0 %3471
        %3473 = vadd.xlane.f32.xlu0 %v3425
        %v3474 = vpop.xlane.xlu0 %3473
        %3475 = vadd.xlane.f32.xlu0 %v3426
        %v3476 = vpop.xlane.xlu0 %3475
        %3477 = vadd.xlane.f32.xlu0 %v3427
        %v3478 = vpop.xlane.xlu0 %3477
        %3479 = vadd.xlane.f32.xlu0 %v3428
        %v3480 = vpop.xlane.xlu0 %3479
        %3481 = vadd.xlane.f32.xlu0 %v3429
        %v3482 = vpop.xlane.xlu0 %3481
        %3483 = vadd.xlane.f32.xlu0 %v3430
        %v3484 = vpop.xlane.xlu0 %3483
        %3485 = vadd.xlane.f32.xlu0 %v3431
        %v3486 = vpop.xlane.xlu0 %3485
        %3487 = vadd.xlane.f32.xlu0 %v3432
        %v3488 = vpop.xlane.xlu0 %3487
        %3489 = vadd.xlane.f32.xlu0 %v3433
        %v3490 = vpop.xlane.xlu0 %3489
        %3491 = vadd.xlane.f32.xlu0 %v3434
        %v3492 = vpop.xlane.xlu0 %3491
        %3493 = vadd.xlane.f32.xlu0 %v3435
        %v3494 = vpop.xlane.xlu0 %3493
        %3495 = vadd.xlane.f32.xlu0 %v3436
        %v3496 = vpop.xlane.xlu0 %3495
        %3497 = vadd.xlane.f32.xlu0 %v3437
        %v3498 = vpop.xlane.xlu0 %3497
        %3499 = vadd.xlane.f32.xlu0 %v3438
        %v3500 = vpop.xlane.xlu0 %3499
        %3501 = vadd.xlane.f32.xlu0 %v3439
        %v3502 = vpop.xlane.xlu0 %3501
        %3503 = vadd.xlane.f32.xlu0 %v3440
        %v3504 = vpop.xlane.xlu0 %3503
        %v3505 = vadd.f32 %v3442, 1e-12
        %v3506 = vadd.f32 %v3444, 1e-12
        %v3507 = vadd.f32 %v3446, 1e-12
        %v3508 = vadd.f32 %v3448, 1e-12
        %v3509 = vadd.f32 %v3450, 1e-12
        %v3510 = vadd.f32 %v3452, 1e-12
        %v3511 = vadd.f32 %v3454, 1e-12
        %v3512 = vadd.f32 %v3456, 1e-12
        %v3513 = vadd.f32 %v3458, 1e-12
        %v3514 = vadd.f32 %v3460, 1e-12
        %v3515 = vadd.f32 %v3462, 1e-12
        %v3516 = vadd.f32 %v3464, 1e-12
        %v3517 = vadd.f32 %v3466, 1e-12
        %v3518 = vadd.f32 %v3468, 1e-12
        %v3519 = vadd.f32 %v3470, 1e-12
        %v3520 = vadd.f32 %v3472, 1e-12
        %v3521 = vadd.f32 %v3474, 1e-12
        %v3522 = vadd.f32 %v3476, 1e-12
        %v3523 = vadd.f32 %v3478, 1e-12
        %v3524 = vadd.f32 %v3480, 1e-12
        %v3525 = vadd.f32 %v3482, 1e-12
        %v3526 = vadd.f32 %v3484, 1e-12
        %v3527 = vadd.f32 %v3486, 1e-12
        %v3528 = vadd.f32 %v3488, 1e-12
        %v3529 = vadd.f32 %v3490, 1e-12
        %v3530 = vadd.f32 %v3492, 1e-12
        %v3531 = vadd.f32 %v3494, 1e-12
        %v3532 = vadd.f32 %v3496, 1e-12
        %v3533 = vadd.f32 %v3498, 1e-12
        %v3534 = vadd.f32 %v3500, 1e-12
        %v3535 = vadd.f32 %v3502, 1e-12
        %v3536 = vadd.f32 %v3504, 1e-12
        %v3537 = vrsqrt.pop %v3505
        %v3538 = vrsqrt.pop %v3506
        %v3539 = vrsqrt.pop %v3507
        %v3540 = vrsqrt.pop %v3508
        %v3541 = vrsqrt.pop %v3509
        %v3542 = vrsqrt.pop %v3510
        %v3543 = vrsqrt.pop %v3511
        %v3544 = vrsqrt.pop %v3512
        %v3545 = vrsqrt.pop %v3513
        %v3546 = vrsqrt.pop %v3514
        %v3547 = vrsqrt.pop %v3515
        %v3548 = vrsqrt.pop %v3516
        %v3549 = vrsqrt.pop %v3517
        %v3550 = vrsqrt.pop %v3518
        %v3551 = vrsqrt.pop %v3519
        %v3552 = vrsqrt.pop %v3520
        %v3553 = vrsqrt.pop %v3521
        %v3554 = vrsqrt.pop %v3522
        %v3555 = vrsqrt.pop %v3523
        %v3556 = vrsqrt.pop %v3524
        %v3557 = vrsqrt.pop %v3525
        %v3558 = vrsqrt.pop %v3526
        %v3559 = vrsqrt.pop %v3527
        %v3560 = vrsqrt.pop %v3528
        %v3561 = vrsqrt.pop %v3529
        %v3562 = vrsqrt.pop %v3530
        %v3563 = vrsqrt.pop %v3531
        %v3564 = vrsqrt.pop %v3532
        %v3565 = vrsqrt.pop %v3533
        %v3566 = vrsqrt.pop %v3534
        %v3567 = vrsqrt.pop %v3535
        %v3568 = vrsqrt.pop %v3536
        %v3569 = vmul.f32 %v3251, %v3537
        %v3570 = vmul.f32 %v3256, %v3538
        %v3571 = vmul.f32 %v3261, %v3539
        %v3572 = vmul.f32 %v3266, %v3540
        %v3573 = vmul.f32 %v3271, %v3541
        %v3574 = vmul.f32 %v3276, %v3542
        %v3575 = vmul.f32 %v3281, %v3543
        %v3576 = vmul.f32 %v3286, %v3544
        %v3577 = vmul.f32 %v3291, %v3545
        %v3578 = vmul.f32 %v3296, %v3546
        %v3579 = vmul.f32 %v3301, %v3547
        %v3580 = vmul.f32 %v3306, %v3548
        %v3581 = vmul.f32 %v3311, %v3549
        %v3582 = vmul.f32 %v3316, %v3550
        %v3583 = vmul.f32 %v3321, %v3551
        %v3584 = vmul.f32 %v3326, %v3552
        %v3585 = vmul.f32 %v3331, %v3553
        %v3586 = vmul.f32 %v3336, %v3554
        %v3587 = vmul.f32 %v3341, %v3555
        %v3588 = vmul.f32 %v3346, %v3556
        %v3589 = vmul.f32 %v3351, %v3557
        %v3590 = vmul.f32 %v3356, %v3558
        %v3591 = vmul.f32 %v3361, %v3559
        %v3592 = vmul.f32 %v3366, %v3560
        %v3593 = vmul.f32 %v3371, %v3561
        %v3594 = vmul.f32 %v3376, %v3562
        %v3595 = vmul.f32 %v3381, %v3563
        %v3596 = vmul.f32 %v3386, %v3564
        %v3597 = vmul.f32 %v3391, %v3565
        %v3598 = vmul.f32 %v3396, %v3566
        %v3599 = vmul.f32 %v3401, %v3567
        %v3600 = vmul.f32 %v3406, %v3568
        %3601 = vst [vmem:[%s207] sm:$0xff] %v3569
        %3602 = vst [vmem:[%s207 + $0x8] sm:$0xff] %v3570
        %3603 = vst [vmem:[%s207 + $0x10] sm:$0xff] %v3571
        %3604 = vst [vmem:[%s207 + $0x18] sm:$0xff] %v3572
        %3605 = vst [vmem:[%s207 + $0x20] sm:$0xff] %v3573
        %3606 = vst [vmem:[%s207 + $0x28] sm:$0xff] %v3574
        %3607 = vst [vmem:[%s207 + $0x30] sm:$0xff] %v3575
        %3608 = vst [vmem:[%s207 + $0x38] sm:$0xff] %v3576
        %3609 = vst [vmem:[%s207 + $0x40] sm:$0xff] %v3577
        %3610 = vst [vmem:[%s207 + $0x48] sm:$0xff] %v3578
        %3611 = vst [vmem:[%s207 + $0x50] sm:$0xff] %v3579
        %3612 = vst [vmem:[%s207 + $0x58] sm:$0xff] %v3580
        %3613 = vst [vmem:[%s207 + $0x60] sm:$0xff] %v3581
        %3614 = vst [vmem:[%s207 + $0x68] sm:$0xff] %v3582
        %3615 = vst [vmem:[%s207 + $0x70] sm:$0xff] %v3583
        %3616 = vst [vmem:[%s207 + $0x78] sm:$0xff] %v3584
        %3617 = vst [vmem:[%s207 + $0x80] sm:$0xff] %v3585
        %3618 = vst [vmem:[%s207 + $0x88] sm:$0xff] %v3586
        %3619 = vst [vmem:[%s207 + $0x90] sm:$0xff] %v3587
        %3620 = vst [vmem:[%s207 + $0x98] sm:$0xff] %v3588
        %3621 = vst [vmem:[%s207 + $0xa0] sm:$0xff] %v3589
        %3622 = vst [vmem:[%s207 + $0xa8] sm:$0xff] %v3590
        %3623 = vst [vmem:[%s207 + $0xb0] sm:$0xff] %v3591
        %3624 = vst [vmem:[%s207 + $0xb8] sm:$0xff] %v3592
        %3625 = vst [vmem:[%s207 + $0xc0] sm:$0xff] %v3593
        %3626 = vst [vmem:[%s207 + $0xc8] sm:$0xff] %v3594
        %3627 = vst [vmem:[%s207 + $0xd0] sm:$0xff] %v3595
        %3628 = vst [vmem:[%s207 + $0xd8] sm:$0xff] %v3596
        %3629 = vst [vmem:[%s207 + $0xe0] sm:$0xff] %v3597
        %3630 = vst [vmem:[%s207 + $0xe8] sm:$0xff] %v3598
        %3631 = vst [vmem:[%s207 + $0xf0] sm:$0xff] %v3599
        %3632 = vst [vmem:[%s207 + $0xf8] sm:$0xff] %v3600
        %s3633 = sand.u32 %s120, 1
        %s3634 = scalar_lea.sflag [#allocation3], %s3633
        %s3635 = sand.u32 %s120, 1
        %s3636 = smul.addr %s3635, 256
        %s3637 = scalar_lea.vmem [#allocation2], %s3636
        // Predicated region
        $region37: #{tpu_custom_call.1} parent=35 // pred_check
          %p3638 = pneg %p130
        $region38: #{tpu_custom_call.1} parent=35 // pred_check_branch
          %3640 = sbr.rel (%p3638) target = $region40
        $region39: #{tpu_custom_call.1} parent=35 // pred_region
          %s3641 = smul.u32 32, %s18
          %s3643 = ssub.s32 4096, 4096
          %3644 = vsyncadd %s3634, %s3643
          %s3645 = smul.addr %s3641, 128
          %s3646 = scalar_lea.hbm %s4, %s3645
          %s3647 = sshll.u32 %s3637, 4
          %s3648 = int_to_ptr.vmem [resolvable:$true] %s3647
          %3653 = dma.vmem_to_hbm [thread:$0]  %s3648, 4096, %s3646, %s3634, 128, 128, 8
        $region40: #{tpu_custom_call.1} parent=35 // pred_fallthru
          _
      $region36: #{tpu_custom_call.1} parent=5 // pred_fallthru
        _
      %p3654 = scmp.le.s32.totalorder 2, %s13
      // Predicated region
      $region41: #{tpu_custom_call.1} parent=5 // pred_check
        %p3655 = pneg %p3654
      $region42: #{tpu_custom_call.1} parent=5 // pred_check_branch
        %3657 = sbr.rel (%p3655) target = $region44
      $region43: #{tpu_custom_call.1} parent=5 // pred_region
        %s3658 = ssub.s32 %s13, 2
        // Predicated region
        $region45: #{tpu_custom_call.1} parent=43 // pred_check
          %p3659 = pneg %p136
        $region46: #{tpu_custom_call.1} parent=43 // pred_check_branch
          %3661 = sbr.rel (%p3659) target = $region48
        $region47: #{tpu_custom_call.1} parent=43 // pred_region
          %s3662 = sand.u32 %s121, 1
          %s3663 = scalar_lea.sflag [#allocation3], %s3662
          %s3664 = sand.u32 %s121, 1
          %s3665 = smul.addr %s3664, 256
          %s3666 = scalar_lea.vmem [#allocation2], %s3665
          %3667 = dma.done %s3663, 4096
        $region48: #{tpu_custom_call.1} parent=43 // pred_fallthru
          _
      $region44: #{tpu_custom_call.1} parent=5 // pred_fallthru
        _
    $region6: #{tpu_custom_call.1} parent=1 // loop_footer
      %s17 = sadd.s32 1, %s13
    $region7: #{tpu_custom_call.1} parent=1 // loop_footer_branch
      %12 = sbr.rel target = $region3
    $region8: #{tpu_custom_call.1} parent=1 // loop_exit
      _
    %3668 = vsyncpa [#allocation3], 1
    %s3669 = scalar_lea.sflag [#allocation3], 1
    %3670 = vsyncpa %s3669, 1

</llo_original>
